<compile_context>
chip_gen: v5e
topology: v5e:2x2
jax: 0.10.0
libtpu: 0.0.40
codegen_flags: <defaults>
</compile_context>

<pallas_src>
import functools
import math

import jax
import jax.numpy as jnp
from jax.experimental import pallas as pl
from jax.experimental.pallas import tpu as pltpu

# --- model hyper-parameters (match the nn.Module's __init__) ----------------
DIM_MODEL = 32
NUM_HEADS = 4
NUM_LAYERS = 2
NUM_EMBEDDINGS = 64
MEMORY_LENGTH = 16
DIM_FF = 2048            # PyTorch TransformerEncoderLayer default
EPS = 1e-5               # PyTorch layer_norm_eps default
HEAD_DIM = DIM_MODEL // NUM_HEADS
VOCAB_PAD = 128          # lane-dense logits; sliced back to NUM_EMBEDDINGS on host


def _layer_norm(x, gamma, beta):
    mu = jnp.mean(x, axis=-1, keepdims=True)
    var = jnp.mean((x - mu) ** 2, axis=-1, keepdims=True)
    return (x - mu) * jax.lax.rsqrt(var + EPS) * gamma + beta


# ----------------------------------------------------------------------------
# Fused Pallas kernel: embedding + causal mask + NUM_LAYERS layers + final fc.
# Everything (activations + all weights) lives in VMEM for the whole call.
# ----------------------------------------------------------------------------
def gpt_kernel(ids_ref, epos_ref, wqo_ref, small_ref, w1_ref, b1_ref, w2_ref,
               fcw_ref, fcb_ref, o_ref, *, batch, seq, num_heads, num_layers):
    B, S, H = batch, seq, num_heads
    D = DIM_MODEL
    hd = D // H
    V = NUM_EMBEDDINGS
    BS = B * S
    bf16 = jnp.bfloat16

    # ---- embedding lookup as an exact one-hot (0/1) f32 matmul -------------
    ids = ids_ref[...]                                            # (B, S) i32
    iota_v = jax.lax.broadcasted_iota(jnp.int32, (B, S, V), 2)
    onehot = (iota_v == ids[:, :, None]).astype(jnp.float32)      # (B, S, V)
    emb = epos_ref[0:V, :]                                        # (V, D)
    pos = epos_ref[V:V + S, :]                                    # (S, D)
    tok = jnp.dot(onehot.reshape(BS, V), emb,
                  preferred_element_type=jnp.float32)             # (BS, D)
    x = (tok.reshape(B, S, D) + pos[None, :, :]).reshape(BS, D)

    # ---- causal additive mask (= generate_square_subsequent_mask) ----------
    row = jax.lax.broadcasted_iota(jnp.int32, (S, S), 0)
    col = jax.lax.broadcasted_iota(jnp.int32, (S, S), 1)
    mask = jnp.where(col > row, jnp.float32(-1e30), jnp.float32(0.0))

    for l in range(num_layers):                                   # static unroll
        wqo = wqo_ref[l]                                          # (D, 4D) bf16
        sm = small_ref[l]                                         # (8, 3D) f32
        bqkv = sm[0:1, :]                                         # (1, 3D)
        bo = sm[1:2, 0:D]
        g1 = sm[2:3, 0:D]
        be1 = sm[3:4, 0:D]
        b2 = sm[4:5, 0:D]
        g2 = sm[5:6, 0:D]
        be2 = sm[6:7, 0:D]

        # ---- fused QKV projection: one bf16 MXU matmul (q-scale folded) ----
        qkv = jnp.dot(x.astype(bf16), wqo[:, 0:3 * D],
                      preferred_element_type=jnp.float32) + bqkv   # (BS, 3D)

        def split_heads(off):
            # static lane slices per head -> head-major leading batch (H*B,S,hd)
            return jnp.concatenate(
                [qkv[:, off + h * hd: off + (h + 1) * hd].reshape(B, S, hd)
                 for h in range(H)], axis=0)

        q = split_heads(0)
        k = split_heads(D)
        v = split_heads(2 * D)

        # ---- attention: batched bf16 einsums, f32 softmax -------------------
        s = jnp.einsum('bqd,bkd->bqk', q.astype(bf16), k.astype(bf16),
                       preferred_element_type=jnp.float32)         # (H*B, S, S)
        s = s + mask[None, :, :]
        m = jnp.max(s, axis=-1, keepdims=True)
        p = jnp.exp(s - m)
        p = p / jnp.sum(p, axis=-1, keepdims=True)                 # exact softmax
        ctx = jnp.einsum('bqk,bkd->bqd', p.astype(bf16), v.astype(bf16),
                         preferred_element_type=jnp.float32)       # (H*B, S, hd)

        # re-assemble heads into lanes once, then a single out-projection matmul
        ctx_flat = jnp.concatenate(
            [ctx[h * B:(h + 1) * B].reshape(BS, hd) for h in range(H)], axis=1)
        attn = jnp.dot(ctx_flat.astype(bf16), wqo[:, 3 * D:4 * D],
                       preferred_element_type=jnp.float32) + bo
        # TODO(synk): dropout (p=0.1) is identity here (eval-mode semantics).
        x = _layer_norm(x + attn, g1, be1)

        # ---- feed-forward (bf16 MXU operands, f32 accumulation) ------------
        h1 = jnp.dot(x.astype(bf16), w1_ref[l],
                     preferred_element_type=jnp.float32) + b1_ref[l]
        h1 = jnp.maximum(h1, 0.0)                                  # relu
        ff = jnp.dot(h1.astype(bf16), w2_ref[l],
                     preferred_element_type=jnp.float32) + b2
        x = _layer_norm(x + ff, g2, be2)

    # ---- final projection: lane-dense (BS, 128) padded logits --------------
    o_ref[...] = jnp.dot(x.astype(bf16), fcw_ref[...],
                         preferred_element_type=jnp.float32) + fcb_ref[...]


# ----------------------------------------------------------------------------
# Parameter init in PyTorch layout (shapes match the nn.Module's state dict)
# ----------------------------------------------------------------------------
def init_params(key):
    keys = iter(jax.random.split(key, 4 + 4 * NUM_LAYERS))
    scale = 0.02

    def nrm(shape):
        return scale * jax.random.normal(next(keys), shape, dtype=jnp.float32)

    params = {
        'embedding': nrm((NUM_EMBEDDINGS, DIM_MODEL)),
        'pos_embedding': nrm((MEMORY_LENGTH, DIM_MODEL)),
        'fc_w': nrm((NUM_EMBEDDINGS, DIM_MODEL)),            # nn.Linear (V, D)
        'fc_b': jnp.zeros((NUM_EMBEDDINGS,), jnp.float32),
        'layers': [],
    }
    for _ in range(NUM_LAYERS):
        lp = dict(
            in_proj_weight=nrm((3 * DIM_MODEL, DIM_MODEL)),
            in_proj_bias=jnp.zeros((3 * DIM_MODEL,), jnp.float32),
            out_proj_weight=nrm((DIM_MODEL, DIM_MODEL)),
            out_proj_bias=jnp.zeros((DIM_MODEL,), jnp.float32),
            norm1_weight=jnp.ones((DIM_MODEL,), jnp.float32),
            norm1_bias=jnp.zeros((DIM_MODEL,), jnp.float32),
            linear1_weight=nrm((DIM_FF, DIM_MODEL)),
            linear1_bias=jnp.zeros((DIM_FF,), jnp.float32),
            linear2_weight=nrm((DIM_MODEL, DIM_FF)),
            linear2_bias=jnp.zeros((DIM_MODEL,), jnp.float32),
            norm2_weight=jnp.ones((DIM_MODEL,), jnp.float32),
            norm2_bias=jnp.zeros((DIM_MODEL,), jnp.float32),
        )
        params['layers'].append(lp)
    return params


# ----------------------------------------------------------------------------
# One-time host-side weight prep: transpose, fuse QKV|out-proj, fold q-scale,
# pack small per-layer params into one slab, bf16 weights, pad logits to 128.
# ----------------------------------------------------------------------------
def prepare_kernel_params(p):
    D, FF, V = DIM_MODEL, DIM_FF, NUM_EMBEDDINGS
    qscale = 1.0 / math.sqrt(HEAD_DIM)

    def pad_row(vec):
        return jnp.pad(vec.astype(jnp.float32), (0, 3 * D - vec.shape[0]))

    wqo, small, w1, b1, w2 = [], [], [], [], []
    for lp in p['layers']:
        in_w, in_b = lp['in_proj_weight'], lp['in_proj_bias']
        wq_t = in_w[0:D].T * qscale                   # fold 1/sqrt(hd) into q
        wk_t = in_w[D:2 * D].T
        wv_t = in_w[2 * D:3 * D].T
        wo_t = lp['out_proj_weight'].T
        wqo.append(jnp.concatenate([wq_t, wk_t, wv_t, wo_t], axis=1)
                   .astype(jnp.bfloat16))             # (D, 4D) = (32, 128)
        bqkv = jnp.concatenate(
            [in_b[0:D] * qscale, in_b[D:2 * D], in_b[2 * D:3 * D]])
        small.append(jnp.stack([
            bqkv,                                     # row 0: qkv bias (3D wide)
            pad_row(lp['out_proj_bias']),             # row 1: bo
            pad_row(lp['norm1_weight']),              # row 2: g1
            pad_row(lp['norm1_bias']),                # row 3: be1
            pad_row(lp['linear2_bias']),              # row 4: b2
            pad_row(lp['norm2_weight']),              # row 5: g2
            pad_row(lp['norm2_bias']),                # row 6: be2
            jnp.zeros((3 * D,), jnp.float32),         # row 7: pad
        ]))                                           # (8, 3D)
        w1.append(lp['linear1_weight'].T.astype(jnp.bfloat16))   # (D, FF)
        b1.append(lp['linear1_bias'].reshape(1, FF).astype(jnp.float32))
        w2.append(lp['linear2_weight'].T.astype(jnp.bfloat16))   # (FF, D)

    return {
        'wqo': jnp.stack(wqo), 'small': jnp.stack(small),
        'w1': jnp.stack(w1), 'b1': jnp.stack(b1), 'w2': jnp.stack(w2),
        'epos': jnp.concatenate([p['embedding'], p['pos_embedding']],
                                axis=0).astype(jnp.float32),      # (V+S_MAX, D)
        'fcw': jnp.zeros((D, VOCAB_PAD), jnp.bfloat16)
               .at[:, :V].set(p['fc_w'].T.astype(jnp.bfloat16)),
        'fcb': jnp.zeros((1, VOCAB_PAD), jnp.float32).at[0, :V].set(p['fc_b']),
    }


# ----------------------------------------------------------------------------
# GPT.forward equivalent: one fused pallas_call (fixed S = MEMORY_LENGTH)
# ----------------------------------------------------------------------------
def gpt_forward(kparams, token_ids, target_mask=None, key_padding_mask=None):
    # TODO(synk): arbitrary target_mask / key_padding_mask are not wired; the
    # standard causal mask used by GPT.generate() is built inside the kernel.
    B, S = token_ids.shape
    assert S <= MEMORY_LENGTH, "sequence length exceeds position-embedding table"
    S_MAX = MEMORY_LENGTH

    # Pad to the fixed memory length so one compiled kernel serves every decode
    # step; the causal mask makes padded positions invisible to the real ones.
    ids = jnp.pad(token_ids.astype(jnp.int32), ((0, 0), (0, S_MAX - S)))

    kernel = functools.partial(gpt_kernel, batch=B, seq=S_MAX,
                               num_heads=NUM_HEADS, num_layers=NUM_LAYERS)
    inputs = (ids, kparams['epos'], kparams['wqo'], kparams['small'],
              kparams['w1'], kparams['b1'], kparams['w2'],
              kparams['fcw'], kparams['fcb'])
    out = pl.pallas_call(
        kernel,
        out_shape=jax.ShapeDtypeStruct((B * S_MAX, VOCAB_PAD), jnp.float32),
        in_specs=[pl.BlockSpec(memory_space=pltpu.MemorySpace.VMEM)] * len(inputs),
        out_specs=pl.BlockSpec(memory_space=pltpu.MemorySpace.VMEM),
    )(*inputs)
    return out.reshape(B, S_MAX, VOCAB_PAD)[:, :S, :NUM_EMBEDDINGS]


if __name__ == "__main__":
    params = init_params(jax.random.PRNGKey(0))
    kparams = prepare_kernel_params(params)

    B, S = 2, 8
    ids = jax.random.randint(jax.random.PRNGKey(1), (B, S), 0, NUM_EMBEDDINGS,
                             dtype=jnp.int32)

    fwd = jax.jit(gpt_forward)
    out = fwd(kparams, ids)
    jax.block_until_ready(out)
    assert out.shape == (B, S, NUM_EMBEDDINGS), out.shape
    assert bool(jnp.all(jnp.isfinite(out)))
    print("KERNEL_OK")
</pallas_src>

<mosaic_0001>
module attributes {stable_mosaic.version = 11 : i64} {
  func.func @gpt_kernel(%arg0: memref<2x16xi32, #tpu.memory_space<vmem>>, %arg1: memref<80x32xf32, #tpu.memory_space<vmem>>, %arg2: memref<2x32x128xbf16, #tpu.memory_space<vmem>>, %arg3: memref<2x8x96xf32, #tpu.memory_space<vmem>>, %arg4: memref<2x32x2048xbf16, #tpu.memory_space<vmem>>, %arg5: memref<2x1x2048xf32, #tpu.memory_space<vmem>>, %arg6: memref<2x2048x32xbf16, #tpu.memory_space<vmem>>, %arg7: memref<32x128xbf16, #tpu.memory_space<vmem>>, %arg8: memref<1x128xf32, #tpu.memory_space<vmem>>, %arg9: memref<32x128xf32, #tpu.memory_space<vmem>>) attributes {dimension_semantics = [], scalar_prefetch = 0 : i64, scratch_operands = 0 : i64, tpu.core_type = #tpu.core_type<tc>} {
    %c0 = arith.constant 0 : index
    %c0_0 = arith.constant 0 : index
    %0 = vector.load %arg0[%c0, %c0_0] : memref<2x16xi32, #tpu.memory_space<vmem>>, vector<2x16xi32>
    %1 = tpu.iota {dimensions = array<i32: 2>} : vector<2x16x64xi32>
    %2 = vector.shape_cast %0 : vector<2x16xi32> to vector<2x16x1xi32>
    %3 = vector.broadcast %2 : vector<2x16x1xi32> to vector<2x16x64xi32>
    %4 = arith.cmpi eq, %1, %3 : vector<2x16x64xi32>
    %5 = arith.extui %4 : vector<2x16x64xi1> to vector<2x16x64xi32>
    %6 = arith.sitofp %5 : vector<2x16x64xi32> to vector<2x16x64xf32>
    %c0_1 = arith.constant 0 : index
    %c0_2 = arith.constant 0 : index
    %7 = vector.load %arg1[%c0_1, %c0_2] : memref<80x32xf32, #tpu.memory_space<vmem>>, vector<64x32xf32>
    %c64 = arith.constant 64 : index
    %c0_3 = arith.constant 0 : index
    %8 = vector.load %arg1[%c64, %c0_3] : memref<80x32xf32, #tpu.memory_space<vmem>>, vector<16x32xf32>
    %9 = vector.shape_cast %6 : vector<2x16x64xf32> to vector<32x64xf32>
    %cst = arith.constant dense<0.000000e+00> : vector<32x32xf32>
    %10 = tpu.matmul %9, %7, %cst {dimension_numbers = #tpu.dot_dimension_numbers<[1], [0], [0], [1], [0, 0, 1, 1], [], []>} : vector<32x64xf32>, vector<64x32xf32>, vector<32x32xf32> -> vector<32x32xf32>
    %11 = vector.shape_cast %10 : vector<32x32xf32> to vector<2x16x32xf32>
    %12 = vector.shape_cast %8 : vector<16x32xf32> to vector<1x16x32xf32>
    %13 = vector.broadcast %12 : vector<1x16x32xf32> to vector<2x16x32xf32>
    %14 = arith.addf %11, %13 : vector<2x16x32xf32>
    %15 = vector.shape_cast %14 : vector<2x16x32xf32> to vector<32x32xf32>
    %16 = tpu.iota {dimensions = array<i32: 0>} : vector<16x16xi32>
    %17 = tpu.iota {dimensions = array<i32: 1>} : vector<16x16xi32>
    %18 = arith.cmpi sgt, %17, %16 : vector<16x16xi32>
    %cst_4 = arith.constant -1.000000e+30 : f32
    %cst_5 = arith.constant 0.000000e+00 : f32
    %19 = vector.broadcast %cst_4 : f32 to vector<16x16xf32>
    %20 = vector.broadcast %cst_5 : f32 to vector<16x16xf32>
    %21 = arith.select %18, %19, %20 : vector<16x16xi1>, vector<16x16xf32>
    %c0_6 = arith.constant 0 : index
    %c0_7 = arith.constant 0 : index
    %c0_8 = arith.constant 0 : index
    %22 = vector.load %arg2[%c0_6, %c0_7, %c0_8] : memref<2x32x128xbf16, #tpu.memory_space<vmem>>, vector<1x32x128xbf16>
    %23 = vector.shape_cast %22 : vector<1x32x128xbf16> to vector<32x128xbf16>
    %c0_9 = arith.constant 0 : index
    %c0_10 = arith.constant 0 : index
    %c0_11 = arith.constant 0 : index
    %24 = vector.load %arg3[%c0_9, %c0_10, %c0_11] : memref<2x8x96xf32, #tpu.memory_space<vmem>>, vector<1x8x96xf32>
    %25 = vector.shape_cast %24 : vector<1x8x96xf32> to vector<8x96xf32>
    %26 = vector.extract_strided_slice %25 {offsets = [0, 0], sizes = [1, 96], strides = [1, 1]} : vector<8x96xf32> to vector<1x96xf32>
    %27 = vector.extract_strided_slice %25 {offsets = [1, 0], sizes = [1, 32], strides = [1, 1]} : vector<8x96xf32> to vector<1x32xf32>
    %28 = vector.extract_strided_slice %25 {offsets = [2, 0], sizes = [1, 32], strides = [1, 1]} : vector<8x96xf32> to vector<1x32xf32>
    %29 = vector.extract_strided_slice %25 {offsets = [3, 0], sizes = [1, 32], strides = [1, 1]} : vector<8x96xf32> to vector<1x32xf32>
    %30 = vector.extract_strided_slice %25 {offsets = [4, 0], sizes = [1, 32], strides = [1, 1]} : vector<8x96xf32> to vector<1x32xf32>
    %31 = vector.extract_strided_slice %25 {offsets = [5, 0], sizes = [1, 32], strides = [1, 1]} : vector<8x96xf32> to vector<1x32xf32>
    %32 = vector.extract_strided_slice %25 {offsets = [6, 0], sizes = [1, 32], strides = [1, 1]} : vector<8x96xf32> to vector<1x32xf32>
    %33 = arith.truncf %15 : vector<32x32xf32> to vector<32x32xbf16>
    %34 = vector.extract_strided_slice %23 {offsets = [0, 0], sizes = [32, 96], strides = [1, 1]} : vector<32x128xbf16> to vector<32x96xbf16>
    %cst_12 = arith.constant dense<0.000000e+00> : vector<32x96xf32>
    %35 = tpu.matmul %33, %34, %cst_12 {dimension_numbers = #tpu.dot_dimension_numbers<[1], [0], [0], [1], [0, 0, 1, 1], [], []>} : vector<32x32xbf16>, vector<32x96xbf16>, vector<32x96xf32> -> vector<32x96xf32>
    %36 = vector.broadcast %26 : vector<1x96xf32> to vector<32x96xf32>
    %37 = arith.addf %35, %36 : vector<32x96xf32>
    %38 = vector.extract_strided_slice %37 {offsets = [0, 0], sizes = [32, 8], strides = [1, 1]} : vector<32x96xf32> to vector<32x8xf32>
    %39 = vector.shape_cast %38 : vector<32x8xf32> to vector<2x16x8xf32>
    %40 = vector.extract_strided_slice %37 {offsets = [0, 8], sizes = [32, 8], strides = [1, 1]} : vector<32x96xf32> to vector<32x8xf32>
    %41 = vector.shape_cast %40 : vector<32x8xf32> to vector<2x16x8xf32>
    %42 = vector.extract_strided_slice %37 {offsets = [0, 16], sizes = [32, 8], strides = [1, 1]} : vector<32x96xf32> to vector<32x8xf32>
    %43 = vector.shape_cast %42 : vector<32x8xf32> to vector<2x16x8xf32>
    %44 = vector.extract_strided_slice %37 {offsets = [0, 24], sizes = [32, 8], strides = [1, 1]} : vector<32x96xf32> to vector<32x8xf32>
    %45 = vector.shape_cast %44 : vector<32x8xf32> to vector<2x16x8xf32>
    %46 = tpu.concatenate %39, %41, %43, %45 in 0 : vector<2x16x8xf32>, vector<2x16x8xf32>, vector<2x16x8xf32>, vector<2x16x8xf32> -> vector<8x16x8xf32>
    %47 = vector.extract_strided_slice %37 {offsets = [0, 32], sizes = [32, 8], strides = [1, 1]} : vector<32x96xf32> to vector<32x8xf32>
    %48 = vector.shape_cast %47 : vector<32x8xf32> to vector<2x16x8xf32>
    %49 = vector.extract_strided_slice %37 {offsets = [0, 40], sizes = [32, 8], strides = [1, 1]} : vector<32x96xf32> to vector<32x8xf32>
    %50 = vector.shape_cast %49 : vector<32x8xf32> to vector<2x16x8xf32>
    %51 = vector.extract_strided_slice %37 {offsets = [0, 48], sizes = [32, 8], strides = [1, 1]} : vector<32x96xf32> to vector<32x8xf32>
    %52 = vector.shape_cast %51 : vector<32x8xf32> to vector<2x16x8xf32>
    %53 = vector.extract_strided_slice %37 {offsets = [0, 56], sizes = [32, 8], strides = [1, 1]} : vector<32x96xf32> to vector<32x8xf32>
    %54 = vector.shape_cast %53 : vector<32x8xf32> to vector<2x16x8xf32>
    %55 = tpu.concatenate %48, %50, %52, %54 in 0 : vector<2x16x8xf32>, vector<2x16x8xf32>, vector<2x16x8xf32>, vector<2x16x8xf32> -> vector<8x16x8xf32>
    %56 = vector.extract_strided_slice %37 {offsets = [0, 64], sizes = [32, 8], strides = [1, 1]} : vector<32x96xf32> to vector<32x8xf32>
    %57 = vector.shape_cast %56 : vector<32x8xf32> to vector<2x16x8xf32>
    %58 = vector.extract_strided_slice %37 {offsets = [0, 72], sizes = [32, 8], strides = [1, 1]} : vector<32x96xf32> to vector<32x8xf32>
    %59 = vector.shape_cast %58 : vector<32x8xf32> to vector<2x16x8xf32>
    %60 = vector.extract_strided_slice %37 {offsets = [0, 80], sizes = [32, 8], strides = [1, 1]} : vector<32x96xf32> to vector<32x8xf32>
    %61 = vector.shape_cast %60 : vector<32x8xf32> to vector<2x16x8xf32>
    %62 = vector.extract_strided_slice %37 {offsets = [0, 88], sizes = [32, 8], strides = [1, 1]} : vector<32x96xf32> to vector<32x8xf32>
    %63 = vector.shape_cast %62 : vector<32x8xf32> to vector<2x16x8xf32>
    %64 = tpu.concatenate %57, %59, %61, %63 in 0 : vector<2x16x8xf32>, vector<2x16x8xf32>, vector<2x16x8xf32>, vector<2x16x8xf32> -> vector<8x16x8xf32>
    %65 = arith.truncf %46 : vector<8x16x8xf32> to vector<8x16x8xbf16>
    %66 = arith.truncf %55 : vector<8x16x8xf32> to vector<8x16x8xbf16>
    "tpu.trace_start"() <{level = 10 : i32, message = "bqd,bkd->bqk"}> : () -> ()
    %cst_13 = arith.constant dense<0.000000e+00> : vector<8x16x16xf32>
    %67 = tpu.matmul %65, %66, %cst_13 {dimension_numbers = #tpu.dot_dimension_numbers<[2], [2], [1], [1], [0, 0, 0, 1, 1, 1], [0], [0]>} : vector<8x16x8xbf16>, vector<8x16x8xbf16>, vector<8x16x16xf32> -> vector<8x16x16xf32>
    "tpu.trace_stop"() : () -> ()
    %68 = vector.shape_cast %21 : vector<16x16xf32> to vector<1x16x16xf32>
    %69 = vector.broadcast %68 : vector<1x16x16xf32> to vector<8x16x16xf32>
    %70 = arith.addf %67, %69 : vector<8x16x16xf32>
    %cst_14 = arith.constant dense<0xFF800000> : vector<8x16xf32>
    %71 = vector.multi_reduction <maximumf>, %70, %cst_14 [2] : vector<8x16x16xf32> to vector<8x16xf32>
    %72 = vector.shape_cast %71 : vector<8x16xf32> to vector<8x16x1xf32>
    %73 = vector.broadcast %72 : vector<8x16x1xf32> to vector<8x16x16xf32>
    %74 = arith.subf %70, %73 : vector<8x16x16xf32>
    %75 = math.exp %74 : vector<8x16x16xf32>
    %cst_15 = arith.constant dense<0.000000e+00> : vector<8x16xf32>
    %76 = vector.multi_reduction <add>, %75, %cst_15 [2] : vector<8x16x16xf32> to vector<8x16xf32>
    %77 = vector.shape_cast %76 : vector<8x16xf32> to vector<8x16x1xf32>
    %78 = vector.broadcast %77 : vector<8x16x1xf32> to vector<8x16x16xf32>
    %79 = arith.divf %75, %78 : vector<8x16x16xf32>
    %80 = arith.truncf %79 : vector<8x16x16xf32> to vector<8x16x16xbf16>
    %81 = arith.truncf %64 : vector<8x16x8xf32> to vector<8x16x8xbf16>
    "tpu.trace_start"() <{level = 10 : i32, message = "bqk,bkd->bqd"}> : () -> ()
    %cst_16 = arith.constant dense<0.000000e+00> : vector<8x16x8xf32>
    %82 = tpu.matmul %80, %81, %cst_16 {dimension_numbers = #tpu.dot_dimension_numbers<[2], [1], [1], [2], [0, 0, 0, 1, 1, 2], [0], [0]>} : vector<8x16x16xbf16>, vector<8x16x8xbf16>, vector<8x16x8xf32> -> vector<8x16x8xf32>
    "tpu.trace_stop"() : () -> ()
    %83 = vector.extract_strided_slice %82 {offsets = [0, 0, 0], sizes = [2, 16, 8], strides = [1, 1, 1]} : vector<8x16x8xf32> to vector<2x16x8xf32>
    %84 = vector.shape_cast %83 : vector<2x16x8xf32> to vector<32x8xf32>
    %85 = vector.extract_strided_slice %82 {offsets = [2, 0, 0], sizes = [2, 16, 8], strides = [1, 1, 1]} : vector<8x16x8xf32> to vector<2x16x8xf32>
    %86 = vector.shape_cast %85 : vector<2x16x8xf32> to vector<32x8xf32>
    %87 = vector.extract_strided_slice %82 {offsets = [4, 0, 0], sizes = [2, 16, 8], strides = [1, 1, 1]} : vector<8x16x8xf32> to vector<2x16x8xf32>
    %88 = vector.shape_cast %87 : vector<2x16x8xf32> to vector<32x8xf32>
    %89 = vector.extract_strided_slice %82 {offsets = [6, 0, 0], sizes = [2, 16, 8], strides = [1, 1, 1]} : vector<8x16x8xf32> to vector<2x16x8xf32>
    %90 = vector.shape_cast %89 : vector<2x16x8xf32> to vector<32x8xf32>
    %91 = tpu.concatenate %84, %86, %88, %90 in 1 : vector<32x8xf32>, vector<32x8xf32>, vector<32x8xf32>, vector<32x8xf32> -> vector<32x32xf32>
    %92 = arith.truncf %91 : vector<32x32xf32> to vector<32x32xbf16>
    %93 = vector.extract_strided_slice %23 {offsets = [0, 96], sizes = [32, 32], strides = [1, 1]} : vector<32x128xbf16> to vector<32x32xbf16>
    %cst_17 = arith.constant dense<0.000000e+00> : vector<32x32xf32>
    %94 = tpu.matmul %92, %93, %cst_17 {dimension_numbers = #tpu.dot_dimension_numbers<[1], [0], [0], [1], [0, 0, 1, 1], [], []>} : vector<32x32xbf16>, vector<32x32xbf16>, vector<32x32xf32> -> vector<32x32xf32>
    %95 = vector.broadcast %27 : vector<1x32xf32> to vector<32x32xf32>
    %96 = arith.addf %94, %95 : vector<32x32xf32>
    %97 = arith.addf %15, %96 : vector<32x32xf32>
    %cst_18 = arith.constant dense<0.000000e+00> : vector<32xf32>
    %98 = vector.multi_reduction <add>, %97, %cst_18 [1] : vector<32x32xf32> to vector<32xf32>
    %99 = vector.shape_cast %98 : vector<32xf32> to vector<32x1xf32>
    %cst_19 = arith.constant 3.200000e+01 : f32
    %100 = vector.broadcast %cst_19 : f32 to vector<32x1xf32>
    %101 = arith.divf %99, %100 : vector<32x1xf32>
    %102 = vector.broadcast %101 : vector<32x1xf32> to vector<32x32xf32>
    %103 = arith.subf %97, %102 : vector<32x32xf32>
    %104 = arith.mulf %103, %103 : vector<32x32xf32>
    %cst_20 = arith.constant dense<0.000000e+00> : vector<32xf32>
    %105 = vector.multi_reduction <add>, %104, %cst_20 [1] : vector<32x32xf32> to vector<32xf32>
    %106 = vector.shape_cast %105 : vector<32xf32> to vector<32x1xf32>
    %cst_21 = arith.constant 3.200000e+01 : f32
    %107 = vector.broadcast %cst_21 : f32 to vector<32x1xf32>
    %108 = arith.divf %106, %107 : vector<32x1xf32>
    %109 = vector.broadcast %101 : vector<32x1xf32> to vector<32x32xf32>
    %110 = arith.subf %97, %109 : vector<32x32xf32>
    %cst_22 = arith.constant 9.99999974E-6 : f32
    %111 = vector.broadcast %cst_22 : f32 to vector<32x1xf32>
    %112 = arith.addf %108, %111 : vector<32x1xf32>
    %113 = math.rsqrt %112 : vector<32x1xf32>
    %114 = vector.broadcast %113 : vector<32x1xf32> to vector<32x32xf32>
    %115 = arith.mulf %110, %114 : vector<32x32xf32>
    %116 = vector.broadcast %28 : vector<1x32xf32> to vector<32x32xf32>
    %117 = arith.mulf %115, %116 : vector<32x32xf32>
    %118 = vector.broadcast %29 : vector<1x32xf32> to vector<32x32xf32>
    %119 = arith.addf %117, %118 : vector<32x32xf32>
    %120 = arith.truncf %119 : vector<32x32xf32> to vector<32x32xbf16>
    %c0_23 = arith.constant 0 : index
    %c0_24 = arith.constant 0 : index
    %c0_25 = arith.constant 0 : index
    %121 = vector.load %arg4[%c0_23, %c0_24, %c0_25] : memref<2x32x2048xbf16, #tpu.memory_space<vmem>>, vector<1x32x2048xbf16>
    %122 = vector.shape_cast %121 : vector<1x32x2048xbf16> to vector<32x2048xbf16>
    %cst_26 = arith.constant dense<0.000000e+00> : vector<32x2048xf32>
    %123 = tpu.matmul %120, %122, %cst_26 {dimension_numbers = #tpu.dot_dimension_numbers<[1], [0], [0], [1], [0, 0, 1, 1], [], []>} : vector<32x32xbf16>, vector<32x2048xbf16>, vector<32x2048xf32> -> vector<32x2048xf32>
    %c0_27 = arith.constant 0 : index
    %c0_28 = arith.constant 0 : index
    %c0_29 = arith.constant 0 : index
    %124 = vector.load %arg5[%c0_27, %c0_28, %c0_29] : memref<2x1x2048xf32, #tpu.memory_space<vmem>>, vector<1x1x2048xf32>
    %125 = vector.shape_cast %124 : vector<1x1x2048xf32> to vector<1x2048xf32>
    %126 = vector.broadcast %125 : vector<1x2048xf32> to vector<32x2048xf32>
    %127 = arith.addf %123, %126 : vector<32x2048xf32>
    %cst_30 = arith.constant 0.000000e+00 : f32
    %128 = vector.broadcast %cst_30 : f32 to vector<32x2048xf32>
    %129 = arith.maximumf %127, %128 : vector<32x2048xf32>
    %130 = arith.truncf %129 : vector<32x2048xf32> to vector<32x2048xbf16>
    %c0_31 = arith.constant 0 : index
    %c0_32 = arith.constant 0 : index
    %c0_33 = arith.constant 0 : index
    %131 = vector.load %arg6[%c0_31, %c0_32, %c0_33] : memref<2x2048x32xbf16, #tpu.memory_space<vmem>>, vector<1x2048x32xbf16>
    %132 = vector.shape_cast %131 : vector<1x2048x32xbf16> to vector<2048x32xbf16>
    %cst_34 = arith.constant dense<0.000000e+00> : vector<32x32xf32>
    %133 = tpu.matmul %130, %132, %cst_34 {dimension_numbers = #tpu.dot_dimension_numbers<[1], [0], [0], [1], [0, 0, 1, 1], [], []>} : vector<32x2048xbf16>, vector<2048x32xbf16>, vector<32x32xf32> -> vector<32x32xf32>
    %134 = vector.broadcast %30 : vector<1x32xf32> to vector<32x32xf32>
    %135 = arith.addf %133, %134 : vector<32x32xf32>
    %136 = arith.addf %119, %135 : vector<32x32xf32>
    %cst_35 = arith.constant dense<0.000000e+00> : vector<32xf32>
    %137 = vector.multi_reduction <add>, %136, %cst_35 [1] : vector<32x32xf32> to vector<32xf32>
    %138 = vector.shape_cast %137 : vector<32xf32> to vector<32x1xf32>
    %cst_36 = arith.constant 3.200000e+01 : f32
    %139 = vector.broadcast %cst_36 : f32 to vector<32x1xf32>
    %140 = arith.divf %138, %139 : vector<32x1xf32>
    %141 = vector.broadcast %140 : vector<32x1xf32> to vector<32x32xf32>
    %142 = arith.subf %136, %141 : vector<32x32xf32>
    %143 = arith.mulf %142, %142 : vector<32x32xf32>
    %cst_37 = arith.constant dense<0.000000e+00> : vector<32xf32>
    %144 = vector.multi_reduction <add>, %143, %cst_37 [1] : vector<32x32xf32> to vector<32xf32>
    %145 = vector.shape_cast %144 : vector<32xf32> to vector<32x1xf32>
    %cst_38 = arith.constant 3.200000e+01 : f32
    %146 = vector.broadcast %cst_38 : f32 to vector<32x1xf32>
    %147 = arith.divf %145, %146 : vector<32x1xf32>
    %148 = vector.broadcast %140 : vector<32x1xf32> to vector<32x32xf32>
    %149 = arith.subf %136, %148 : vector<32x32xf32>
    %cst_39 = arith.constant 9.99999974E-6 : f32
    %150 = vector.broadcast %cst_39 : f32 to vector<32x1xf32>
    %151 = arith.addf %147, %150 : vector<32x1xf32>
    %152 = math.rsqrt %151 : vector<32x1xf32>
    %153 = vector.broadcast %152 : vector<32x1xf32> to vector<32x32xf32>
    %154 = arith.mulf %149, %153 : vector<32x32xf32>
    %155 = vector.broadcast %31 : vector<1x32xf32> to vector<32x32xf32>
    %156 = arith.mulf %154, %155 : vector<32x32xf32>
    %157 = vector.broadcast %32 : vector<1x32xf32> to vector<32x32xf32>
    %158 = arith.addf %156, %157 : vector<32x32xf32>
    %c1 = arith.constant 1 : index
    %c0_40 = arith.constant 0 : index
    %c0_41 = arith.constant 0 : index
    %159 = vector.load %arg2[%c1, %c0_40, %c0_41] : memref<2x32x128xbf16, #tpu.memory_space<vmem>>, vector<1x32x128xbf16>
    %160 = vector.shape_cast %159 : vector<1x32x128xbf16> to vector<32x128xbf16>
    %c1_42 = arith.constant 1 : index
    %c0_43 = arith.constant 0 : index
    %c0_44 = arith.constant 0 : index
    %161 = vector.load %arg3[%c1_42, %c0_43, %c0_44] : memref<2x8x96xf32, #tpu.memory_space<vmem>>, vector<1x8x96xf32>
    %162 = vector.shape_cast %161 : vector<1x8x96xf32> to vector<8x96xf32>
    %163 = vector.extract_strided_slice %162 {offsets = [0, 0], sizes = [1, 96], strides = [1, 1]} : vector<8x96xf32> to vector<1x96xf32>
    %164 = vector.extract_strided_slice %162 {offsets = [1, 0], sizes = [1, 32], strides = [1, 1]} : vector<8x96xf32> to vector<1x32xf32>
    %165 = vector.extract_strided_slice %162 {offsets = [2, 0], sizes = [1, 32], strides = [1, 1]} : vector<8x96xf32> to vector<1x32xf32>
    %166 = vector.extract_strided_slice %162 {offsets = [3, 0], sizes = [1, 32], strides = [1, 1]} : vector<8x96xf32> to vector<1x32xf32>
    %167 = vector.extract_strided_slice %162 {offsets = [4, 0], sizes = [1, 32], strides = [1, 1]} : vector<8x96xf32> to vector<1x32xf32>
    %168 = vector.extract_strided_slice %162 {offsets = [5, 0], sizes = [1, 32], strides = [1, 1]} : vector<8x96xf32> to vector<1x32xf32>
    %169 = vector.extract_strided_slice %162 {offsets = [6, 0], sizes = [1, 32], strides = [1, 1]} : vector<8x96xf32> to vector<1x32xf32>
    %170 = arith.truncf %158 : vector<32x32xf32> to vector<32x32xbf16>
    %171 = vector.extract_strided_slice %160 {offsets = [0, 0], sizes = [32, 96], strides = [1, 1]} : vector<32x128xbf16> to vector<32x96xbf16>
    %cst_45 = arith.constant dense<0.000000e+00> : vector<32x96xf32>
    %172 = tpu.matmul %170, %171, %cst_45 {dimension_numbers = #tpu.dot_dimension_numbers<[1], [0], [0], [1], [0, 0, 1, 1], [], []>} : vector<32x32xbf16>, vector<32x96xbf16>, vector<32x96xf32> -> vector<32x96xf32>
    %173 = vector.broadcast %163 : vector<1x96xf32> to vector<32x96xf32>
    %174 = arith.addf %172, %173 : vector<32x96xf32>
    %175 = vector.extract_strided_slice %174 {offsets = [0, 0], sizes = [32, 8], strides = [1, 1]} : vector<32x96xf32> to vector<32x8xf32>
    %176 = vector.shape_cast %175 : vector<32x8xf32> to vector<2x16x8xf32>
    %177 = vector.extract_strided_slice %174 {offsets = [0, 8], sizes = [32, 8], strides = [1, 1]} : vector<32x96xf32> to vector<32x8xf32>
    %178 = vector.shape_cast %177 : vector<32x8xf32> to vector<2x16x8xf32>
    %179 = vector.extract_strided_slice %174 {offsets = [0, 16], sizes = [32, 8], strides = [1, 1]} : vector<32x96xf32> to vector<32x8xf32>
    %180 = vector.shape_cast %179 : vector<32x8xf32> to vector<2x16x8xf32>
    %181 = vector.extract_strided_slice %174 {offsets = [0, 24], sizes = [32, 8], strides = [1, 1]} : vector<32x96xf32> to vector<32x8xf32>
    %182 = vector.shape_cast %181 : vector<32x8xf32> to vector<2x16x8xf32>
    %183 = tpu.concatenate %176, %178, %180, %182 in 0 : vector<2x16x8xf32>, vector<2x16x8xf32>, vector<2x16x8xf32>, vector<2x16x8xf32> -> vector<8x16x8xf32>
    %184 = vector.extract_strided_slice %174 {offsets = [0, 32], sizes = [32, 8], strides = [1, 1]} : vector<32x96xf32> to vector<32x8xf32>
    %185 = vector.shape_cast %184 : vector<32x8xf32> to vector<2x16x8xf32>
    %186 = vector.extract_strided_slice %174 {offsets = [0, 40], sizes = [32, 8], strides = [1, 1]} : vector<32x96xf32> to vector<32x8xf32>
    %187 = vector.shape_cast %186 : vector<32x8xf32> to vector<2x16x8xf32>
    %188 = vector.extract_strided_slice %174 {offsets = [0, 48], sizes = [32, 8], strides = [1, 1]} : vector<32x96xf32> to vector<32x8xf32>
    %189 = vector.shape_cast %188 : vector<32x8xf32> to vector<2x16x8xf32>
    %190 = vector.extract_strided_slice %174 {offsets = [0, 56], sizes = [32, 8], strides = [1, 1]} : vector<32x96xf32> to vector<32x8xf32>
    %191 = vector.shape_cast %190 : vector<32x8xf32> to vector<2x16x8xf32>
    %192 = tpu.concatenate %185, %187, %189, %191 in 0 : vector<2x16x8xf32>, vector<2x16x8xf32>, vector<2x16x8xf32>, vector<2x16x8xf32> -> vector<8x16x8xf32>
    %193 = vector.extract_strided_slice %174 {offsets = [0, 64], sizes = [32, 8], strides = [1, 1]} : vector<32x96xf32> to vector<32x8xf32>
    %194 = vector.shape_cast %193 : vector<32x8xf32> to vector<2x16x8xf32>
    %195 = vector.extract_strided_slice %174 {offsets = [0, 72], sizes = [32, 8], strides = [1, 1]} : vector<32x96xf32> to vector<32x8xf32>
    %196 = vector.shape_cast %195 : vector<32x8xf32> to vector<2x16x8xf32>
    %197 = vector.extract_strided_slice %174 {offsets = [0, 80], sizes = [32, 8], strides = [1, 1]} : vector<32x96xf32> to vector<32x8xf32>
    %198 = vector.shape_cast %197 : vector<32x8xf32> to vector<2x16x8xf32>
    %199 = vector.extract_strided_slice %174 {offsets = [0, 88], sizes = [32, 8], strides = [1, 1]} : vector<32x96xf32> to vector<32x8xf32>
    %200 = vector.shape_cast %199 : vector<32x8xf32> to vector<2x16x8xf32>
    %201 = tpu.concatenate %194, %196, %198, %200 in 0 : vector<2x16x8xf32>, vector<2x16x8xf32>, vector<2x16x8xf32>, vector<2x16x8xf32> -> vector<8x16x8xf32>
    %202 = arith.truncf %183 : vector<8x16x8xf32> to vector<8x16x8xbf16>
    %203 = arith.truncf %192 : vector<8x16x8xf32> to vector<8x16x8xbf16>
    "tpu.trace_start"() <{level = 10 : i32, message = "bqd,bkd->bqk"}> : () -> ()
    %cst_46 = arith.constant dense<0.000000e+00> : vector<8x16x16xf32>
    %204 = tpu.matmul %202, %203, %cst_46 {dimension_numbers = #tpu.dot_dimension_numbers<[2], [2], [1], [1], [0, 0, 0, 1, 1, 1], [0], [0]>} : vector<8x16x8xbf16>, vector<8x16x8xbf16>, vector<8x16x16xf32> -> vector<8x16x16xf32>
    "tpu.trace_stop"() : () -> ()
    %205 = vector.shape_cast %21 : vector<16x16xf32> to vector<1x16x16xf32>
    %206 = vector.broadcast %205 : vector<1x16x16xf32> to vector<8x16x16xf32>
    %207 = arith.addf %204, %206 : vector<8x16x16xf32>
    %cst_47 = arith.constant dense<0xFF800000> : vector<8x16xf32>
    %208 = vector.multi_reduction <maximumf>, %207, %cst_47 [2] : vector<8x16x16xf32> to vector<8x16xf32>
    %209 = vector.shape_cast %208 : vector<8x16xf32> to vector<8x16x1xf32>
    %210 = vector.broadcast %209 : vector<8x16x1xf32> to vector<8x16x16xf32>
    %211 = arith.subf %207, %210 : vector<8x16x16xf32>
    %212 = math.exp %211 : vector<8x16x16xf32>
    %cst_48 = arith.constant dense<0.000000e+00> : vector<8x16xf32>
    %213 = vector.multi_reduction <add>, %212, %cst_48 [2] : vector<8x16x16xf32> to vector<8x16xf32>
    %214 = vector.shape_cast %213 : vector<8x16xf32> to vector<8x16x1xf32>
    %215 = vector.broadcast %214 : vector<8x16x1xf32> to vector<8x16x16xf32>
    %216 = arith.divf %212, %215 : vector<8x16x16xf32>
    %217 = arith.truncf %216 : vector<8x16x16xf32> to vector<8x16x16xbf16>
    %218 = arith.truncf %201 : vector<8x16x8xf32> to vector<8x16x8xbf16>
    "tpu.trace_start"() <{level = 10 : i32, message = "bqk,bkd->bqd"}> : () -> ()
    %cst_49 = arith.constant dense<0.000000e+00> : vector<8x16x8xf32>
    %219 = tpu.matmul %217, %218, %cst_49 {dimension_numbers = #tpu.dot_dimension_numbers<[2], [1], [1], [2], [0, 0, 0, 1, 1, 2], [0], [0]>} : vector<8x16x16xbf16>, vector<8x16x8xbf16>, vector<8x16x8xf32> -> vector<8x16x8xf32>
    "tpu.trace_stop"() : () -> ()
    %220 = vector.extract_strided_slice %219 {offsets = [0, 0, 0], sizes = [2, 16, 8], strides = [1, 1, 1]} : vector<8x16x8xf32> to vector<2x16x8xf32>
    %221 = vector.shape_cast %220 : vector<2x16x8xf32> to vector<32x8xf32>
    %222 = vector.extract_strided_slice %219 {offsets = [2, 0, 0], sizes = [2, 16, 8], strides = [1, 1, 1]} : vector<8x16x8xf32> to vector<2x16x8xf32>
    %223 = vector.shape_cast %222 : vector<2x16x8xf32> to vector<32x8xf32>
    %224 = vector.extract_strided_slice %219 {offsets = [4, 0, 0], sizes = [2, 16, 8], strides = [1, 1, 1]} : vector<8x16x8xf32> to vector<2x16x8xf32>
    %225 = vector.shape_cast %224 : vector<2x16x8xf32> to vector<32x8xf32>
    %226 = vector.extract_strided_slice %219 {offsets = [6, 0, 0], sizes = [2, 16, 8], strides = [1, 1, 1]} : vector<8x16x8xf32> to vector<2x16x8xf32>
    %227 = vector.shape_cast %226 : vector<2x16x8xf32> to vector<32x8xf32>
    %228 = tpu.concatenate %221, %223, %225, %227 in 1 : vector<32x8xf32>, vector<32x8xf32>, vector<32x8xf32>, vector<32x8xf32> -> vector<32x32xf32>
    %229 = arith.truncf %228 : vector<32x32xf32> to vector<32x32xbf16>
    %230 = vector.extract_strided_slice %160 {offsets = [0, 96], sizes = [32, 32], strides = [1, 1]} : vector<32x128xbf16> to vector<32x32xbf16>
    %cst_50 = arith.constant dense<0.000000e+00> : vector<32x32xf32>
    %231 = tpu.matmul %229, %230, %cst_50 {dimension_numbers = #tpu.dot_dimension_numbers<[1], [0], [0], [1], [0, 0, 1, 1], [], []>} : vector<32x32xbf16>, vector<32x32xbf16>, vector<32x32xf32> -> vector<32x32xf32>
    %232 = vector.broadcast %164 : vector<1x32xf32> to vector<32x32xf32>
    %233 = arith.addf %231, %232 : vector<32x32xf32>
    %234 = arith.addf %158, %233 : vector<32x32xf32>
    %cst_51 = arith.constant dense<0.000000e+00> : vector<32xf32>
    %235 = vector.multi_reduction <add>, %234, %cst_51 [1] : vector<32x32xf32> to vector<32xf32>
    %236 = vector.shape_cast %235 : vector<32xf32> to vector<32x1xf32>
    %cst_52 = arith.constant 3.200000e+01 : f32
    %237 = vector.broadcast %cst_52 : f32 to vector<32x1xf32>
    %238 = arith.divf %236, %237 : vector<32x1xf32>
    %239 = vector.broadcast %238 : vector<32x1xf32> to vector<32x32xf32>
    %240 = arith.subf %234, %239 : vector<32x32xf32>
    %241 = arith.mulf %240, %240 : vector<32x32xf32>
    %cst_53 = arith.constant dense<0.000000e+00> : vector<32xf32>
    %242 = vector.multi_reduction <add>, %241, %cst_53 [1] : vector<32x32xf32> to vector<32xf32>
    %243 = vector.shape_cast %242 : vector<32xf32> to vector<32x1xf32>
    %cst_54 = arith.constant 3.200000e+01 : f32
    %244 = vector.broadcast %cst_54 : f32 to vector<32x1xf32>
    %245 = arith.divf %243, %244 : vector<32x1xf32>
    %246 = vector.broadcast %238 : vector<32x1xf32> to vector<32x32xf32>
    %247 = arith.subf %234, %246 : vector<32x32xf32>
    %cst_55 = arith.constant 9.99999974E-6 : f32
    %248 = vector.broadcast %cst_55 : f32 to vector<32x1xf32>
    %249 = arith.addf %245, %248 : vector<32x1xf32>
    %250 = math.rsqrt %249 : vector<32x1xf32>
    %251 = vector.broadcast %250 : vector<32x1xf32> to vector<32x32xf32>
    %252 = arith.mulf %247, %251 : vector<32x32xf32>
    %253 = vector.broadcast %165 : vector<1x32xf32> to vector<32x32xf32>
    %254 = arith.mulf %252, %253 : vector<32x32xf32>
    %255 = vector.broadcast %166 : vector<1x32xf32> to vector<32x32xf32>
    %256 = arith.addf %254, %255 : vector<32x32xf32>
    %257 = arith.truncf %256 : vector<32x32xf32> to vector<32x32xbf16>
    %c1_56 = arith.constant 1 : index
    %c0_57 = arith.constant 0 : index
    %c0_58 = arith.constant 0 : index
    %258 = vector.load %arg4[%c1_56, %c0_57, %c0_58] : memref<2x32x2048xbf16, #tpu.memory_space<vmem>>, vector<1x32x2048xbf16>
    %259 = vector.shape_cast %258 : vector<1x32x2048xbf16> to vector<32x2048xbf16>
    %cst_59 = arith.constant dense<0.000000e+00> : vector<32x2048xf32>
    %260 = tpu.matmul %257, %259, %cst_59 {dimension_numbers = #tpu.dot_dimension_numbers<[1], [0], [0], [1], [0, 0, 1, 1], [], []>} : vector<32x32xbf16>, vector<32x2048xbf16>, vector<32x2048xf32> -> vector<32x2048xf32>
    %c1_60 = arith.constant 1 : index
    %c0_61 = arith.constant 0 : index
    %c0_62 = arith.constant 0 : index
    %261 = vector.load %arg5[%c1_60, %c0_61, %c0_62] : memref<2x1x2048xf32, #tpu.memory_space<vmem>>, vector<1x1x2048xf32>
    %262 = vector.shape_cast %261 : vector<1x1x2048xf32> to vector<1x2048xf32>
    %263 = vector.broadcast %262 : vector<1x2048xf32> to vector<32x2048xf32>
    %264 = arith.addf %260, %263 : vector<32x2048xf32>
    %cst_63 = arith.constant 0.000000e+00 : f32
    %265 = vector.broadcast %cst_63 : f32 to vector<32x2048xf32>
    %266 = arith.maximumf %264, %265 : vector<32x2048xf32>
    %267 = arith.truncf %266 : vector<32x2048xf32> to vector<32x2048xbf16>
    %c1_64 = arith.constant 1 : index
    %c0_65 = arith.constant 0 : index
    %c0_66 = arith.constant 0 : index
    %268 = vector.load %arg6[%c1_64, %c0_65, %c0_66] : memref<2x2048x32xbf16, #tpu.memory_space<vmem>>, vector<1x2048x32xbf16>
    %269 = vector.shape_cast %268 : vector<1x2048x32xbf16> to vector<2048x32xbf16>
    %cst_67 = arith.constant dense<0.000000e+00> : vector<32x32xf32>
    %270 = tpu.matmul %267, %269, %cst_67 {dimension_numbers = #tpu.dot_dimension_numbers<[1], [0], [0], [1], [0, 0, 1, 1], [], []>} : vector<32x2048xbf16>, vector<2048x32xbf16>, vector<32x32xf32> -> vector<32x32xf32>
    %271 = vector.broadcast %167 : vector<1x32xf32> to vector<32x32xf32>
    %272 = arith.addf %270, %271 : vector<32x32xf32>
    %273 = arith.addf %256, %272 : vector<32x32xf32>
    %cst_68 = arith.constant dense<0.000000e+00> : vector<32xf32>
    %274 = vector.multi_reduction <add>, %273, %cst_68 [1] : vector<32x32xf32> to vector<32xf32>
    %275 = vector.shape_cast %274 : vector<32xf32> to vector<32x1xf32>
    %cst_69 = arith.constant 3.200000e+01 : f32
    %276 = vector.broadcast %cst_69 : f32 to vector<32x1xf32>
    %277 = arith.divf %275, %276 : vector<32x1xf32>
    %278 = vector.broadcast %277 : vector<32x1xf32> to vector<32x32xf32>
    %279 = arith.subf %273, %278 : vector<32x32xf32>
    %280 = arith.mulf %279, %279 : vector<32x32xf32>
    %cst_70 = arith.constant dense<0.000000e+00> : vector<32xf32>
    %281 = vector.multi_reduction <add>, %280, %cst_70 [1] : vector<32x32xf32> to vector<32xf32>
    %282 = vector.shape_cast %281 : vector<32xf32> to vector<32x1xf32>
    %cst_71 = arith.constant 3.200000e+01 : f32
    %283 = vector.broadcast %cst_71 : f32 to vector<32x1xf32>
    %284 = arith.divf %282, %283 : vector<32x1xf32>
    %285 = vector.broadcast %277 : vector<32x1xf32> to vector<32x32xf32>
    %286 = arith.subf %273, %285 : vector<32x32xf32>
    %cst_72 = arith.constant 9.99999974E-6 : f32
    %287 = vector.broadcast %cst_72 : f32 to vector<32x1xf32>
    %288 = arith.addf %284, %287 : vector<32x1xf32>
    %289 = math.rsqrt %288 : vector<32x1xf32>
    %290 = vector.broadcast %289 : vector<32x1xf32> to vector<32x32xf32>
    %291 = arith.mulf %286, %290 : vector<32x32xf32>
    %292 = vector.broadcast %168 : vector<1x32xf32> to vector<32x32xf32>
    %293 = arith.mulf %291, %292 : vector<32x32xf32>
    %294 = vector.broadcast %169 : vector<1x32xf32> to vector<32x32xf32>
    %295 = arith.addf %293, %294 : vector<32x32xf32>
    %296 = arith.truncf %295 : vector<32x32xf32> to vector<32x32xbf16>
    %c0_73 = arith.constant 0 : index
    %c0_74 = arith.constant 0 : index
    %297 = vector.load %arg7[%c0_73, %c0_74] : memref<32x128xbf16, #tpu.memory_space<vmem>>, vector<32x128xbf16>
    %cst_75 = arith.constant dense<0.000000e+00> : vector<32x128xf32>
    %298 = tpu.matmul %296, %297, %cst_75 {dimension_numbers = #tpu.dot_dimension_numbers<[1], [0], [0], [1], [0, 0, 1, 1], [], []>} : vector<32x32xbf16>, vector<32x128xbf16>, vector<32x128xf32> -> vector<32x128xf32>
    %c0_76 = arith.constant 0 : index
    %c0_77 = arith.constant 0 : index
    %299 = vector.load %arg8[%c0_76, %c0_77] : memref<1x128xf32, #tpu.memory_space<vmem>>, vector<1x128xf32>
    %300 = vector.broadcast %299 : vector<1x128xf32> to vector<32x128xf32>
    %301 = arith.addf %298, %300 : vector<32x128xf32>
    %c0_78 = arith.constant 0 : index
    %c0_79 = arith.constant 0 : index
    %302 = vector.load %arg9[%c0_78, %c0_79] : memref<32x128xf32, #tpu.memory_space<vmem>>, vector<32x128xf32>
    tpu.vector_store %arg9[%c0_78, %c0_79], %301 {strides = array<i32>} : memref<32x128xf32, #tpu.memory_space<vmem>>, vector<32x128xf32>,
    return
  }
}

</mosaic_0001>

<llo_original>
// kernel: gpt_forward.1
$region0: #{gpt_forward.1}
  #allocation0 [shape = 'u32[]', space=smem, size = 0x4, offset = 0x4, fixed_abs, tag = 'smem constant byte address 0x4 - core index']
  #allocation1 [shape = 'u32[72,128]{1,0:T(1,128)}', space=vmem, size = 0x9000, scoped, tag = 'internal scratch']
  %s0 = inlined_call_operand.vmem [shape: s32[2,16], index: 0, kind: input, shape index: {}]
  %s1 = inlined_call_operand.vmem [shape: f32[80,32], index: 1, kind: input, shape index: {}]
  %s2 = inlined_call_operand.vmem [shape: bf16[2,32,128], index: 2, kind: input, shape index: {}]
  %s3 = inlined_call_operand.vmem [shape: f32[2,8,96], index: 3, kind: input, shape index: {}]
  %s4 = inlined_call_operand.vmem [shape: bf16[2,32,2048], index: 4, kind: input, shape index: {}]
  %s5 = inlined_call_operand.vmem [shape: f32[2,1,2048], index: 5, kind: input, shape index: {}]
  %s6 = inlined_call_operand.vmem [shape: bf16[2,2048,32], index: 6, kind: input, shape index: {}]
  %s7 = inlined_call_operand.vmem [shape: bf16[32,128], index: 7, kind: input, shape index: {}]
  %s8 = inlined_call_operand.vmem [shape: f32[1,128], index: 8, kind: input, shape index: {}]
  %s9 = inlined_call_operand.vmem [shape: f32[32,128], index: 9, kind: output, shape index: {}]
  %s10 = sld [smem:[#allocation0]]
  $region46: #{gpt_forward.1} parent=0
    _
  %s12 = ssub.s32 1, %s10
  %s13 = scalar_select 0, %s12, %s10
  // Predicated region
  $region2: #{gpt_forward.1} parent=0 // pred_check
    _
  $region3: #{gpt_forward.1} parent=0 // pred_check_branch
    %15 = sbr.rel (0) target = $region5
  $region4: #{gpt_forward.1} parent=0 // pred_region
    _
  $region5: #{gpt_forward.1} parent=0 // pred_fallthru
    _
  // Predicated region
  $region6: #{gpt_forward.1} parent=0 // pred_check
    _
  $region7: #{gpt_forward.1} parent=0 // pred_check_branch
    %17 = sbr.rel (0) target = $region9
  $region8: #{gpt_forward.1} parent=0 // pred_region
    _
  $region9: #{gpt_forward.1} parent=0 // pred_fallthru
    _
  // Predicated region
  $region10: #{gpt_forward.1} parent=0 // pred_check
    _
  $region11: #{gpt_forward.1} parent=0 // pred_check_branch
    %19 = sbr.rel (0) target = $region13
  $region12: #{gpt_forward.1} parent=0 // pred_region
    _
  $region13: #{gpt_forward.1} parent=0 // pred_fallthru
    _
  // Predicated region
  $region14: #{gpt_forward.1} parent=0 // pred_check
    _
  $region15: #{gpt_forward.1} parent=0 // pred_check_branch
    %21 = sbr.rel (0) target = $region17
  $region16: #{gpt_forward.1} parent=0 // pred_region
    _
  $region17: #{gpt_forward.1} parent=0 // pred_fallthru
    _
  // Predicated region
  $region18: #{gpt_forward.1} parent=0 // pred_check
    _
  $region19: #{gpt_forward.1} parent=0 // pred_check_branch
    %23 = sbr.rel (0) target = $region21
  $region20: #{gpt_forward.1} parent=0 // pred_region
    _
  $region21: #{gpt_forward.1} parent=0 // pred_fallthru
    _
  // Predicated region
  $region22: #{gpt_forward.1} parent=0 // pred_check
    _
  $region23: #{gpt_forward.1} parent=0 // pred_check_branch
    %25 = sbr.rel (0) target = $region25
  $region24: #{gpt_forward.1} parent=0 // pred_region
    _
  $region25: #{gpt_forward.1} parent=0 // pred_fallthru
    _
  // Predicated region
  $region26: #{gpt_forward.1} parent=0 // pred_check
    _
  $region27: #{gpt_forward.1} parent=0 // pred_check_branch
    %27 = sbr.rel (0) target = $region29
  $region28: #{gpt_forward.1} parent=0 // pred_region
    _
  $region29: #{gpt_forward.1} parent=0 // pred_fallthru
    _
  // Predicated region
  $region30: #{gpt_forward.1} parent=0 // pred_check
    _
  $region31: #{gpt_forward.1} parent=0 // pred_check_branch
    %29 = sbr.rel (0) target = $region33
  $region32: #{gpt_forward.1} parent=0 // pred_region
    _
  $region33: #{gpt_forward.1} parent=0 // pred_fallthru
    _
  // Predicated region
  $region34: #{gpt_forward.1} parent=0 // pred_check
    _
  $region35: #{gpt_forward.1} parent=0 // pred_check_branch
    %31 = sbr.rel (0) target = $region37
  $region36: #{gpt_forward.1} parent=0 // pred_region
    _
  $region37: #{gpt_forward.1} parent=0 // pred_fallthru
    _
  %v33 = vld [vmem:[%s0] sm:$0x3]
  %v34 = vlaneseq
  %v35 = vand.u32 %v34, 127
  %v36 = vperm.slane %v33, 0
  %v37 = vlaneseq
  %v38 = vshrl.u32 %v37, 7
  %40 = vset.pattern.permute.xlu0 %v38
  %41 = vperm.xlu0 %40, %v36
  %v42 = vpop.permute.xlu0 %41
  %v43 = vlaneseq
  %v44 = vshrl.u32 %v43, 7
  %v45 = vadd.s32 %v44, 8
  %46 = vset.pattern.permute.xlu0 %v45
  %47 = vperm.xlu0 %46, %v36
  %v48 = vpop.permute.xlu0 %47
  %v49 = vperm.slane %v33, 1
  %v50 = vlaneseq
  %v51 = vshrl.u32 %v50, 7
  %53 = vset.pattern.permute.xlu0 %v51
  %54 = vperm.xlu0 %53, %v49
  %v55 = vpop.permute.xlu0 %54
  %v56 = vlaneseq
  %v57 = vshrl.u32 %v56, 7
  %v58 = vadd.s32 %v57, 8
  %59 = vset.pattern.permute.xlu0 %v58
  %60 = vperm.xlu0 %59, %v49
  %v61 = vpop.permute.xlu0 %60
  %vm62 = vcmp.eq.s32.totalorder %v35, %v42
  %vm63 = vcmp.eq.s32.totalorder %v35, %v48
  %vm64 = vcmp.eq.s32.totalorder %v35, %v55
  %vm65 = vcmp.eq.s32.totalorder %v35, %v61
  %v66 = vsel %vm62, 1, 0
  %v67 = vsel %vm63, 1, 0
  %v68 = vsel %vm64, 1, 0
  %v69 = vsel %vm65, 1, 0
  %v70 = vcvt.s32.f32 %v66
  %v71 = vcvt.s32.f32 %v67
  %v72 = vcvt.s32.f32 %v68
  %v73 = vcvt.s32.f32 %v69
  %v74 = vld [vmem:[%s1] sm:$0xff]
  %v75 = vld [vmem:[%s1 + $0x8] sm:$0xff]
  %v76 = vld [vmem:[%s1 + $0x10] sm:$0xff]
  %v77 = vld [vmem:[%s1 + $0x18] sm:$0xff]
  %v78 = vld [vmem:[%s1 + $0x20] sm:$0xff]
  %v79 = vld [vmem:[%s1 + $0x28] sm:$0xff]
  %v80 = vld [vmem:[%s1 + $0x30] sm:$0xff]
  %v81 = vld [vmem:[%s1 + $0x38] sm:$0xff]
  %v82 = vld [vmem:[%s1 + $0x40] sm:$0xff]
  %v83 = vld [vmem:[%s1 + $0x48] sm:$0xff]
  %vm84 = vcmask 523264
  %v86 = vsel %vm84, %v70, 0
  %v89 = vsel %vm84, %v71, 0
  %v92 = vsel %vm84, %v72, 0
  %v95 = vsel %vm84, %v73, 0
  %97 = vmatpush.msra.mxu0 0.0
  %98 = vmatpush.msra.mxu0 0.0
  %99 = vmatpush.msra.mxu0 0.0
  %100 = vmatpush.msra.mxu0 0.0
  %101 = vmatpush.msra.mxu0 0.0
  %102 = vmatpush.msra.mxu0 0.0
  %103 = vmatpush.msra.mxu0 0.0
  %104 = vmatpush.msra.mxu0 0.0
  %105 = vmatpush.msra.mxu0 %v81
  %106 = vmatpush.msra.mxu0 %v80
  %107 = vmatpush.msra.mxu0 %v79
  %108 = vmatpush.msra.mxu0 %v78
  %109 = vmatpush.msra.mxu0 %v77
  %110 = vmatpush.msra.mxu0 %v76
  %111 = vmatpush.msra.mxu0 %v75
  %112 = vmatpush.msra.mxu0 %v74
  %113 = vmatmul.f32.gmra.mxu0 %v86
  %v114 = vpop.f32.mrf.mxu0
  %v115 = vadd.f32 0.0, %v114
  %116 = vmatmul.f32.gmra.mxu0 %v89
  %v117 = vpop.f32.mrf.mxu0
  %v118 = vadd.f32 0.0, %v117
  %119 = vmatmul.f32.gmra.mxu0 %v92
  %v120 = vpop.f32.mrf.mxu0
  %v121 = vadd.f32 0.0, %v120
  %122 = vmatmul.f32.gmra.mxu0 %v95
  %v123 = vpop.f32.mrf.mxu0
  %v124 = vadd.f32 0.0, %v123
  %125 = vdwg.mxu0
  %v126 = vadd.f32 %v115, %v82
  %v127 = vadd.f32 %v118, %v83
  %v128 = vadd.f32 %v121, %v82
  %v129 = vadd.f32 %v124, %v83
  %v130 = vlaneseq
  %v131 = vshrl.u32 %v130, 7
  %v132 = vadd.s32 %v131, 8
  %vm133 = vcmp.gt.s32.totalorder %v35, %v131
  %vm134 = vcmp.gt.s32.totalorder %v35, %v132
  %v135 = vsel %vm133, -1e+30, 0.0
  %v136 = vsel %vm134, -1e+30, 0.0
  %v137 = vld [vmem:[%s2] sm:$0xf]
  %v138 = vld [vmem:[%s2 + $0x4] sm:$0xf]
  %v139 = vld [vmem:[%s2 + $0x8] sm:$0xf]
  %v140 = vld [vmem:[%s2 + $0xc] sm:$0xf]
  %v141 = vld [vmem:[%s3] sm:$0xff]
  %v142 = vpack.c.bf16 %v127, %v126
  %v143 = vpack.c.bf16 %v129, %v128
  %v144 = vperm.slane %v141, 0
  %v149 = vunpack.c.l.b16 %v137
  %v150 = vunpack.c.l.b16 %v138
  %v151 = vunpack.c.l.b16 %v139
  %v152 = vunpack.c.l.b16 %v140
  %v153 = vpack.c.b16 %v150, %v149
  %v154 = vpack.c.b16 %v152, %v151
  %vm157 = vcmask 261120
  %v159 = vsel %vm157, %v142, 0
  %v162 = vsel %vm157, %v143, 0
  %164 = vmatpush.bf16.msra.mxu0 0
  %165 = vmatpush.bf16.msra.mxu0 0
  %166 = vmatpush.bf16.msra.mxu0 0
  %167 = vmatpush.bf16.msra.mxu0 0
  %168 = vmatpush.bf16.msra.mxu0 0
  %169 = vmatpush.bf16.msra.mxu0 0
  %170 = vmatpush.bf16.msra.mxu0 %v154
  %171 = vmatpush.bf16.msra.mxu0 %v153
  %172 = vmatmul.bf16.gmra.mxu0 %v159
  %v173 = vpop.f32.mrf.mxu0
  %v174 = vadd.f32 %v144, %v173
  %v175 = vpop.f32.mrf.mxu0
  %v176 = vadd.f32 %v144, %v175
  %177 = vmatmul.bf16.gmra.mxu0 %v162
  %v178 = vpop.f32.mrf.mxu0
  %v179 = vadd.f32 %v144, %v178
  %v180 = vpop.f32.mrf.mxu0
  %v181 = vadd.f32 %v144, %v180
  %182 = vdwg.mxu0
  %187 = vrot.lane.b32.xlu0 %v174, 120
  %v188 = vpop.permute.xlu0 %187
  %189 = vrot.lane.b32.xlu0 %v176, 120
  %v190 = vpop.permute.xlu0 %189
  %191 = vrot.lane.b32.xlu0 %v179, 120
  %v192 = vpop.permute.xlu0 %191
  %193 = vrot.lane.b32.xlu0 %v181, 120
  %v194 = vpop.permute.xlu0 %193
  %199 = vrot.lane.b32.xlu0 %v174, 112
  %v200 = vpop.permute.xlu0 %199
  %201 = vrot.lane.b32.xlu0 %v176, 112
  %v202 = vpop.permute.xlu0 %201
  %203 = vrot.lane.b32.xlu0 %v179, 112
  %v204 = vpop.permute.xlu0 %203
  %205 = vrot.lane.b32.xlu0 %v181, 112
  %v206 = vpop.permute.xlu0 %205
  %211 = vrot.lane.b32.xlu0 %v174, 104
  %v212 = vpop.permute.xlu0 %211
  %213 = vrot.lane.b32.xlu0 %v176, 104
  %v214 = vpop.permute.xlu0 %213
  %215 = vrot.lane.b32.xlu0 %v179, 104
  %v216 = vpop.permute.xlu0 %215
  %217 = vrot.lane.b32.xlu0 %v181, 104
  %v218 = vpop.permute.xlu0 %217
  %v223 = vpack.c.bf16 %v174, %v174
  %v224 = vpack.c.bf16 %v176, %v176
  %v225 = vpack.c.bf16 %v179, %v179
  %v226 = vpack.c.bf16 %v181, %v181
  %v227 = vpack.c.bf16 %v188, %v188
  %v228 = vpack.c.bf16 %v190, %v190
  %v229 = vpack.c.bf16 %v192, %v192
  %v230 = vpack.c.bf16 %v194, %v194
  %v231 = vpack.c.bf16 %v200, %v200
  %v232 = vpack.c.bf16 %v202, %v202
  %v233 = vpack.c.bf16 %v204, %v204
  %v234 = vpack.c.bf16 %v206, %v206
  %v235 = vpack.c.bf16 %v212, %v212
  %v236 = vpack.c.bf16 %v214, %v214
  %v237 = vpack.c.bf16 %v216, %v216
  %v238 = vpack.c.bf16 %v218, %v218
  %v241 = vunpack.c.l.b16 %v223
  %v242 = vunpack.c.l.b16 %v224
  %v243 = vpack.c.b16 %v242, %v241
  %244 = vrot.lane.b32.xlu0 %v243, 96
  %v245 = vpop.permute.xlu0 %244
  %vm246 = vcmask 64512
  %v248 = vsel %vm246, %v243, 0
  %v251 = vsel %vm246, %v245, 0
  %253 = vmatpush.bf16.xpose.msra.mxu0 0
  %254 = vmatpush.bf16.xpose.msra.mxu0 0
  %255 = vmatpush.bf16.xpose.msra.mxu0 0
  %256 = vmatpush.bf16.xpose.msra.mxu0 0
  %257 = vmatpush.bf16.xpose.msra.mxu0 0
  %258 = vmatpush.bf16.xpose.msra.mxu0 0
  %259 = vmatpush.bf16.xpose.msra.mxu0 0
  %260 = vmatpush.bf16.xpose.msra.mxu0 %v251
  %261 = vmatmul.bf16.gmra.mxu0 %v248
  %v262 = vpop.f32.mrf.mxu0
  %v263 = vadd.f32 %v135, %v262
  %v264 = vpop.f32.mrf.mxu0
  %v265 = vadd.f32 %v136, %v264
  %266 = vdwg.mxu0
  %v269 = vunpack.c.l.b16 %v225
  %v270 = vunpack.c.l.b16 %v226
  %v271 = vpack.c.b16 %v270, %v269
  %272 = vrot.lane.b32.xlu0 %v271, 96
  %v273 = vpop.permute.xlu0 %272
  %v275 = vsel %vm246, %v271, 0
  %v278 = vsel %vm246, %v273, 0
  %280 = vmatpush.bf16.xpose.msra.mxu0 0
  %281 = vmatpush.bf16.xpose.msra.mxu0 0
  %282 = vmatpush.bf16.xpose.msra.mxu0 0
  %283 = vmatpush.bf16.xpose.msra.mxu0 0
  %284 = vmatpush.bf16.xpose.msra.mxu0 0
  %285 = vmatpush.bf16.xpose.msra.mxu0 0
  %286 = vmatpush.bf16.xpose.msra.mxu0 0
  %287 = vmatpush.bf16.xpose.msra.mxu0 %v278
  %288 = vmatmul.bf16.gmra.mxu0 %v275
  %v289 = vpop.f32.mrf.mxu0
  %v290 = vadd.f32 %v135, %v289
  %v291 = vpop.f32.mrf.mxu0
  %v292 = vadd.f32 %v136, %v291
  %293 = vdwg.mxu0
  %v296 = vunpack.c.l.b16 %v227
  %v297 = vunpack.c.l.b16 %v228
  %v298 = vpack.c.b16 %v297, %v296
  %299 = vrot.lane.b32.xlu0 %v298, 96
  %v300 = vpop.permute.xlu0 %299
  %v302 = vsel %vm246, %v298, 0
  %v305 = vsel %vm246, %v300, 0
  %307 = vmatpush.bf16.xpose.msra.mxu0 0
  %308 = vmatpush.bf16.xpose.msra.mxu0 0
  %309 = vmatpush.bf16.xpose.msra.mxu0 0
  %310 = vmatpush.bf16.xpose.msra.mxu0 0
  %311 = vmatpush.bf16.xpose.msra.mxu0 0
  %312 = vmatpush.bf16.xpose.msra.mxu0 0
  %313 = vmatpush.bf16.xpose.msra.mxu0 0
  %314 = vmatpush.bf16.xpose.msra.mxu0 %v305
  %315 = vmatmul.bf16.gmra.mxu0 %v302
  %v316 = vpop.f32.mrf.mxu0
  %v317 = vadd.f32 %v135, %v316
  %v318 = vpop.f32.mrf.mxu0
  %v319 = vadd.f32 %v136, %v318
  %320 = vdwg.mxu0
  %v323 = vunpack.c.l.b16 %v229
  %v324 = vunpack.c.l.b16 %v230
  %v325 = vpack.c.b16 %v324, %v323
  %326 = vrot.lane.b32.xlu0 %v325, 96
  %v327 = vpop.permute.xlu0 %326
  %v329 = vsel %vm246, %v325, 0
  %v332 = vsel %vm246, %v327, 0
  %334 = vmatpush.bf16.xpose.msra.mxu0 0
  %335 = vmatpush.bf16.xpose.msra.mxu0 0
  %336 = vmatpush.bf16.xpose.msra.mxu0 0
  %337 = vmatpush.bf16.xpose.msra.mxu0 0
  %338 = vmatpush.bf16.xpose.msra.mxu0 0
  %339 = vmatpush.bf16.xpose.msra.mxu0 0
  %340 = vmatpush.bf16.xpose.msra.mxu0 0
  %341 = vmatpush.bf16.xpose.msra.mxu0 %v332
  %342 = vmatmul.bf16.gmra.mxu0 %v329
  %v343 = vpop.f32.mrf.mxu0
  %v344 = vadd.f32 %v135, %v343
  %v345 = vpop.f32.mrf.mxu0
  %v346 = vadd.f32 %v136, %v345
  %347 = vdwg.mxu0
  %v350 = vunpack.c.l.b16 %v231
  %v351 = vunpack.c.l.b16 %v232
  %v352 = vpack.c.b16 %v351, %v350
  %353 = vrot.lane.b32.xlu0 %v352, 96
  %v354 = vpop.permute.xlu0 %353
  %v356 = vsel %vm246, %v352, 0
  %v359 = vsel %vm246, %v354, 0
  %361 = vmatpush.bf16.xpose.msra.mxu0 0
  %362 = vmatpush.bf16.xpose.msra.mxu0 0
  %363 = vmatpush.bf16.xpose.msra.mxu0 0
  %364 = vmatpush.bf16.xpose.msra.mxu0 0
  %365 = vmatpush.bf16.xpose.msra.mxu0 0
  %366 = vmatpush.bf16.xpose.msra.mxu0 0
  %367 = vmatpush.bf16.xpose.msra.mxu0 0
  %368 = vmatpush.bf16.xpose.msra.mxu0 %v359
  %369 = vmatmul.bf16.gmra.mxu0 %v356
  %v370 = vpop.f32.mrf.mxu0
  %v371 = vadd.f32 %v135, %v370
  %v372 = vpop.f32.mrf.mxu0
  %v373 = vadd.f32 %v136, %v372
  %374 = vdwg.mxu0
  %v377 = vunpack.c.l.b16 %v233
  %v378 = vunpack.c.l.b16 %v234
  %v379 = vpack.c.b16 %v378, %v377
  %380 = vrot.lane.b32.xlu0 %v379, 96
  %v381 = vpop.permute.xlu0 %380
  %v383 = vsel %vm246, %v379, 0
  %v386 = vsel %vm246, %v381, 0
  %388 = vmatpush.bf16.xpose.msra.mxu0 0
  %389 = vmatpush.bf16.xpose.msra.mxu0 0
  %390 = vmatpush.bf16.xpose.msra.mxu0 0
  %391 = vmatpush.bf16.xpose.msra.mxu0 0
  %392 = vmatpush.bf16.xpose.msra.mxu0 0
  %393 = vmatpush.bf16.xpose.msra.mxu0 0
  %394 = vmatpush.bf16.xpose.msra.mxu0 0
  %395 = vmatpush.bf16.xpose.msra.mxu0 %v386
  %396 = vmatmul.bf16.gmra.mxu0 %v383
  %v397 = vpop.f32.mrf.mxu0
  %v398 = vadd.f32 %v135, %v397
  %v399 = vpop.f32.mrf.mxu0
  %v400 = vadd.f32 %v136, %v399
  %401 = vdwg.mxu0
  %v404 = vunpack.c.l.b16 %v235
  %v405 = vunpack.c.l.b16 %v236
  %v406 = vpack.c.b16 %v405, %v404
  %407 = vrot.lane.b32.xlu0 %v406, 96
  %v408 = vpop.permute.xlu0 %407
  %v410 = vsel %vm246, %v406, 0
  %v413 = vsel %vm246, %v408, 0
  %415 = vmatpush.bf16.xpose.msra.mxu0 0
  %416 = vmatpush.bf16.xpose.msra.mxu0 0
  %417 = vmatpush.bf16.xpose.msra.mxu0 0
  %418 = vmatpush.bf16.xpose.msra.mxu0 0
  %419 = vmatpush.bf16.xpose.msra.mxu0 0
  %420 = vmatpush.bf16.xpose.msra.mxu0 0
  %421 = vmatpush.bf16.xpose.msra.mxu0 0
  %422 = vmatpush.bf16.xpose.msra.mxu0 %v413
  %423 = vmatmul.bf16.gmra.mxu0 %v410
  %v424 = vpop.f32.mrf.mxu0
  %v425 = vadd.f32 %v135, %v424
  %v426 = vpop.f32.mrf.mxu0
  %v427 = vadd.f32 %v136, %v426
  %428 = vdwg.mxu0
  %v431 = vunpack.c.l.b16 %v237
  %v432 = vunpack.c.l.b16 %v238
  %v433 = vpack.c.b16 %v432, %v431
  %434 = vrot.lane.b32.xlu0 %v433, 96
  %v435 = vpop.permute.xlu0 %434
  %v437 = vsel %vm246, %v433, 0
  %v440 = vsel %vm246, %v435, 0
  %442 = vmatpush.bf16.xpose.msra.mxu0 0
  %443 = vmatpush.bf16.xpose.msra.mxu0 0
  %444 = vmatpush.bf16.xpose.msra.mxu0 0
  %445 = vmatpush.bf16.xpose.msra.mxu0 0
  %446 = vmatpush.bf16.xpose.msra.mxu0 0
  %447 = vmatpush.bf16.xpose.msra.mxu0 0
  %448 = vmatpush.bf16.xpose.msra.mxu0 0
  %449 = vmatpush.bf16.xpose.msra.mxu0 %v440
  %450 = vmatmul.bf16.gmra.mxu0 %v437
  %v451 = vpop.f32.mrf.mxu0
  %v452 = vadd.f32 %v135, %v451
  %v453 = vpop.f32.mrf.mxu0
  %v454 = vadd.f32 %v136, %v453
  %455 = vdwg.mxu0
  %vm456 = vcmask 130048
  %v457 = vsel %vm456, %v263, -inf
  %458 = vmax.xlane.f32.xlu0 %v457
  %v459 = vpop.xlane.xlu0 %458
  %v460 = vsel %vm456, %v265, -inf
  %461 = vmax.xlane.f32.xlu0 %v460
  %v462 = vpop.xlane.xlu0 %461
  %v463 = vsel %vm456, %v290, -inf
  %464 = vmax.xlane.f32.xlu0 %v463
  %v465 = vpop.xlane.xlu0 %464
  %v466 = vsel %vm456, %v292, -inf
  %467 = vmax.xlane.f32.xlu0 %v466
  %v468 = vpop.xlane.xlu0 %467
  %v469 = vsel %vm456, %v317, -inf
  %470 = vmax.xlane.f32.xlu0 %v469
  %v471 = vpop.xlane.xlu0 %470
  %v472 = vsel %vm456, %v319, -inf
  %473 = vmax.xlane.f32.xlu0 %v472
  %v474 = vpop.xlane.xlu0 %473
  %v475 = vsel %vm456, %v344, -inf
  %476 = vmax.xlane.f32.xlu0 %v475
  %v477 = vpop.xlane.xlu0 %476
  %v478 = vsel %vm456, %v346, -inf
  %479 = vmax.xlane.f32.xlu0 %v478
  %v480 = vpop.xlane.xlu0 %479
  %v481 = vsel %vm456, %v371, -inf
  %482 = vmax.xlane.f32.xlu0 %v481
  %v483 = vpop.xlane.xlu0 %482
  %v484 = vsel %vm456, %v373, -inf
  %485 = vmax.xlane.f32.xlu0 %v484
  %v486 = vpop.xlane.xlu0 %485
  %v487 = vsel %vm456, %v398, -inf
  %488 = vmax.xlane.f32.xlu0 %v487
  %v489 = vpop.xlane.xlu0 %488
  %v490 = vsel %vm456, %v400, -inf
  %491 = vmax.xlane.f32.xlu0 %v490
  %v492 = vpop.xlane.xlu0 %491
  %v493 = vsel %vm456, %v425, -inf
  %494 = vmax.xlane.f32.xlu0 %v493
  %v495 = vpop.xlane.xlu0 %494
  %v496 = vsel %vm456, %v427, -inf
  %497 = vmax.xlane.f32.xlu0 %v496
  %v498 = vpop.xlane.xlu0 %497
  %v499 = vsel %vm456, %v452, -inf
  %500 = vmax.xlane.f32.xlu0 %v499
  %v501 = vpop.xlane.xlu0 %500
  %v502 = vsel %vm456, %v454, -inf
  %503 = vmax.xlane.f32.xlu0 %v502
  %v504 = vpop.xlane.xlu0 %503
  %v505 = vsub.f32 %v263, %v459
  %v506 = vsub.f32 %v265, %v462
  %v507 = vsub.f32 %v290, %v465
  %v508 = vsub.f32 %v292, %v468
  %v509 = vsub.f32 %v317, %v471
  %v510 = vsub.f32 %v319, %v474
  %v511 = vsub.f32 %v344, %v477
  %v512 = vsub.f32 %v346, %v480
  %v513 = vsub.f32 %v371, %v483
  %v514 = vsub.f32 %v373, %v486
  %v515 = vsub.f32 %v398, %v489
  %v516 = vsub.f32 %v400, %v492
  %v517 = vsub.f32 %v425, %v495
  %v518 = vsub.f32 %v427, %v498
  %v519 = vsub.f32 %v452, %v501
  %v520 = vsub.f32 %v454, %v504
  %v521 = vmul.f32 %v505, 1.442695
  %v522 = vpow.pop %v521
  %v523 = vmul.f32 %v506, 1.442695
  %v524 = vpow.pop %v523
  %v525 = vmul.f32 %v507, 1.442695
  %v526 = vpow.pop %v525
  %v527 = vmul.f32 %v508, 1.442695
  %v528 = vpow.pop %v527
  %v529 = vmul.f32 %v509, 1.442695
  %v530 = vpow.pop %v529
  %v531 = vmul.f32 %v510, 1.442695
  %v532 = vpow.pop %v531
  %v533 = vmul.f32 %v511, 1.442695
  %v534 = vpow.pop %v533
  %v535 = vmul.f32 %v512, 1.442695
  %v536 = vpow.pop %v535
  %v537 = vmul.f32 %v513, 1.442695
  %v538 = vpow.pop %v537
  %v539 = vmul.f32 %v514, 1.442695
  %v540 = vpow.pop %v539
  %v541 = vmul.f32 %v515, 1.442695
  %v542 = vpow.pop %v541
  %v543 = vmul.f32 %v516, 1.442695
  %v544 = vpow.pop %v543
  %v545 = vmul.f32 %v517, 1.442695
  %v546 = vpow.pop %v545
  %v547 = vmul.f32 %v518, 1.442695
  %v548 = vpow.pop %v547
  %v549 = vmul.f32 %v519, 1.442695
  %v550 = vpow.pop %v549
  %v551 = vmul.f32 %v520, 1.442695
  %v552 = vpow.pop %v551
  %v553 = vsel %vm456, %v522, 0.0
  %554 = vadd.xlane.f32.xlu0 %v553
  %v555 = vpop.xlane.xlu0 %554
  %v556 = vsel %vm456, %v524, 0.0
  %557 = vadd.xlane.f32.xlu0 %v556
  %v558 = vpop.xlane.xlu0 %557
  %v559 = vsel %vm456, %v526, 0.0
  %560 = vadd.xlane.f32.xlu0 %v559
  %v561 = vpop.xlane.xlu0 %560
  %v562 = vsel %vm456, %v528, 0.0
  %563 = vadd.xlane.f32.xlu0 %v562
  %v564 = vpop.xlane.xlu0 %563
  %v565 = vsel %vm456, %v530, 0.0
  %566 = vadd.xlane.f32.xlu0 %v565
  %v567 = vpop.xlane.xlu0 %566
  %v568 = vsel %vm456, %v532, 0.0
  %569 = vadd.xlane.f32.xlu0 %v568
  %v570 = vpop.xlane.xlu0 %569
  %v571 = vsel %vm456, %v534, 0.0
  %572 = vadd.xlane.f32.xlu0 %v571
  %v573 = vpop.xlane.xlu0 %572
  %v574 = vsel %vm456, %v536, 0.0
  %575 = vadd.xlane.f32.xlu0 %v574
  %v576 = vpop.xlane.xlu0 %575
  %v577 = vsel %vm456, %v538, 0.0
  %578 = vadd.xlane.f32.xlu0 %v577
  %v579 = vpop.xlane.xlu0 %578
  %v580 = vsel %vm456, %v540, 0.0
  %581 = vadd.xlane.f32.xlu0 %v580
  %v582 = vpop.xlane.xlu0 %581
  %v583 = vsel %vm456, %v542, 0.0
  %584 = vadd.xlane.f32.xlu0 %v583
  %v585 = vpop.xlane.xlu0 %584
  %v586 = vsel %vm456, %v544, 0.0
  %587 = vadd.xlane.f32.xlu0 %v586
  %v588 = vpop.xlane.xlu0 %587
  %v589 = vsel %vm456, %v546, 0.0
  %590 = vadd.xlane.f32.xlu0 %v589
  %v591 = vpop.xlane.xlu0 %590
  %v592 = vsel %vm456, %v548, 0.0
  %593 = vadd.xlane.f32.xlu0 %v592
  %v594 = vpop.xlane.xlu0 %593
  %v595 = vsel %vm456, %v550, 0.0
  %596 = vadd.xlane.f32.xlu0 %v595
  %v597 = vpop.xlane.xlu0 %596
  %v598 = vsel %vm456, %v552, 0.0
  %599 = vadd.xlane.f32.xlu0 %v598
  %v600 = vpop.xlane.xlu0 %599
  %v601 = vrcp.pop %v555
  %v602 = vmul.f32 %v555, %v601
  %v603 = vsub.f32 1.0, %v602
  %v604 = vmul.f32 %v601, %v603
  %v605 = vadd.f32 %v601, %v604
  %vm606 = vweird.f32 %v555
  %vm607 = vweird.f32 %v601
  %vm608 = vmor %vm606, %vm607
  %v609 = vsel %vm608, %v601, %v605
  %v610 = vand.u32 2147483647, %v555
  %vm611 = vcmp.eq.f32.partialorder %v610, 8.507059e+37
  %v612 = vand.u32 %v555, 2147483648
  %v613 = vor.u32 1.1754944e-38, %v612
  %v614 = vsel %vm611, %v613, %v609
  %v615 = vmul.f32 %v522, %v614
  %v616 = vrcp.pop %v558
  %v617 = vmul.f32 %v558, %v616
  %v618 = vsub.f32 1.0, %v617
  %v619 = vmul.f32 %v616, %v618
  %v620 = vadd.f32 %v616, %v619
  %vm621 = vweird.f32 %v558
  %vm622 = vweird.f32 %v616
  %vm623 = vmor %vm621, %vm622
  %v624 = vsel %vm623, %v616, %v620
  %v625 = vand.u32 2147483647, %v558
  %vm626 = vcmp.eq.f32.partialorder %v625, 8.507059e+37
  %v627 = vand.u32 %v558, 2147483648
  %v628 = vor.u32 1.1754944e-38, %v627
  %v629 = vsel %vm626, %v628, %v624
  %v630 = vmul.f32 %v524, %v629
  %v631 = vrcp.pop %v561
  %v632 = vmul.f32 %v561, %v631
  %v633 = vsub.f32 1.0, %v632
  %v634 = vmul.f32 %v631, %v633
  %v635 = vadd.f32 %v631, %v634
  %vm636 = vweird.f32 %v561
  %vm637 = vweird.f32 %v631
  %vm638 = vmor %vm636, %vm637
  %v639 = vsel %vm638, %v631, %v635
  %v640 = vand.u32 2147483647, %v561
  %vm641 = vcmp.eq.f32.partialorder %v640, 8.507059e+37
  %v642 = vand.u32 %v561, 2147483648
  %v643 = vor.u32 1.1754944e-38, %v642
  %v644 = vsel %vm641, %v643, %v639
  %v645 = vmul.f32 %v526, %v644
  %v646 = vrcp.pop %v564
  %v647 = vmul.f32 %v564, %v646
  %v648 = vsub.f32 1.0, %v647
  %v649 = vmul.f32 %v646, %v648
  %v650 = vadd.f32 %v646, %v649
  %vm651 = vweird.f32 %v564
  %vm652 = vweird.f32 %v646
  %vm653 = vmor %vm651, %vm652
  %v654 = vsel %vm653, %v646, %v650
  %v655 = vand.u32 2147483647, %v564
  %vm656 = vcmp.eq.f32.partialorder %v655, 8.507059e+37
  %v657 = vand.u32 %v564, 2147483648
  %v658 = vor.u32 1.1754944e-38, %v657
  %v659 = vsel %vm656, %v658, %v654
  %v660 = vmul.f32 %v528, %v659
  %v661 = vrcp.pop %v567
  %v662 = vmul.f32 %v567, %v661
  %v663 = vsub.f32 1.0, %v662
  %v664 = vmul.f32 %v661, %v663
  %v665 = vadd.f32 %v661, %v664
  %vm666 = vweird.f32 %v567
  %vm667 = vweird.f32 %v661
  %vm668 = vmor %vm666, %vm667
  %v669 = vsel %vm668, %v661, %v665
  %v670 = vand.u32 2147483647, %v567
  %vm671 = vcmp.eq.f32.partialorder %v670, 8.507059e+37
  %v672 = vand.u32 %v567, 2147483648
  %v673 = vor.u32 1.1754944e-38, %v672
  %v674 = vsel %vm671, %v673, %v669
  %v675 = vmul.f32 %v530, %v674
  %v676 = vrcp.pop %v570
  %v677 = vmul.f32 %v570, %v676
  %v678 = vsub.f32 1.0, %v677
  %v679 = vmul.f32 %v676, %v678
  %v680 = vadd.f32 %v676, %v679
  %vm681 = vweird.f32 %v570
  %vm682 = vweird.f32 %v676
  %vm683 = vmor %vm681, %vm682
  %v684 = vsel %vm683, %v676, %v680
  %v685 = vand.u32 2147483647, %v570
  %vm686 = vcmp.eq.f32.partialorder %v685, 8.507059e+37
  %v687 = vand.u32 %v570, 2147483648
  %v688 = vor.u32 1.1754944e-38, %v687
  %v689 = vsel %vm686, %v688, %v684
  %v690 = vmul.f32 %v532, %v689
  %v691 = vrcp.pop %v573
  %v692 = vmul.f32 %v573, %v691
  %v693 = vsub.f32 1.0, %v692
  %v694 = vmul.f32 %v691, %v693
  %v695 = vadd.f32 %v691, %v694
  %vm696 = vweird.f32 %v573
  %vm697 = vweird.f32 %v691
  %vm698 = vmor %vm696, %vm697
  %v699 = vsel %vm698, %v691, %v695
  %v700 = vand.u32 2147483647, %v573
  %vm701 = vcmp.eq.f32.partialorder %v700, 8.507059e+37
  %v702 = vand.u32 %v573, 2147483648
  %v703 = vor.u32 1.1754944e-38, %v702
  %v704 = vsel %vm701, %v703, %v699
  %v705 = vmul.f32 %v534, %v704
  %v706 = vrcp.pop %v576
  %v707 = vmul.f32 %v576, %v706
  %v708 = vsub.f32 1.0, %v707
  %v709 = vmul.f32 %v706, %v708
  %v710 = vadd.f32 %v706, %v709
  %vm711 = vweird.f32 %v576
  %vm712 = vweird.f32 %v706
  %vm713 = vmor %vm711, %vm712
  %v714 = vsel %vm713, %v706, %v710
  %v715 = vand.u32 2147483647, %v576
  %vm716 = vcmp.eq.f32.partialorder %v715, 8.507059e+37
  %v717 = vand.u32 %v576, 2147483648
  %v718 = vor.u32 1.1754944e-38, %v717
  %v719 = vsel %vm716, %v718, %v714
  %v720 = vmul.f32 %v536, %v719
  %v721 = vrcp.pop %v579
  %v722 = vmul.f32 %v579, %v721
  %v723 = vsub.f32 1.0, %v722
  %v724 = vmul.f32 %v721, %v723
  %v725 = vadd.f32 %v721, %v724
  %vm726 = vweird.f32 %v579
  %vm727 = vweird.f32 %v721
  %vm728 = vmor %vm726, %vm727
  %v729 = vsel %vm728, %v721, %v725
  %v730 = vand.u32 2147483647, %v579
  %vm731 = vcmp.eq.f32.partialorder %v730, 8.507059e+37
  %v732 = vand.u32 %v579, 2147483648
  %v733 = vor.u32 1.1754944e-38, %v732
  %v734 = vsel %vm731, %v733, %v729
  %v735 = vmul.f32 %v538, %v734
  %v736 = vrcp.pop %v582
  %v737 = vmul.f32 %v582, %v736
  %v738 = vsub.f32 1.0, %v737
  %v739 = vmul.f32 %v736, %v738
  %v740 = vadd.f32 %v736, %v739
  %vm741 = vweird.f32 %v582
  %vm742 = vweird.f32 %v736
  %vm743 = vmor %vm741, %vm742
  %v744 = vsel %vm743, %v736, %v740
  %v745 = vand.u32 2147483647, %v582
  %vm746 = vcmp.eq.f32.partialorder %v745, 8.507059e+37
  %v747 = vand.u32 %v582, 2147483648
  %v748 = vor.u32 1.1754944e-38, %v747
  %v749 = vsel %vm746, %v748, %v744
  %v750 = vmul.f32 %v540, %v749
  %v751 = vrcp.pop %v585
  %v752 = vmul.f32 %v585, %v751
  %v753 = vsub.f32 1.0, %v752
  %v754 = vmul.f32 %v751, %v753
  %v755 = vadd.f32 %v751, %v754
  %vm756 = vweird.f32 %v585
  %vm757 = vweird.f32 %v751
  %vm758 = vmor %vm756, %vm757
  %v759 = vsel %vm758, %v751, %v755
  %v760 = vand.u32 2147483647, %v585
  %vm761 = vcmp.eq.f32.partialorder %v760, 8.507059e+37
  %v762 = vand.u32 %v585, 2147483648
  %v763 = vor.u32 1.1754944e-38, %v762
  %v764 = vsel %vm761, %v763, %v759
  %v765 = vmul.f32 %v542, %v764
  %v766 = vrcp.pop %v588
  %v767 = vmul.f32 %v588, %v766
  %v768 = vsub.f32 1.0, %v767
  %v769 = vmul.f32 %v766, %v768
  %v770 = vadd.f32 %v766, %v769
  %vm771 = vweird.f32 %v588
  %vm772 = vweird.f32 %v766
  %vm773 = vmor %vm771, %vm772
  %v774 = vsel %vm773, %v766, %v770
  %v775 = vand.u32 2147483647, %v588
  %vm776 = vcmp.eq.f32.partialorder %v775, 8.507059e+37
  %v777 = vand.u32 %v588, 2147483648
  %v778 = vor.u32 1.1754944e-38, %v777
  %v779 = vsel %vm776, %v778, %v774
  %v780 = vmul.f32 %v544, %v779
  %v781 = vrcp.pop %v591
  %v782 = vmul.f32 %v591, %v781
  %v783 = vsub.f32 1.0, %v782
  %v784 = vmul.f32 %v781, %v783
  %v785 = vadd.f32 %v781, %v784
  %vm786 = vweird.f32 %v591
  %vm787 = vweird.f32 %v781
  %vm788 = vmor %vm786, %vm787
  %v789 = vsel %vm788, %v781, %v785
  %v790 = vand.u32 2147483647, %v591
  %vm791 = vcmp.eq.f32.partialorder %v790, 8.507059e+37
  %v792 = vand.u32 %v591, 2147483648
  %v793 = vor.u32 1.1754944e-38, %v792
  %v794 = vsel %vm791, %v793, %v789
  %v795 = vmul.f32 %v546, %v794
  %v796 = vrcp.pop %v594
  %v797 = vmul.f32 %v594, %v796
  %v798 = vsub.f32 1.0, %v797
  %v799 = vmul.f32 %v796, %v798
  %v800 = vadd.f32 %v796, %v799
  %vm801 = vweird.f32 %v594
  %vm802 = vweird.f32 %v796
  %vm803 = vmor %vm801, %vm802
  %v804 = vsel %vm803, %v796, %v800
  %v805 = vand.u32 2147483647, %v594
  %vm806 = vcmp.eq.f32.partialorder %v805, 8.507059e+37
  %v807 = vand.u32 %v594, 2147483648
  %v808 = vor.u32 1.1754944e-38, %v807
  %v809 = vsel %vm806, %v808, %v804
  %v810 = vmul.f32 %v548, %v809
  %v811 = vrcp.pop %v597
  %v812 = vmul.f32 %v597, %v811
  %v813 = vsub.f32 1.0, %v812
  %v814 = vmul.f32 %v811, %v813
  %v815 = vadd.f32 %v811, %v814
  %vm816 = vweird.f32 %v597
  %vm817 = vweird.f32 %v811
  %vm818 = vmor %vm816, %vm817
  %v819 = vsel %vm818, %v811, %v815
  %v820 = vand.u32 2147483647, %v597
  %vm821 = vcmp.eq.f32.partialorder %v820, 8.507059e+37
  %v822 = vand.u32 %v597, 2147483648
  %v823 = vor.u32 1.1754944e-38, %v822
  %v824 = vsel %vm821, %v823, %v819
  %v825 = vmul.f32 %v550, %v824
  %v826 = vrcp.pop %v600
  %v827 = vmul.f32 %v600, %v826
  %v828 = vsub.f32 1.0, %v827
  %v829 = vmul.f32 %v826, %v828
  %v830 = vadd.f32 %v826, %v829
  %vm831 = vweird.f32 %v600
  %vm832 = vweird.f32 %v826
  %vm833 = vmor %vm831, %vm832
  %v834 = vsel %vm833, %v826, %v830
  %v835 = vand.u32 2147483647, %v600
  %vm836 = vcmp.eq.f32.partialorder %v835, 8.507059e+37
  %v837 = vand.u32 %v600, 2147483648
  %v838 = vor.u32 1.1754944e-38, %v837
  %v839 = vsel %vm836, %v838, %v834
  %v840 = vmul.f32 %v552, %v839
  %v841 = vpack.c.bf16 %v615, %v615
  %v842 = vpack.c.bf16 %v630, %v630
  %v843 = vpack.c.bf16 %v645, %v645
  %v844 = vpack.c.bf16 %v660, %v660
  %v845 = vpack.c.bf16 %v675, %v675
  %v846 = vpack.c.bf16 %v690, %v690
  %v847 = vpack.c.bf16 %v705, %v705
  %v848 = vpack.c.bf16 %v720, %v720
  %v849 = vpack.c.bf16 %v735, %v735
  %v850 = vpack.c.bf16 %v750, %v750
  %v851 = vpack.c.bf16 %v765, %v765
  %v852 = vpack.c.bf16 %v780, %v780
  %v853 = vpack.c.bf16 %v795, %v795
  %v854 = vpack.c.bf16 %v810, %v810
  %v855 = vpack.c.bf16 %v825, %v825
  %v856 = vpack.c.bf16 %v840, %v840
  %v859 = vunpack.c.l.b16 %v841
  %v860 = vunpack.c.l.b16 %v842
  %v861 = vpack.c.b16 %v860, %v859
  %862 = vrot.lane.b32.xlu0 %v243, 64
  %v863 = vpop.permute.xlu0 %862
  %v866 = vsel %vm456, %v861, 0
  %868 = vmatpush.bf16.msra.mxu0 0
  %869 = vmatpush.bf16.msra.mxu0 0
  %870 = vmatpush.bf16.msra.mxu0 0
  %871 = vmatpush.bf16.msra.mxu0 0
  %872 = vmatpush.bf16.msra.mxu0 0
  %873 = vmatpush.bf16.msra.mxu0 0
  %874 = vmatpush.bf16.msra.mxu0 0
  %875 = vmatpush.bf16.msra.mxu0 %v863
  %876 = vmatmul.bf16.gmra.mxu0 %v866
  %v877 = vpop.f32.mrf.mxu0
  %v878 = vadd.f32 0.0, %v877
  %v879 = vpop.f32.mrf.mxu0
  %v880 = vadd.f32 0.0, %v879
  %881 = vdwg.mxu0
  %v884 = vunpack.c.l.b16 %v843
  %v885 = vunpack.c.l.b16 %v844
  %v886 = vpack.c.b16 %v885, %v884
  %887 = vrot.lane.b32.xlu0 %v271, 64
  %v888 = vpop.permute.xlu0 %887
  %v891 = vsel %vm456, %v886, 0
  %893 = vmatpush.bf16.msra.mxu0 0
  %894 = vmatpush.bf16.msra.mxu0 0
  %895 = vmatpush.bf16.msra.mxu0 0
  %896 = vmatpush.bf16.msra.mxu0 0
  %897 = vmatpush.bf16.msra.mxu0 0
  %898 = vmatpush.bf16.msra.mxu0 0
  %899 = vmatpush.bf16.msra.mxu0 0
  %900 = vmatpush.bf16.msra.mxu0 %v888
  %901 = vmatmul.bf16.gmra.mxu0 %v891
  %v902 = vpop.f32.mrf.mxu0
  %v903 = vadd.f32 0.0, %v902
  %v904 = vpop.f32.mrf.mxu0
  %v905 = vadd.f32 0.0, %v904
  %906 = vdwg.mxu0
  %v909 = vunpack.c.l.b16 %v845
  %v910 = vunpack.c.l.b16 %v846
  %v911 = vpack.c.b16 %v910, %v909
  %912 = vrot.lane.b32.xlu0 %v298, 64
  %v913 = vpop.permute.xlu0 %912
  %v916 = vsel %vm456, %v911, 0
  %918 = vmatpush.bf16.msra.mxu0 0
  %919 = vmatpush.bf16.msra.mxu0 0
  %920 = vmatpush.bf16.msra.mxu0 0
  %921 = vmatpush.bf16.msra.mxu0 0
  %922 = vmatpush.bf16.msra.mxu0 0
  %923 = vmatpush.bf16.msra.mxu0 0
  %924 = vmatpush.bf16.msra.mxu0 0
  %925 = vmatpush.bf16.msra.mxu0 %v913
  %926 = vmatmul.bf16.gmra.mxu0 %v916
  %v927 = vpop.f32.mrf.mxu0
  %v928 = vadd.f32 0.0, %v927
  %v929 = vpop.f32.mrf.mxu0
  %v930 = vadd.f32 0.0, %v929
  %931 = vdwg.mxu0
  %v934 = vunpack.c.l.b16 %v847
  %v935 = vunpack.c.l.b16 %v848
  %v936 = vpack.c.b16 %v935, %v934
  %937 = vrot.lane.b32.xlu0 %v325, 64
  %v938 = vpop.permute.xlu0 %937
  %v941 = vsel %vm456, %v936, 0
  %943 = vmatpush.bf16.msra.mxu0 0
  %944 = vmatpush.bf16.msra.mxu0 0
  %945 = vmatpush.bf16.msra.mxu0 0
  %946 = vmatpush.bf16.msra.mxu0 0
  %947 = vmatpush.bf16.msra.mxu0 0
  %948 = vmatpush.bf16.msra.mxu0 0
  %949 = vmatpush.bf16.msra.mxu0 0
  %950 = vmatpush.bf16.msra.mxu0 %v938
  %951 = vmatmul.bf16.gmra.mxu0 %v941
  %v952 = vpop.f32.mrf.mxu0
  %v953 = vadd.f32 0.0, %v952
  %v954 = vpop.f32.mrf.mxu0
  %v955 = vadd.f32 0.0, %v954
  %956 = vdwg.mxu0
  %v959 = vunpack.c.l.b16 %v849
  %v960 = vunpack.c.l.b16 %v850
  %v961 = vpack.c.b16 %v960, %v959
  %962 = vrot.lane.b32.xlu0 %v352, 64
  %v963 = vpop.permute.xlu0 %962
  %v966 = vsel %vm456, %v961, 0
  %968 = vmatpush.bf16.msra.mxu0 0
  %969 = vmatpush.bf16.msra.mxu0 0
  %970 = vmatpush.bf16.msra.mxu0 0
  %971 = vmatpush.bf16.msra.mxu0 0
  %972 = vmatpush.bf16.msra.mxu0 0
  %973 = vmatpush.bf16.msra.mxu0 0
  %974 = vmatpush.bf16.msra.mxu0 0
  %975 = vmatpush.bf16.msra.mxu0 %v963
  %976 = vmatmul.bf16.gmra.mxu0 %v966
  %v977 = vpop.f32.mrf.mxu0
  %v978 = vadd.f32 0.0, %v977
  %v979 = vpop.f32.mrf.mxu0
  %v980 = vadd.f32 0.0, %v979
  %981 = vdwg.mxu0
  %v984 = vunpack.c.l.b16 %v851
  %v985 = vunpack.c.l.b16 %v852
  %v986 = vpack.c.b16 %v985, %v984
  %987 = vrot.lane.b32.xlu0 %v379, 64
  %v988 = vpop.permute.xlu0 %987
  %v991 = vsel %vm456, %v986, 0
  %993 = vmatpush.bf16.msra.mxu0 0
  %994 = vmatpush.bf16.msra.mxu0 0
  %995 = vmatpush.bf16.msra.mxu0 0
  %996 = vmatpush.bf16.msra.mxu0 0
  %997 = vmatpush.bf16.msra.mxu0 0
  %998 = vmatpush.bf16.msra.mxu0 0
  %999 = vmatpush.bf16.msra.mxu0 0
  %1000 = vmatpush.bf16.msra.mxu0 %v988
  %1001 = vmatmul.bf16.gmra.mxu0 %v991
  %v1002 = vpop.f32.mrf.mxu0
  %v1003 = vadd.f32 0.0, %v1002
  %v1004 = vpop.f32.mrf.mxu0
  %v1005 = vadd.f32 0.0, %v1004
  %1006 = vdwg.mxu0
  %v1009 = vunpack.c.l.b16 %v853
  %v1010 = vunpack.c.l.b16 %v854
  %v1011 = vpack.c.b16 %v1010, %v1009
  %1012 = vrot.lane.b32.xlu0 %v406, 64
  %v1013 = vpop.permute.xlu0 %1012
  %v1016 = vsel %vm456, %v1011, 0
  %1018 = vmatpush.bf16.msra.mxu0 0
  %1019 = vmatpush.bf16.msra.mxu0 0
  %1020 = vmatpush.bf16.msra.mxu0 0
  %1021 = vmatpush.bf16.msra.mxu0 0
  %1022 = vmatpush.bf16.msra.mxu0 0
  %1023 = vmatpush.bf16.msra.mxu0 0
  %1024 = vmatpush.bf16.msra.mxu0 0
  %1025 = vmatpush.bf16.msra.mxu0 %v1013
  %1026 = vmatmul.bf16.gmra.mxu0 %v1016
  %v1027 = vpop.f32.mrf.mxu0
  %v1028 = vadd.f32 0.0, %v1027
  %v1029 = vpop.f32.mrf.mxu0
  %v1030 = vadd.f32 0.0, %v1029
  %1031 = vdwg.mxu0
  %v1034 = vunpack.c.l.b16 %v855
  %v1035 = vunpack.c.l.b16 %v856
  %v1036 = vpack.c.b16 %v1035, %v1034
  %1037 = vrot.lane.b32.xlu0 %v433, 64
  %v1038 = vpop.permute.xlu0 %1037
  %v1041 = vsel %vm456, %v1036, 0
  %1043 = vmatpush.bf16.msra.mxu0 0
  %1044 = vmatpush.bf16.msra.mxu0 0
  %1045 = vmatpush.bf16.msra.mxu0 0
  %1046 = vmatpush.bf16.msra.mxu0 0
  %1047 = vmatpush.bf16.msra.mxu0 0
  %1048 = vmatpush.bf16.msra.mxu0 0
  %1049 = vmatpush.bf16.msra.mxu0 0
  %1050 = vmatpush.bf16.msra.mxu0 %v1038
  %1051 = vmatmul.bf16.gmra.mxu0 %v1041
  %v1052 = vpop.f32.mrf.mxu0
  %v1053 = vadd.f32 0.0, %v1052
  %v1054 = vpop.f32.mrf.mxu0
  %v1055 = vadd.f32 0.0, %v1054
  %1056 = vdwg.mxu0
  %1061 = vrot.lane.b32.xlu0 %v928, 8
  %v1062 = vpop.permute.xlu0 %1061
  %1063 = vrot.lane.b32.xlu0 %v930, 8
  %v1064 = vpop.permute.xlu0 %1063
  %1065 = vrot.lane.b32.xlu0 %v953, 8
  %v1066 = vpop.permute.xlu0 %1065
  %1067 = vrot.lane.b32.xlu0 %v955, 8
  %v1068 = vpop.permute.xlu0 %1067
  %1077 = vrot.lane.b32.xlu0 %v978, 16
  %v1078 = vpop.permute.xlu0 %1077
  %1079 = vrot.lane.b32.xlu0 %v980, 16
  %v1080 = vpop.permute.xlu0 %1079
  %1081 = vrot.lane.b32.xlu0 %v1003, 16
  %v1082 = vpop.permute.xlu0 %1081
  %1083 = vrot.lane.b32.xlu0 %v1005, 16
  %v1084 = vpop.permute.xlu0 %1083
  %1093 = vrot.lane.b32.xlu0 %v1028, 24
  %v1094 = vpop.permute.xlu0 %1093
  %1095 = vrot.lane.b32.xlu0 %v1030, 24
  %v1096 = vpop.permute.xlu0 %1095
  %1097 = vrot.lane.b32.xlu0 %v1053, 24
  %v1098 = vpop.permute.xlu0 %1097
  %1099 = vrot.lane.b32.xlu0 %v1055, 24
  %v1100 = vpop.permute.xlu0 %1099
  %v1105 = vsel %vm246, %v878, %v1062
  %v1106 = vsel %vm246, %v880, %v1064
  %v1107 = vsel %vm246, %v903, %v1066
  %v1108 = vsel %vm246, %v905, %v1068
  %v1109 = vsel %vm456, %v1105, %v1078
  %v1110 = vsel %vm456, %v1106, %v1080
  %v1111 = vsel %vm456, %v1107, %v1082
  %v1112 = vsel %vm456, %v1108, %v1084
  %vm1113 = vcmask 195584
  %v1114 = vsel %vm1113, %v1109, %v1094
  %v1115 = vsel %vm1113, %v1110, %v1096
  %v1116 = vsel %vm1113, %v1111, %v1098
  %v1117 = vsel %vm1113, %v1112, %v1100
  %v1118 = vpack.c.bf16 %v1115, %v1114
  %v1119 = vpack.c.bf16 %v1117, %v1116
  %v1120 = vperm.slane %v141, 1
  %1121 = vrot.lane.b32.xlu0 %v153, 32
  %v1122 = vpop.permute.xlu0 %1121
  %1123 = vrot.lane.b32.xlu0 %v154, 32
  %v1124 = vpop.permute.xlu0 %1123
  %v1128 = vsel %vm157, %v1118, 0
  %v1131 = vsel %vm157, %v1119, 0
  %1133 = vmatpush.bf16.msra.mxu0 0
  %1134 = vmatpush.bf16.msra.mxu0 0
  %1135 = vmatpush.bf16.msra.mxu0 0
  %1136 = vmatpush.bf16.msra.mxu0 0
  %1137 = vmatpush.bf16.msra.mxu0 0
  %1138 = vmatpush.bf16.msra.mxu0 0
  %1139 = vmatpush.bf16.msra.mxu0 %v1124
  %1140 = vmatpush.bf16.msra.mxu0 %v1122
  %1141 = vmatmul.bf16.gmra.mxu0 %v1128
  %v1142 = vpop.f32.mrf.mxu0
  %v1143 = vadd.f32 %v1120, %v1142
  %v1144 = vpop.f32.mrf.mxu0
  %v1145 = vadd.f32 %v1120, %v1144
  %1146 = vmatmul.bf16.gmra.mxu0 %v1131
  %v1147 = vpop.f32.mrf.mxu0
  %v1148 = vadd.f32 %v1120, %v1147
  %v1149 = vpop.f32.mrf.mxu0
  %v1150 = vadd.f32 %v1120, %v1149
  %1151 = vdwg.mxu0
  %v1152 = vadd.f32 %v126, %v1143
  %v1153 = vadd.f32 %v127, %v1145
  %v1154 = vadd.f32 %v128, %v1148
  %v1155 = vadd.f32 %v129, %v1150
  %v1156 = vsel %vm157, %v1152, 0.0
  %1157 = vadd.xlane.f32.xlu0 %v1156
  %v1158 = vpop.xlane.xlu0 %1157
  %v1159 = vsel %vm157, %v1153, 0.0
  %1160 = vadd.xlane.f32.xlu0 %v1159
  %v1161 = vpop.xlane.xlu0 %1160
  %v1162 = vsel %vm157, %v1154, 0.0
  %1163 = vadd.xlane.f32.xlu0 %v1162
  %v1164 = vpop.xlane.xlu0 %1163
  %v1165 = vsel %vm157, %v1155, 0.0
  %1166 = vadd.xlane.f32.xlu0 %v1165
  %v1167 = vpop.xlane.xlu0 %1166
  %v1168 = vrcp.pop 32.0
  %v1169 = vmul.f32 32.0, %v1168
  %v1170 = vsub.f32 1.0, %v1169
  %v1171 = vmul.f32 %v1168, %v1170
  %v1172 = vadd.f32 %v1168, %v1171
  %vm1173 = vweird.f32 %v1168
  %v1174 = vsel %vm1173, %v1168, %v1172
  %v1175 = vmul.f32 %v1158, %v1174
  %v1176 = vmul.f32 %v1161, %v1174
  %v1177 = vmul.f32 %v1164, %v1174
  %v1178 = vmul.f32 %v1167, %v1174
  %v1179 = vsub.f32 %v1152, %v1175
  %v1180 = vsub.f32 %v1153, %v1176
  %v1181 = vsub.f32 %v1154, %v1177
  %v1182 = vsub.f32 %v1155, %v1178
  %v1183 = vmul.f32 %v1179, %v1179
  %v1184 = vmul.f32 %v1180, %v1180
  %v1185 = vmul.f32 %v1181, %v1181
  %v1186 = vmul.f32 %v1182, %v1182
  %v1187 = vsel %vm157, %v1183, 0.0
  %1188 = vadd.xlane.f32.xlu0 %v1187
  %v1189 = vpop.xlane.xlu0 %1188
  %v1190 = vsel %vm157, %v1184, 0.0
  %1191 = vadd.xlane.f32.xlu0 %v1190
  %v1192 = vpop.xlane.xlu0 %1191
  %v1193 = vsel %vm157, %v1185, 0.0
  %1194 = vadd.xlane.f32.xlu0 %v1193
  %v1195 = vpop.xlane.xlu0 %1194
  %v1196 = vsel %vm157, %v1186, 0.0
  %1197 = vadd.xlane.f32.xlu0 %v1196
  %v1198 = vpop.xlane.xlu0 %1197
  %v1199 = vmul.f32 %v1189, %v1174
  %v1200 = vmul.f32 %v1192, %v1174
  %v1201 = vmul.f32 %v1195, %v1174
  %v1202 = vmul.f32 %v1198, %v1174
  %v1203 = vadd.f32 %v1199, 1e-05
  %v1204 = vadd.f32 %v1200, 1e-05
  %v1205 = vadd.f32 %v1201, 1e-05
  %v1206 = vadd.f32 %v1202, 1e-05
  %v1207 = vrsqrt.pop %v1203
  %v1208 = vmul.f32 %v1207, %v1203
  %v1209 = vmul.f32 %v1208, %v1207
  %v1210 = vmul.f32 0.5, %v1209
  %v1211 = vsub.f32 1.5, %v1210
  %v1212 = vmul.f32 %v1207, %v1211
  %vm1213 = vweird.f32 %v1203
  %vm1214 = vweird.f32 %v1207
  %vm1215 = vmor %vm1213, %vm1214
  %v1216 = vsel %vm1215, %v1207, %v1212
  %v1217 = vrsqrt.pop %v1204
  %v1218 = vmul.f32 %v1217, %v1204
  %v1219 = vmul.f32 %v1218, %v1217
  %v1220 = vmul.f32 0.5, %v1219
  %v1221 = vsub.f32 1.5, %v1220
  %v1222 = vmul.f32 %v1217, %v1221
  %vm1223 = vweird.f32 %v1204
  %vm1224 = vweird.f32 %v1217
  %vm1225 = vmor %vm1223, %vm1224
  %v1226 = vsel %vm1225, %v1217, %v1222
  %v1227 = vrsqrt.pop %v1205
  %v1228 = vmul.f32 %v1227, %v1205
  %v1229 = vmul.f32 %v1228, %v1227
  %v1230 = vmul.f32 0.5, %v1229
  %v1231 = vsub.f32 1.5, %v1230
  %v1232 = vmul.f32 %v1227, %v1231
  %vm1233 = vweird.f32 %v1205
  %vm1234 = vweird.f32 %v1227
  %vm1235 = vmor %vm1233, %vm1234
  %v1236 = vsel %vm1235, %v1227, %v1232
  %v1237 = vrsqrt.pop %v1206
  %v1238 = vmul.f32 %v1237, %v1206
  %v1239 = vmul.f32 %v1238, %v1237
  %v1240 = vmul.f32 0.5, %v1239
  %v1241 = vsub.f32 1.5, %v1240
  %v1242 = vmul.f32 %v1237, %v1241
  %vm1243 = vweird.f32 %v1206
  %vm1244 = vweird.f32 %v1237
  %vm1245 = vmor %vm1243, %vm1244
  %v1246 = vsel %vm1245, %v1237, %v1242
  %v1247 = vmul.f32 %v1179, %v1216
  %v1248 = vmul.f32 %v1180, %v1226
  %v1249 = vmul.f32 %v1181, %v1236
  %v1250 = vmul.f32 %v1182, %v1246
  %v1251 = vperm.slane %v141, 2
  %v1252 = vmul.f32 %v1247, %v1251
  %v1253 = vmul.f32 %v1248, %v1251
  %v1254 = vmul.f32 %v1249, %v1251
  %v1255 = vmul.f32 %v1250, %v1251
  %v1256 = vperm.slane %v141, 3
  %v1257 = vadd.f32 %v1252, %v1256
  %v1258 = vadd.f32 %v1253, %v1256
  %v1259 = vadd.f32 %v1254, %v1256
  %v1260 = vadd.f32 %v1255, %v1256
  %v1261 = vpack.c.bf16 %v1258, %v1257
  %v1262 = vpack.c.bf16 %v1260, %v1259
  %v1263 = vld [vmem:[%s4] sm:$0xff]
  %v1264 = vld [vmem:[%s4 + $0x8] sm:$0xff]
  %v1265 = vld [vmem:[%s4 + $0x10] sm:$0xff]
  %v1266 = vld [vmem:[%s4 + $0x18] sm:$0xff]
  %v1267 = vld [vmem:[%s4 + $0x20] sm:$0xff]
  %v1268 = vld [vmem:[%s4 + $0x28] sm:$0xff]
  %v1269 = vld [vmem:[%s4 + $0x30] sm:$0xff]
  %v1270 = vld [vmem:[%s4 + $0x38] sm:$0xff]
  %v1271 = vld [vmem:[%s4 + $0x40] sm:$0xff]
  %v1272 = vld [vmem:[%s4 + $0x48] sm:$0xff]
  %v1273 = vld [vmem:[%s4 + $0x50] sm:$0xff]
  %v1274 = vld [vmem:[%s4 + $0x58] sm:$0xff]
  %v1275 = vld [vmem:[%s4 + $0x60] sm:$0xff]
  %v1276 = vld [vmem:[%s4 + $0x68] sm:$0xff]
  %v1277 = vld [vmem:[%s4 + $0x70] sm:$0xff]
  %v1278 = vld [vmem:[%s4 + $0x78] sm:$0xff]
  %v1279 = vld [vmem:[%s4 + $0x80] sm:$0xff]
  %v1280 = vld [vmem:[%s4 + $0x88] sm:$0xff]
  %v1281 = vld [vmem:[%s4 + $0x90] sm:$0xff]
  %v1282 = vld [vmem:[%s4 + $0x98] sm:$0xff]
  %v1283 = vld [vmem:[%s4 + $0xa0] sm:$0xff]
  %v1284 = vld [vmem:[%s4 + $0xa8] sm:$0xff]
  %v1285 = vld [vmem:[%s4 + $0xb0] sm:$0xff]
  %v1286 = vld [vmem:[%s4 + $0xb8] sm:$0xff]
  %v1287 = vld [vmem:[%s4 + $0xc0] sm:$0xff]
  %v1288 = vld [vmem:[%s4 + $0xc8] sm:$0xff]
  %v1289 = vld [vmem:[%s4 + $0xd0] sm:$0xff]
  %v1290 = vld [vmem:[%s4 + $0xd8] sm:$0xff]
  %v1291 = vld [vmem:[%s4 + $0xe0] sm:$0xff]
  %v1292 = vld [vmem:[%s4 + $0xe8] sm:$0xff]
  %v1293 = vld [vmem:[%s4 + $0xf0] sm:$0xff]
  %v1294 = vld [vmem:[%s4 + $0xf8] sm:$0xff]
  %v1295 = vld [vmem:[%s5] sm:$0xff]
  %v1296 = vld [vmem:[%s5 + $0x8] sm:$0xff]
  %v1299 = vperm.slane %v1295, 0
  %v1300 = vperm.slane %v1295, 1
  %v1301 = vperm.slane %v1295, 2
  %v1302 = vperm.slane %v1295, 3
  %v1303 = vperm.slane %v1295, 4
  %v1304 = vperm.slane %v1295, 5
  %v1305 = vperm.slane %v1295, 6
  %v1306 = vperm.slane %v1295, 7
  %v1307 = vperm.slane %v1296, 0
  %v1308 = vperm.slane %v1296, 1
  %v1309 = vperm.slane %v1296, 2
  %v1310 = vperm.slane %v1296, 3
  %v1311 = vperm.slane %v1296, 4
  %v1312 = vperm.slane %v1296, 5
  %v1313 = vperm.slane %v1296, 6
  %v1314 = vperm.slane %v1296, 7
  %v1363 = vunpack.c.l.b16 %v1263
  %v1364 = vunpack.c.h.b16 %v1263
  %v1365 = vunpack.c.l.b16 %v1264
  %v1366 = vunpack.c.h.b16 %v1264
  %v1367 = vunpack.c.l.b16 %v1265
  %v1368 = vunpack.c.h.b16 %v1265
  %v1369 = vunpack.c.l.b16 %v1266
  %v1370 = vunpack.c.h.b16 %v1266
  %v1371 = vunpack.c.l.b16 %v1267
  %v1372 = vunpack.c.h.b16 %v1267
  %v1373 = vunpack.c.l.b16 %v1268
  %v1374 = vunpack.c.h.b16 %v1268
  %v1375 = vunpack.c.l.b16 %v1269
  %v1376 = vunpack.c.h.b16 %v1269
  %v1377 = vunpack.c.l.b16 %v1270
  %v1378 = vunpack.c.h.b16 %v1270
  %v1379 = vunpack.c.l.b16 %v1271
  %v1380 = vunpack.c.h.b16 %v1271
  %v1381 = vunpack.c.l.b16 %v1272
  %v1382 = vunpack.c.h.b16 %v1272
  %v1383 = vunpack.c.l.b16 %v1273
  %v1384 = vunpack.c.h.b16 %v1273
  %v1385 = vunpack.c.l.b16 %v1274
  %v1386 = vunpack.c.h.b16 %v1274
  %v1387 = vunpack.c.l.b16 %v1275
  %v1388 = vunpack.c.h.b16 %v1275
  %v1389 = vunpack.c.l.b16 %v1276
  %v1390 = vunpack.c.h.b16 %v1276
  %v1391 = vunpack.c.l.b16 %v1277
  %v1392 = vunpack.c.h.b16 %v1277
  %v1393 = vunpack.c.l.b16 %v1278
  %v1394 = vunpack.c.h.b16 %v1278
  %v1395 = vunpack.c.l.b16 %v1279
  %v1396 = vunpack.c.h.b16 %v1279
  %v1397 = vunpack.c.l.b16 %v1280
  %v1398 = vunpack.c.h.b16 %v1280
  %v1399 = vunpack.c.l.b16 %v1281
  %v1400 = vunpack.c.h.b16 %v1281
  %v1401 = vunpack.c.l.b16 %v1282
  %v1402 = vunpack.c.h.b16 %v1282
  %v1403 = vunpack.c.l.b16 %v1283
  %v1404 = vunpack.c.h.b16 %v1283
  %v1405 = vunpack.c.l.b16 %v1284
  %v1406 = vunpack.c.h.b16 %v1284
  %v1407 = vunpack.c.l.b16 %v1285
  %v1408 = vunpack.c.h.b16 %v1285
  %v1409 = vunpack.c.l.b16 %v1286
  %v1410 = vunpack.c.h.b16 %v1286
  %v1411 = vunpack.c.l.b16 %v1287
  %v1412 = vunpack.c.h.b16 %v1287
  %v1413 = vunpack.c.l.b16 %v1288
  %v1414 = vunpack.c.h.b16 %v1288
  %v1415 = vunpack.c.l.b16 %v1289
  %v1416 = vunpack.c.h.b16 %v1289
  %v1417 = vunpack.c.l.b16 %v1290
  %v1418 = vunpack.c.h.b16 %v1290
  %v1419 = vunpack.c.l.b16 %v1291
  %v1420 = vunpack.c.h.b16 %v1291
  %v1421 = vunpack.c.l.b16 %v1292
  %v1422 = vunpack.c.h.b16 %v1292
  %v1423 = vunpack.c.l.b16 %v1293
  %v1424 = vunpack.c.h.b16 %v1293
  %v1425 = vunpack.c.l.b16 %v1294
  %v1426 = vunpack.c.h.b16 %v1294
  %v1427 = vpack.c.b16 %v1379, %v1363
  %v1428 = vpack.c.b16 %v1380, %v1364
  %v1429 = vpack.c.b16 %v1381, %v1365
  %v1430 = vpack.c.b16 %v1382, %v1366
  %v1431 = vpack.c.b16 %v1383, %v1367
  %v1432 = vpack.c.b16 %v1384, %v1368
  %v1433 = vpack.c.b16 %v1385, %v1369
  %v1434 = vpack.c.b16 %v1386, %v1370
  %v1435 = vpack.c.b16 %v1387, %v1371
  %v1436 = vpack.c.b16 %v1388, %v1372
  %v1437 = vpack.c.b16 %v1389, %v1373
  %v1438 = vpack.c.b16 %v1390, %v1374
  %v1439 = vpack.c.b16 %v1391, %v1375
  %v1440 = vpack.c.b16 %v1392, %v1376
  %v1441 = vpack.c.b16 %v1393, %v1377
  %v1442 = vpack.c.b16 %v1394, %v1378
  %v1443 = vpack.c.b16 %v1411, %v1395
  %v1444 = vpack.c.b16 %v1412, %v1396
  %v1445 = vpack.c.b16 %v1413, %v1397
  %v1446 = vpack.c.b16 %v1414, %v1398
  %v1447 = vpack.c.b16 %v1415, %v1399
  %v1448 = vpack.c.b16 %v1416, %v1400
  %v1449 = vpack.c.b16 %v1417, %v1401
  %v1450 = vpack.c.b16 %v1418, %v1402
  %v1451 = vpack.c.b16 %v1419, %v1403
  %v1452 = vpack.c.b16 %v1420, %v1404
  %v1453 = vpack.c.b16 %v1421, %v1405
  %v1454 = vpack.c.b16 %v1422, %v1406
  %v1455 = vpack.c.b16 %v1423, %v1407
  %v1456 = vpack.c.b16 %v1424, %v1408
  %v1457 = vpack.c.b16 %v1425, %v1409
  %v1458 = vpack.c.b16 %v1426, %v1410
  %v1492 = vsel %vm157, %v1261, 0
  %v1495 = vsel %vm157, %v1262, 0
  %1497 = vmatpush.bf16.msra.mxu0 0
  %1498 = vmatpush.bf16.msra.mxu0 0
  %1499 = vmatpush.bf16.msra.mxu0 0
  %1500 = vmatpush.bf16.msra.mxu0 0
  %1501 = vmatpush.bf16.msra.mxu0 0
  %1502 = vmatpush.bf16.msra.mxu0 0
  %1503 = vmatpush.bf16.msra.mxu0 %v1443
  %1504 = vmatpush.bf16.msra.mxu0 %v1427
  %1505 = vmatmul.bf16.gmra.mxu0 %v1492
  %v1506 = vpop.f32.mrf.mxu0
  %v1507 = vadd.f32 %v1299, %v1506
  %v1508 = vpop.f32.mrf.mxu0
  %v1509 = vadd.f32 %v1299, %v1508
  %1510 = vmatmul.bf16.gmra.mxu0 %v1495
  %v1511 = vpop.f32.mrf.mxu0
  %v1512 = vadd.f32 %v1299, %v1511
  %v1513 = vpop.f32.mrf.mxu0
  %v1514 = vadd.f32 %v1299, %v1513
  %1515 = vdwg.mxu0
  %1516 = vmatpush.bf16.msra.mxu0 0
  %1517 = vmatpush.bf16.msra.mxu0 0
  %1518 = vmatpush.bf16.msra.mxu0 0
  %1519 = vmatpush.bf16.msra.mxu0 0
  %1520 = vmatpush.bf16.msra.mxu0 0
  %1521 = vmatpush.bf16.msra.mxu0 0
  %1522 = vmatpush.bf16.msra.mxu0 %v1444
  %1523 = vmatpush.bf16.msra.mxu0 %v1428
  %1524 = vmatmul.bf16.gmra.mxu0 %v1492
  %v1525 = vpop.f32.mrf.mxu0
  %v1526 = vadd.f32 %v1300, %v1525
  %v1527 = vpop.f32.mrf.mxu0
  %v1528 = vadd.f32 %v1300, %v1527
  %1529 = vmatmul.bf16.gmra.mxu0 %v1495
  %v1530 = vpop.f32.mrf.mxu0
  %v1531 = vadd.f32 %v1300, %v1530
  %v1532 = vpop.f32.mrf.mxu0
  %v1533 = vadd.f32 %v1300, %v1532
  %1534 = vdwg.mxu0
  %1535 = vmatpush.bf16.msra.mxu0 0
  %1536 = vmatpush.bf16.msra.mxu0 0
  %1537 = vmatpush.bf16.msra.mxu0 0
  %1538 = vmatpush.bf16.msra.mxu0 0
  %1539 = vmatpush.bf16.msra.mxu0 0
  %1540 = vmatpush.bf16.msra.mxu0 0
  %1541 = vmatpush.bf16.msra.mxu0 %v1445
  %1542 = vmatpush.bf16.msra.mxu0 %v1429
  %1543 = vmatmul.bf16.gmra.mxu0 %v1492
  %v1544 = vpop.f32.mrf.mxu0
  %v1545 = vadd.f32 %v1301, %v1544
  %v1546 = vpop.f32.mrf.mxu0
  %v1547 = vadd.f32 %v1301, %v1546
  %1548 = vmatmul.bf16.gmra.mxu0 %v1495
  %v1549 = vpop.f32.mrf.mxu0
  %v1550 = vadd.f32 %v1301, %v1549
  %v1551 = vpop.f32.mrf.mxu0
  %v1552 = vadd.f32 %v1301, %v1551
  %1553 = vdwg.mxu0
  %1554 = vmatpush.bf16.msra.mxu0 0
  %1555 = vmatpush.bf16.msra.mxu0 0
  %1556 = vmatpush.bf16.msra.mxu0 0
  %1557 = vmatpush.bf16.msra.mxu0 0
  %1558 = vmatpush.bf16.msra.mxu0 0
  %1559 = vmatpush.bf16.msra.mxu0 0
  %1560 = vmatpush.bf16.msra.mxu0 %v1446
  %1561 = vmatpush.bf16.msra.mxu0 %v1430
  %1562 = vmatmul.bf16.gmra.mxu0 %v1492
  %v1563 = vpop.f32.mrf.mxu0
  %v1564 = vadd.f32 %v1302, %v1563
  %v1565 = vpop.f32.mrf.mxu0
  %v1566 = vadd.f32 %v1302, %v1565
  %1567 = vmatmul.bf16.gmra.mxu0 %v1495
  %v1568 = vpop.f32.mrf.mxu0
  %v1569 = vadd.f32 %v1302, %v1568
  %v1570 = vpop.f32.mrf.mxu0
  %v1571 = vadd.f32 %v1302, %v1570
  %1572 = vdwg.mxu0
  %1573 = vmatpush.bf16.msra.mxu0 0
  %1574 = vmatpush.bf16.msra.mxu0 0
  %1575 = vmatpush.bf16.msra.mxu0 0
  %1576 = vmatpush.bf16.msra.mxu0 0
  %1577 = vmatpush.bf16.msra.mxu0 0
  %1578 = vmatpush.bf16.msra.mxu0 0
  %1579 = vmatpush.bf16.msra.mxu0 %v1447
  %1580 = vmatpush.bf16.msra.mxu0 %v1431
  %1581 = vmatmul.bf16.gmra.mxu0 %v1492
  %v1582 = vpop.f32.mrf.mxu0
  %v1583 = vadd.f32 %v1303, %v1582
  %v1584 = vpop.f32.mrf.mxu0
  %v1585 = vadd.f32 %v1303, %v1584
  %1586 = vmatmul.bf16.gmra.mxu0 %v1495
  %v1587 = vpop.f32.mrf.mxu0
  %v1588 = vadd.f32 %v1303, %v1587
  %v1589 = vpop.f32.mrf.mxu0
  %v1590 = vadd.f32 %v1303, %v1589
  %1591 = vdwg.mxu0
  %1592 = vmatpush.bf16.msra.mxu0 0
  %1593 = vmatpush.bf16.msra.mxu0 0
  %1594 = vmatpush.bf16.msra.mxu0 0
  %1595 = vmatpush.bf16.msra.mxu0 0
  %1596 = vmatpush.bf16.msra.mxu0 0
  %1597 = vmatpush.bf16.msra.mxu0 0
  %1598 = vmatpush.bf16.msra.mxu0 %v1448
  %1599 = vmatpush.bf16.msra.mxu0 %v1432
  %1600 = vmatmul.bf16.gmra.mxu0 %v1492
  %v1601 = vpop.f32.mrf.mxu0
  %v1602 = vadd.f32 %v1304, %v1601
  %v1603 = vpop.f32.mrf.mxu0
  %v1604 = vadd.f32 %v1304, %v1603
  %1605 = vmatmul.bf16.gmra.mxu0 %v1495
  %v1606 = vpop.f32.mrf.mxu0
  %v1607 = vadd.f32 %v1304, %v1606
  %v1608 = vpop.f32.mrf.mxu0
  %v1609 = vadd.f32 %v1304, %v1608
  %1610 = vdwg.mxu0
  %1611 = vmatpush.bf16.msra.mxu0 0
  %1612 = vmatpush.bf16.msra.mxu0 0
  %1613 = vmatpush.bf16.msra.mxu0 0
  %1614 = vmatpush.bf16.msra.mxu0 0
  %1615 = vmatpush.bf16.msra.mxu0 0
  %1616 = vmatpush.bf16.msra.mxu0 0
  %1617 = vmatpush.bf16.msra.mxu0 %v1449
  %1618 = vmatpush.bf16.msra.mxu0 %v1433
  %1619 = vmatmul.bf16.gmra.mxu0 %v1492
  %v1620 = vpop.f32.mrf.mxu0
  %v1621 = vadd.f32 %v1305, %v1620
  %v1622 = vpop.f32.mrf.mxu0
  %v1623 = vadd.f32 %v1305, %v1622
  %1624 = vmatmul.bf16.gmra.mxu0 %v1495
  %v1625 = vpop.f32.mrf.mxu0
  %v1626 = vadd.f32 %v1305, %v1625
  %v1627 = vpop.f32.mrf.mxu0
  %v1628 = vadd.f32 %v1305, %v1627
  %1629 = vdwg.mxu0
  %1630 = vmatpush.bf16.msra.mxu0 0
  %1631 = vmatpush.bf16.msra.mxu0 0
  %1632 = vmatpush.bf16.msra.mxu0 0
  %1633 = vmatpush.bf16.msra.mxu0 0
  %1634 = vmatpush.bf16.msra.mxu0 0
  %1635 = vmatpush.bf16.msra.mxu0 0
  %1636 = vmatpush.bf16.msra.mxu0 %v1450
  %1637 = vmatpush.bf16.msra.mxu0 %v1434
  %1638 = vmatmul.bf16.gmra.mxu0 %v1492
  %v1639 = vpop.f32.mrf.mxu0
  %v1640 = vadd.f32 %v1306, %v1639
  %v1641 = vpop.f32.mrf.mxu0
  %v1642 = vadd.f32 %v1306, %v1641
  %1643 = vmatmul.bf16.gmra.mxu0 %v1495
  %v1644 = vpop.f32.mrf.mxu0
  %v1645 = vadd.f32 %v1306, %v1644
  %v1646 = vpop.f32.mrf.mxu0
  %v1647 = vadd.f32 %v1306, %v1646
  %1648 = vdwg.mxu0
  %1649 = vmatpush.bf16.msra.mxu0 0
  %1650 = vmatpush.bf16.msra.mxu0 0
  %1651 = vmatpush.bf16.msra.mxu0 0
  %1652 = vmatpush.bf16.msra.mxu0 0
  %1653 = vmatpush.bf16.msra.mxu0 0
  %1654 = vmatpush.bf16.msra.mxu0 0
  %1655 = vmatpush.bf16.msra.mxu0 %v1451
  %1656 = vmatpush.bf16.msra.mxu0 %v1435
  %1657 = vmatmul.bf16.gmra.mxu0 %v1492
  %v1658 = vpop.f32.mrf.mxu0
  %v1659 = vadd.f32 %v1307, %v1658
  %v1660 = vpop.f32.mrf.mxu0
  %v1661 = vadd.f32 %v1307, %v1660
  %1662 = vmatmul.bf16.gmra.mxu0 %v1495
  %v1663 = vpop.f32.mrf.mxu0
  %v1664 = vadd.f32 %v1307, %v1663
  %v1665 = vpop.f32.mrf.mxu0
  %v1666 = vadd.f32 %v1307, %v1665
  %1667 = vdwg.mxu0
  %1668 = vmatpush.bf16.msra.mxu0 0
  %1669 = vmatpush.bf16.msra.mxu0 0
  %1670 = vmatpush.bf16.msra.mxu0 0
  %1671 = vmatpush.bf16.msra.mxu0 0
  %1672 = vmatpush.bf16.msra.mxu0 0
  %1673 = vmatpush.bf16.msra.mxu0 0
  %1674 = vmatpush.bf16.msra.mxu0 %v1452
  %1675 = vmatpush.bf16.msra.mxu0 %v1436
  %1676 = vmatmul.bf16.gmra.mxu0 %v1492
  %v1677 = vpop.f32.mrf.mxu0
  %v1678 = vadd.f32 %v1308, %v1677
  %v1679 = vpop.f32.mrf.mxu0
  %v1680 = vadd.f32 %v1308, %v1679
  %1681 = vmatmul.bf16.gmra.mxu0 %v1495
  %v1682 = vpop.f32.mrf.mxu0
  %v1683 = vadd.f32 %v1308, %v1682
  %v1684 = vpop.f32.mrf.mxu0
  %v1685 = vadd.f32 %v1308, %v1684
  %1686 = vdwg.mxu0
  %1687 = vmatpush.bf16.msra.mxu0 0
  %1688 = vmatpush.bf16.msra.mxu0 0
  %1689 = vmatpush.bf16.msra.mxu0 0
  %1690 = vmatpush.bf16.msra.mxu0 0
  %1691 = vmatpush.bf16.msra.mxu0 0
  %1692 = vmatpush.bf16.msra.mxu0 0
  %1693 = vmatpush.bf16.msra.mxu0 %v1453
  %1694 = vmatpush.bf16.msra.mxu0 %v1437
  %1695 = vmatmul.bf16.gmra.mxu0 %v1492
  %v1696 = vpop.f32.mrf.mxu0
  %v1697 = vadd.f32 %v1309, %v1696
  %v1698 = vpop.f32.mrf.mxu0
  %v1699 = vadd.f32 %v1309, %v1698
  %1700 = vmatmul.bf16.gmra.mxu0 %v1495
  %v1701 = vpop.f32.mrf.mxu0
  %v1702 = vadd.f32 %v1309, %v1701
  %v1703 = vpop.f32.mrf.mxu0
  %v1704 = vadd.f32 %v1309, %v1703
  %1705 = vdwg.mxu0
  %1706 = vmatpush.bf16.msra.mxu0 0
  %1707 = vmatpush.bf16.msra.mxu0 0
  %1708 = vmatpush.bf16.msra.mxu0 0
  %1709 = vmatpush.bf16.msra.mxu0 0
  %1710 = vmatpush.bf16.msra.mxu0 0
  %1711 = vmatpush.bf16.msra.mxu0 0
  %1712 = vmatpush.bf16.msra.mxu0 %v1454
  %1713 = vmatpush.bf16.msra.mxu0 %v1438
  %1714 = vmatmul.bf16.gmra.mxu0 %v1492
  %v1715 = vpop.f32.mrf.mxu0
  %v1716 = vadd.f32 %v1310, %v1715
  %v1717 = vpop.f32.mrf.mxu0
  %v1718 = vadd.f32 %v1310, %v1717
  %1719 = vmatmul.bf16.gmra.mxu0 %v1495
  %v1720 = vpop.f32.mrf.mxu0
  %v1721 = vadd.f32 %v1310, %v1720
  %v1722 = vpop.f32.mrf.mxu0
  %v1723 = vadd.f32 %v1310, %v1722
  %1724 = vdwg.mxu0
  %1725 = vmatpush.bf16.msra.mxu0 0
  %1726 = vmatpush.bf16.msra.mxu0 0
  %1727 = vmatpush.bf16.msra.mxu0 0
  %1728 = vmatpush.bf16.msra.mxu0 0
  %1729 = vmatpush.bf16.msra.mxu0 0
  %1730 = vmatpush.bf16.msra.mxu0 0
  %1731 = vmatpush.bf16.msra.mxu0 %v1455
  %1732 = vmatpush.bf16.msra.mxu0 %v1439
  %1733 = vmatmul.bf16.gmra.mxu0 %v1492
  %v1734 = vpop.f32.mrf.mxu0
  %v1735 = vadd.f32 %v1311, %v1734
  %v1736 = vpop.f32.mrf.mxu0
  %v1737 = vadd.f32 %v1311, %v1736
  %1738 = vmatmul.bf16.gmra.mxu0 %v1495
  %v1739 = vpop.f32.mrf.mxu0
  %v1740 = vadd.f32 %v1311, %v1739
  %v1741 = vpop.f32.mrf.mxu0
  %v1742 = vadd.f32 %v1311, %v1741
  %1743 = vdwg.mxu0
  %1744 = vmatpush.bf16.msra.mxu0 0
  %1745 = vmatpush.bf16.msra.mxu0 0
  %1746 = vmatpush.bf16.msra.mxu0 0
  %1747 = vmatpush.bf16.msra.mxu0 0
  %1748 = vmatpush.bf16.msra.mxu0 0
  %1749 = vmatpush.bf16.msra.mxu0 0
  %1750 = vmatpush.bf16.msra.mxu0 %v1456
  %1751 = vmatpush.bf16.msra.mxu0 %v1440
  %1752 = vmatmul.bf16.gmra.mxu0 %v1492
  %v1753 = vpop.f32.mrf.mxu0
  %v1754 = vadd.f32 %v1312, %v1753
  %v1755 = vpop.f32.mrf.mxu0
  %v1756 = vadd.f32 %v1312, %v1755
  %1757 = vmatmul.bf16.gmra.mxu0 %v1495
  %v1758 = vpop.f32.mrf.mxu0
  %v1759 = vadd.f32 %v1312, %v1758
  %v1760 = vpop.f32.mrf.mxu0
  %v1761 = vadd.f32 %v1312, %v1760
  %1762 = vdwg.mxu0
  %1763 = vmatpush.bf16.msra.mxu0 0
  %1764 = vmatpush.bf16.msra.mxu0 0
  %1765 = vmatpush.bf16.msra.mxu0 0
  %1766 = vmatpush.bf16.msra.mxu0 0
  %1767 = vmatpush.bf16.msra.mxu0 0
  %1768 = vmatpush.bf16.msra.mxu0 0
  %1769 = vmatpush.bf16.msra.mxu0 %v1457
  %1770 = vmatpush.bf16.msra.mxu0 %v1441
  %1771 = vmatmul.bf16.gmra.mxu0 %v1492
  %v1772 = vpop.f32.mrf.mxu0
  %v1773 = vadd.f32 %v1313, %v1772
  %v1774 = vpop.f32.mrf.mxu0
  %v1775 = vadd.f32 %v1313, %v1774
  %1776 = vmatmul.bf16.gmra.mxu0 %v1495
  %v1777 = vpop.f32.mrf.mxu0
  %v1778 = vadd.f32 %v1313, %v1777
  %v1779 = vpop.f32.mrf.mxu0
  %v1780 = vadd.f32 %v1313, %v1779
  %1781 = vdwg.mxu0
  %1782 = vmatpush.bf16.msra.mxu0 0
  %1783 = vmatpush.bf16.msra.mxu0 0
  %1784 = vmatpush.bf16.msra.mxu0 0
  %1785 = vmatpush.bf16.msra.mxu0 0
  %1786 = vmatpush.bf16.msra.mxu0 0
  %1787 = vmatpush.bf16.msra.mxu0 0
  %1788 = vmatpush.bf16.msra.mxu0 %v1458
  %1789 = vmatpush.bf16.msra.mxu0 %v1442
  %1790 = vmatmul.bf16.gmra.mxu0 %v1492
  %v1791 = vpop.f32.mrf.mxu0
  %v1792 = vadd.f32 %v1314, %v1791
  %v1793 = vpop.f32.mrf.mxu0
  %v1794 = vadd.f32 %v1314, %v1793
  %1795 = vmatmul.bf16.gmra.mxu0 %v1495
  %v1796 = vpop.f32.mrf.mxu0
  %v1797 = vadd.f32 %v1314, %v1796
  %v1798 = vpop.f32.mrf.mxu0
  %v1799 = vadd.f32 %v1314, %v1798
  %1800 = vdwg.mxu0
  %v1801 = vmax.f32 %v1507, 0.0
  %v1802 = vmax.f32 %v1526, 0.0
  %v1803 = vmax.f32 %v1545, 0.0
  %v1804 = vmax.f32 %v1564, 0.0
  %v1805 = vmax.f32 %v1583, 0.0
  %v1806 = vmax.f32 %v1602, 0.0
  %v1807 = vmax.f32 %v1621, 0.0
  %v1808 = vmax.f32 %v1640, 0.0
  %v1809 = vmax.f32 %v1659, 0.0
  %v1810 = vmax.f32 %v1678, 0.0
  %v1811 = vmax.f32 %v1697, 0.0
  %v1812 = vmax.f32 %v1716, 0.0
  %v1813 = vmax.f32 %v1735, 0.0
  %v1814 = vmax.f32 %v1754, 0.0
  %v1815 = vmax.f32 %v1773, 0.0
  %v1816 = vmax.f32 %v1792, 0.0
  %v1817 = vmax.f32 %v1509, 0.0
  %v1818 = vmax.f32 %v1528, 0.0
  %v1819 = vmax.f32 %v1547, 0.0
  %v1820 = vmax.f32 %v1566, 0.0
  %v1821 = vmax.f32 %v1585, 0.0
  %v1822 = vmax.f32 %v1604, 0.0
  %v1823 = vmax.f32 %v1623, 0.0
  %v1824 = vmax.f32 %v1642, 0.0
  %v1825 = vmax.f32 %v1661, 0.0
  %v1826 = vmax.f32 %v1680, 0.0
  %v1827 = vmax.f32 %v1699, 0.0
  %v1828 = vmax.f32 %v1718, 0.0
  %v1829 = vmax.f32 %v1737, 0.0
  %v1830 = vmax.f32 %v1756, 0.0
  %v1831 = vmax.f32 %v1775, 0.0
  %v1832 = vmax.f32 %v1794, 0.0
  %v1833 = vmax.f32 %v1512, 0.0
  %v1834 = vmax.f32 %v1531, 0.0
  %v1835 = vmax.f32 %v1550, 0.0
  %v1836 = vmax.f32 %v1569, 0.0
  %v1837 = vmax.f32 %v1588, 0.0
  %v1838 = vmax.f32 %v1607, 0.0
  %v1839 = vmax.f32 %v1626, 0.0
  %v1840 = vmax.f32 %v1645, 0.0
  %v1841 = vmax.f32 %v1664, 0.0
  %v1842 = vmax.f32 %v1683, 0.0
  %v1843 = vmax.f32 %v1702, 0.0
  %v1844 = vmax.f32 %v1721, 0.0
  %v1845 = vmax.f32 %v1740, 0.0
  %v1846 = vmax.f32 %v1759, 0.0
  %v1847 = vmax.f32 %v1778, 0.0
  %v1848 = vmax.f32 %v1797, 0.0
  %v1849 = vmax.f32 %v1514, 0.0
  %v1850 = vmax.f32 %v1533, 0.0
  %v1851 = vmax.f32 %v1552, 0.0
  %v1852 = vmax.f32 %v1571, 0.0
  %v1853 = vmax.f32 %v1590, 0.0
  %v1854 = vmax.f32 %v1609, 0.0
  %v1855 = vmax.f32 %v1628, 0.0
  %v1856 = vmax.f32 %v1647, 0.0
  %v1857 = vmax.f32 %v1666, 0.0
  %v1858 = vmax.f32 %v1685, 0.0
  %v1859 = vmax.f32 %v1704, 0.0
  %v1860 = vmax.f32 %v1723, 0.0
  %v1861 = vmax.f32 %v1742, 0.0
  %v1862 = vmax.f32 %v1761, 0.0
  %v1863 = vmax.f32 %v1780, 0.0
  %v1864 = vmax.f32 %v1799, 0.0
  %v1865 = vpack.c.bf16 %v1817, %v1801
  %v1866 = vpack.c.bf16 %v1818, %v1802
  %v1867 = vpack.c.bf16 %v1819, %v1803
  %v1868 = vpack.c.bf16 %v1820, %v1804
  %v1869 = vpack.c.bf16 %v1821, %v1805
  %v1870 = vpack.c.bf16 %v1822, %v1806
  %v1871 = vpack.c.bf16 %v1823, %v1807
  %v1872 = vpack.c.bf16 %v1824, %v1808
  %v1873 = vpack.c.bf16 %v1825, %v1809
  %v1874 = vpack.c.bf16 %v1826, %v1810
  %v1875 = vpack.c.bf16 %v1827, %v1811
  %v1876 = vpack.c.bf16 %v1828, %v1812
  %v1877 = vpack.c.bf16 %v1829, %v1813
  %v1878 = vpack.c.bf16 %v1830, %v1814
  %v1879 = vpack.c.bf16 %v1831, %v1815
  %v1880 = vpack.c.bf16 %v1832, %v1816
  %v1881 = vpack.c.bf16 %v1849, %v1833
  %v1882 = vpack.c.bf16 %v1850, %v1834
  %v1883 = vpack.c.bf16 %v1851, %v1835
  %v1884 = vpack.c.bf16 %v1852, %v1836
  %v1885 = vpack.c.bf16 %v1853, %v1837
  %v1886 = vpack.c.bf16 %v1854, %v1838
  %v1887 = vpack.c.bf16 %v1855, %v1839
  %v1888 = vpack.c.bf16 %v1856, %v1840
  %v1889 = vpack.c.bf16 %v1857, %v1841
  %v1890 = vpack.c.bf16 %v1858, %v1842
  %v1891 = vpack.c.bf16 %v1859, %v1843
  %v1892 = vpack.c.bf16 %v1860, %v1844
  %v1893 = vpack.c.bf16 %v1861, %v1845
  %v1894 = vpack.c.bf16 %v1862, %v1846
  %v1895 = vpack.c.bf16 %v1863, %v1847
  %v1896 = vpack.c.bf16 %v1864, %v1848
  %v1897 = vld [vmem:[%s6] sm:$0xf]
  %v1898 = vld [vmem:[%s6 + $0x4] sm:$0xf]
  %v1899 = vld [vmem:[%s6 + $0x8] sm:$0xf]
  %v1900 = vld [vmem:[%s6 + $0xc] sm:$0xf]
  %v1901 = vld [vmem:[%s6 + $0x10] sm:$0xf]
  %v1902 = vld [vmem:[%s6 + $0x14] sm:$0xf]
  %v1903 = vld [vmem:[%s6 + $0x18] sm:$0xf]
  %v1904 = vld [vmem:[%s6 + $0x1c] sm:$0xf]
  %v1905 = vld [vmem:[%s6 + $0x20] sm:$0xf]
  %v1906 = vld [vmem:[%s6 + $0x24] sm:$0xf]
  %v1907 = vld [vmem:[%s6 + $0x28] sm:$0xf]
  %v1908 = vld [vmem:[%s6 + $0x2c] sm:$0xf]
  %v1909 = vld [vmem:[%s6 + $0x30] sm:$0xf]
  %v1910 = vld [vmem:[%s6 + $0x34] sm:$0xf]
  %v1911 = vld [vmem:[%s6 + $0x38] sm:$0xf]
  %v1912 = vld [vmem:[%s6 + $0x3c] sm:$0xf]
  %v1913 = vld [vmem:[%s6 + $0x40] sm:$0xf]
  %v1914 = vld [vmem:[%s6 + $0x44] sm:$0xf]
  %v1915 = vld [vmem:[%s6 + $0x48] sm:$0xf]
  %v1916 = vld [vmem:[%s6 + $0x4c] sm:$0xf]
  %v1917 = vld [vmem:[%s6 + $0x50] sm:$0xf]
  %v1918 = vld [vmem:[%s6 + $0x54] sm:$0xf]
  %v1919 = vld [vmem:[%s6 + $0x58] sm:$0xf]
  %v1920 = vld [vmem:[%s6 + $0x5c] sm:$0xf]
  %v1921 = vld [vmem:[%s6 + $0x60] sm:$0xf]
  %v1922 = vld [vmem:[%s6 + $0x64] sm:$0xf]
  %v1923 = vld [vmem:[%s6 + $0x68] sm:$0xf]
  %v1924 = vld [vmem:[%s6 + $0x6c] sm:$0xf]
  %v1925 = vld [vmem:[%s6 + $0x70] sm:$0xf]
  %v1926 = vld [vmem:[%s6 + $0x74] sm:$0xf]
  %v1927 = vld [vmem:[%s6 + $0x78] sm:$0xf]
  %v1928 = vld [vmem:[%s6 + $0x7c] sm:$0xf]
  %v1929 = vld [vmem:[%s6 + $0x80] sm:$0xf]
  %v1930 = vld [vmem:[%s6 + $0x84] sm:$0xf]
  %v1931 = vld [vmem:[%s6 + $0x88] sm:$0xf]
  %v1932 = vld [vmem:[%s6 + $0x8c] sm:$0xf]
  %v1933 = vld [vmem:[%s6 + $0x90] sm:$0xf]
  %v1934 = vld [vmem:[%s6 + $0x94] sm:$0xf]
  %v1935 = vld [vmem:[%s6 + $0x98] sm:$0xf]
  %v1936 = vld [vmem:[%s6 + $0x9c] sm:$0xf]
  %v1937 = vld [vmem:[%s6 + $0xa0] sm:$0xf]
  %v1938 = vld [vmem:[%s6 + $0xa4] sm:$0xf]
  %v1939 = vld [vmem:[%s6 + $0xa8] sm:$0xf]
  %v1940 = vld [vmem:[%s6 + $0xac] sm:$0xf]
  %v1941 = vld [vmem:[%s6 + $0xb0] sm:$0xf]
  %v1942 = vld [vmem:[%s6 + $0xb4] sm:$0xf]
  %v1943 = vld [vmem:[%s6 + $0xb8] sm:$0xf]
  %v1944 = vld [vmem:[%s6 + $0xbc] sm:$0xf]
  %v1945 = vld [vmem:[%s6 + $0xc0] sm:$0xf]
  %v1946 = vld [vmem:[%s6 + $0xc4] sm:$0xf]
  %v1947 = vld [vmem:[%s6 + $0xc8] sm:$0xf]
  %v1948 = vld [vmem:[%s6 + $0xcc] sm:$0xf]
  %v1949 = vld [vmem:[%s6 + $0xd0] sm:$0xf]
  %v1950 = vld [vmem:[%s6 + $0xd4] sm:$0xf]
  %v1951 = vld [vmem:[%s6 + $0xd8] sm:$0xf]
  %v1952 = vld [vmem:[%s6 + $0xdc] sm:$0xf]
  %v1953 = vld [vmem:[%s6 + $0xe0] sm:$0xf]
  %v1954 = vld [vmem:[%s6 + $0xe4] sm:$0xf]
  %v1955 = vld [vmem:[%s6 + $0xe8] sm:$0xf]
  %v1956 = vld [vmem:[%s6 + $0xec] sm:$0xf]
  %v1957 = vld [vmem:[%s6 + $0xf0] sm:$0xf]
  %v1958 = vld [vmem:[%s6 + $0xf4] sm:$0xf]
  %v1959 = vld [vmem:[%s6 + $0xf8] sm:$0xf]
  %v1960 = vld [vmem:[%s6 + $0xfc] sm:$0xf]
  %v1961 = vld [vmem:[%s6 + $0x100] sm:$0xf]
  %v1962 = vld [vmem:[%s6 + $0x104] sm:$0xf]
  %v1963 = vld [vmem:[%s6 + $0x108] sm:$0xf]
  %v1964 = vld [vmem:[%s6 + $0x10c] sm:$0xf]
  %v1965 = vld [vmem:[%s6 + $0x110] sm:$0xf]
  %v1966 = vld [vmem:[%s6 + $0x114] sm:$0xf]
  %v1967 = vld [vmem:[%s6 + $0x118] sm:$0xf]
  %v1968 = vld [vmem:[%s6 + $0x11c] sm:$0xf]
  %v1969 = vld [vmem:[%s6 + $0x120] sm:$0xf]
  %v1970 = vld [vmem:[%s6 + $0x124] sm:$0xf]
  %v1971 = vld [vmem:[%s6 + $0x128] sm:$0xf]
  %v1972 = vld [vmem:[%s6 + $0x12c] sm:$0xf]
  %v1973 = vld [vmem:[%s6 + $0x130] sm:$0xf]
  %v1974 = vld [vmem:[%s6 + $0x134] sm:$0xf]
  %v1975 = vld [vmem:[%s6 + $0x138] sm:$0xf]
  %v1976 = vld [vmem:[%s6 + $0x13c] sm:$0xf]
  %v1977 = vld [vmem:[%s6 + $0x140] sm:$0xf]
  %v1978 = vld [vmem:[%s6 + $0x144] sm:$0xf]
  %v1979 = vld [vmem:[%s6 + $0x148] sm:$0xf]
  %v1980 = vld [vmem:[%s6 + $0x14c] sm:$0xf]
  %v1981 = vld [vmem:[%s6 + $0x150] sm:$0xf]
  %v1982 = vld [vmem:[%s6 + $0x154] sm:$0xf]
  %v1983 = vld [vmem:[%s6 + $0x158] sm:$0xf]
  %v1984 = vld [vmem:[%s6 + $0x15c] sm:$0xf]
  %v1985 = vld [vmem:[%s6 + $0x160] sm:$0xf]
  %v1986 = vld [vmem:[%s6 + $0x164] sm:$0xf]
  %v1987 = vld [vmem:[%s6 + $0x168] sm:$0xf]
  %v1988 = vld [vmem:[%s6 + $0x16c] sm:$0xf]
  %v1989 = vld [vmem:[%s6 + $0x170] sm:$0xf]
  %v1990 = vld [vmem:[%s6 + $0x174] sm:$0xf]
  %v1991 = vld [vmem:[%s6 + $0x178] sm:$0xf]
  %v1992 = vld [vmem:[%s6 + $0x17c] sm:$0xf]
  %v1993 = vld [vmem:[%s6 + $0x180] sm:$0xf]
  %v1994 = vld [vmem:[%s6 + $0x184] sm:$0xf]
  %v1995 = vld [vmem:[%s6 + $0x188] sm:$0xf]
  %v1996 = vld [vmem:[%s6 + $0x18c] sm:$0xf]
  %v1997 = vld [vmem:[%s6 + $0x190] sm:$0xf]
  %v1998 = vld [vmem:[%s6 + $0x194] sm:$0xf]
  %v1999 = vld [vmem:[%s6 + $0x198] sm:$0xf]
  %v2000 = vld [vmem:[%s6 + $0x19c] sm:$0xf]
  %v2001 = vld [vmem:[%s6 + $0x1a0] sm:$0xf]
  %v2002 = vld [vmem:[%s6 + $0x1a4] sm:$0xf]
  %v2003 = vld [vmem:[%s6 + $0x1a8] sm:$0xf]
  %v2004 = vld [vmem:[%s6 + $0x1ac] sm:$0xf]
  %v2005 = vld [vmem:[%s6 + $0x1b0] sm:$0xf]
  %v2006 = vld [vmem:[%s6 + $0x1b4] sm:$0xf]
  %v2007 = vld [vmem:[%s6 + $0x1b8] sm:$0xf]
  %v2008 = vld [vmem:[%s6 + $0x1bc] sm:$0xf]
  %v2009 = vld [vmem:[%s6 + $0x1c0] sm:$0xf]
  %v2010 = vld [vmem:[%s6 + $0x1c4] sm:$0xf]
  %v2011 = vld [vmem:[%s6 + $0x1c8] sm:$0xf]
  %v2012 = vld [vmem:[%s6 + $0x1cc] sm:$0xf]
  %v2013 = vld [vmem:[%s6 + $0x1d0] sm:$0xf]
  %v2014 = vld [vmem:[%s6 + $0x1d4] sm:$0xf]
  %v2015 = vld [vmem:[%s6 + $0x1d8] sm:$0xf]
  %v2016 = vld [vmem:[%s6 + $0x1dc] sm:$0xf]
  %v2017 = vld [vmem:[%s6 + $0x1e0] sm:$0xf]
  %v2018 = vld [vmem:[%s6 + $0x1e4] sm:$0xf]
  %v2019 = vld [vmem:[%s6 + $0x1e8] sm:$0xf]
  %v2020 = vld [vmem:[%s6 + $0x1ec] sm:$0xf]
  %v2021 = vld [vmem:[%s6 + $0x1f0] sm:$0xf]
  %v2022 = vld [vmem:[%s6 + $0x1f4] sm:$0xf]
  %v2023 = vld [vmem:[%s6 + $0x1f8] sm:$0xf]
  %v2024 = vld [vmem:[%s6 + $0x1fc] sm:$0xf]
  %v2025 = vld [vmem:[%s6 + $0x200] sm:$0xf]
  %v2026 = vld [vmem:[%s6 + $0x204] sm:$0xf]
  %v2027 = vld [vmem:[%s6 + $0x208] sm:$0xf]
  %v2028 = vld [vmem:[%s6 + $0x20c] sm:$0xf]
  %v2029 = vld [vmem:[%s6 + $0x210] sm:$0xf]
  %v2030 = vld [vmem:[%s6 + $0x214] sm:$0xf]
  %v2031 = vld [vmem:[%s6 + $0x218] sm:$0xf]
  %v2032 = vld [vmem:[%s6 + $0x21c] sm:$0xf]
  %v2033 = vld [vmem:[%s6 + $0x220] sm:$0xf]
  %v2034 = vld [vmem:[%s6 + $0x224] sm:$0xf]
  %v2035 = vld [vmem:[%s6 + $0x228] sm:$0xf]
  %v2036 = vld [vmem:[%s6 + $0x22c] sm:$0xf]
  %v2037 = vld [vmem:[%s6 + $0x230] sm:$0xf]
  %v2038 = vld [vmem:[%s6 + $0x234] sm:$0xf]
  %v2039 = vld [vmem:[%s6 + $0x238] sm:$0xf]
  %v2040 = vld [vmem:[%s6 + $0x23c] sm:$0xf]
  %v2041 = vld [vmem:[%s6 + $0x240] sm:$0xf]
  %v2042 = vld [vmem:[%s6 + $0x244] sm:$0xf]
  %v2043 = vld [vmem:[%s6 + $0x248] sm:$0xf]
  %v2044 = vld [vmem:[%s6 + $0x24c] sm:$0xf]
  %v2045 = vld [vmem:[%s6 + $0x250] sm:$0xf]
  %v2046 = vld [vmem:[%s6 + $0x254] sm:$0xf]
  %v2047 = vld [vmem:[%s6 + $0x258] sm:$0xf]
  %v2048 = vld [vmem:[%s6 + $0x25c] sm:$0xf]
  %v2049 = vld [vmem:[%s6 + $0x260] sm:$0xf]
  %v2050 = vld [vmem:[%s6 + $0x264] sm:$0xf]
  %v2051 = vld [vmem:[%s6 + $0x268] sm:$0xf]
  %v2052 = vld [vmem:[%s6 + $0x26c] sm:$0xf]
  %v2053 = vld [vmem:[%s6 + $0x270] sm:$0xf]
  %v2054 = vld [vmem:[%s6 + $0x274] sm:$0xf]
  %v2055 = vld [vmem:[%s6 + $0x278] sm:$0xf]
  %v2056 = vld [vmem:[%s6 + $0x27c] sm:$0xf]
  %v2057 = vld [vmem:[%s6 + $0x280] sm:$0xf]
  %v2058 = vld [vmem:[%s6 + $0x284] sm:$0xf]
  %v2059 = vld [vmem:[%s6 + $0x288] sm:$0xf]
  %v2060 = vld [vmem:[%s6 + $0x28c] sm:$0xf]
  %v2061 = vld [vmem:[%s6 + $0x290] sm:$0xf]
  %v2062 = vld [vmem:[%s6 + $0x294] sm:$0xf]
  %v2063 = vld [vmem:[%s6 + $0x298] sm:$0xf]
  %v2064 = vld [vmem:[%s6 + $0x29c] sm:$0xf]
  %v2065 = vld [vmem:[%s6 + $0x2a0] sm:$0xf]
  %v2066 = vld [vmem:[%s6 + $0x2a4] sm:$0xf]
  %v2067 = vld [vmem:[%s6 + $0x2a8] sm:$0xf]
  %v2068 = vld [vmem:[%s6 + $0x2ac] sm:$0xf]
  %v2069 = vld [vmem:[%s6 + $0x2b0] sm:$0xf]
  %v2070 = vld [vmem:[%s6 + $0x2b4] sm:$0xf]
  %v2071 = vld [vmem:[%s6 + $0x2b8] sm:$0xf]
  %v2072 = vld [vmem:[%s6 + $0x2bc] sm:$0xf]
  %v2073 = vld [vmem:[%s6 + $0x2c0] sm:$0xf]
  %v2074 = vld [vmem:[%s6 + $0x2c4] sm:$0xf]
  %v2075 = vld [vmem:[%s6 + $0x2c8] sm:$0xf]
  %v2076 = vld [vmem:[%s6 + $0x2cc] sm:$0xf]
  %v2077 = vld [vmem:[%s6 + $0x2d0] sm:$0xf]
  %v2078 = vld [vmem:[%s6 + $0x2d4] sm:$0xf]
  %v2079 = vld [vmem:[%s6 + $0x2d8] sm:$0xf]
  %v2080 = vld [vmem:[%s6 + $0x2dc] sm:$0xf]
  %v2081 = vld [vmem:[%s6 + $0x2e0] sm:$0xf]
  %v2082 = vld [vmem:[%s6 + $0x2e4] sm:$0xf]
  %v2083 = vld [vmem:[%s6 + $0x2e8] sm:$0xf]
  %v2084 = vld [vmem:[%s6 + $0x2ec] sm:$0xf]
  %v2085 = vld [vmem:[%s6 + $0x2f0] sm:$0xf]
  %v2086 = vld [vmem:[%s6 + $0x2f4] sm:$0xf]
  %v2087 = vld [vmem:[%s6 + $0x2f8] sm:$0xf]
  %v2088 = vld [vmem:[%s6 + $0x2fc] sm:$0xf]
  %v2089 = vld [vmem:[%s6 + $0x300] sm:$0xf]
  %v2090 = vld [vmem:[%s6 + $0x304] sm:$0xf]
  %v2091 = vld [vmem:[%s6 + $0x308] sm:$0xf]
  %v2092 = vld [vmem:[%s6 + $0x30c] sm:$0xf]
  %v2093 = vld [vmem:[%s6 + $0x310] sm:$0xf]
  %v2094 = vld [vmem:[%s6 + $0x314] sm:$0xf]
  %v2095 = vld [vmem:[%s6 + $0x318] sm:$0xf]
  %v2096 = vld [vmem:[%s6 + $0x31c] sm:$0xf]
  %v2097 = vld [vmem:[%s6 + $0x320] sm:$0xf]
  %v2098 = vld [vmem:[%s6 + $0x324] sm:$0xf]
  %v2099 = vld [vmem:[%s6 + $0x328] sm:$0xf]
  %v2100 = vld [vmem:[%s6 + $0x32c] sm:$0xf]
  %v2101 = vld [vmem:[%s6 + $0x330] sm:$0xf]
  %v2102 = vld [vmem:[%s6 + $0x334] sm:$0xf]
  %v2103 = vld [vmem:[%s6 + $0x338] sm:$0xf]
  %v2104 = vld [vmem:[%s6 + $0x33c] sm:$0xf]
  %v2105 = vld [vmem:[%s6 + $0x340] sm:$0xf]
  %v2106 = vld [vmem:[%s6 + $0x344] sm:$0xf]
  %v2107 = vld [vmem:[%s6 + $0x348] sm:$0xf]
  %v2108 = vld [vmem:[%s6 + $0x34c] sm:$0xf]
  %v2109 = vld [vmem:[%s6 + $0x350] sm:$0xf]
  %v2110 = vld [vmem:[%s6 + $0x354] sm:$0xf]
  %v2111 = vld [vmem:[%s6 + $0x358] sm:$0xf]
  %v2112 = vld [vmem:[%s6 + $0x35c] sm:$0xf]
  %v2113 = vld [vmem:[%s6 + $0x360] sm:$0xf]
  %v2114 = vld [vmem:[%s6 + $0x364] sm:$0xf]
  %v2115 = vld [vmem:[%s6 + $0x368] sm:$0xf]
  %v2116 = vld [vmem:[%s6 + $0x36c] sm:$0xf]
  %v2117 = vld [vmem:[%s6 + $0x370] sm:$0xf]
  %v2118 = vld [vmem:[%s6 + $0x374] sm:$0xf]
  %v2119 = vld [vmem:[%s6 + $0x378] sm:$0xf]
  %v2120 = vld [vmem:[%s6 + $0x37c] sm:$0xf]
  %v2121 = vld [vmem:[%s6 + $0x380] sm:$0xf]
  %v2122 = vld [vmem:[%s6 + $0x384] sm:$0xf]
  %v2123 = vld [vmem:[%s6 + $0x388] sm:$0xf]
  %v2124 = vld [vmem:[%s6 + $0x38c] sm:$0xf]
  %v2125 = vld [vmem:[%s6 + $0x390] sm:$0xf]
  %v2126 = vld [vmem:[%s6 + $0x394] sm:$0xf]
  %v2127 = vld [vmem:[%s6 + $0x398] sm:$0xf]
  %v2128 = vld [vmem:[%s6 + $0x39c] sm:$0xf]
  %v2129 = vld [vmem:[%s6 + $0x3a0] sm:$0xf]
  %v2130 = vld [vmem:[%s6 + $0x3a4] sm:$0xf]
  %v2131 = vld [vmem:[%s6 + $0x3a8] sm:$0xf]
  %v2132 = vld [vmem:[%s6 + $0x3ac] sm:$0xf]
  %v2133 = vld [vmem:[%s6 + $0x3b0] sm:$0xf]
  %v2134 = vld [vmem:[%s6 + $0x3b4] sm:$0xf]
  %v2135 = vld [vmem:[%s6 + $0x3b8] sm:$0xf]
  %v2136 = vld [vmem:[%s6 + $0x3bc] sm:$0xf]
  %v2137 = vld [vmem:[%s6 + $0x3c0] sm:$0xf]
  %v2138 = vld [vmem:[%s6 + $0x3c4] sm:$0xf]
  %v2139 = vld [vmem:[%s6 + $0x3c8] sm:$0xf]
  %v2140 = vld [vmem:[%s6 + $0x3cc] sm:$0xf]
  %v2141 = vld [vmem:[%s6 + $0x3d0] sm:$0xf]
  %v2142 = vld [vmem:[%s6 + $0x3d4] sm:$0xf]
  %v2143 = vld [vmem:[%s6 + $0x3d8] sm:$0xf]
  %v2144 = vld [vmem:[%s6 + $0x3dc] sm:$0xf]
  %v2145 = vld [vmem:[%s6 + $0x3e0] sm:$0xf]
  %v2146 = vld [vmem:[%s6 + $0x3e4] sm:$0xf]
  %v2147 = vld [vmem:[%s6 + $0x3e8] sm:$0xf]
  %v2148 = vld [vmem:[%s6 + $0x3ec] sm:$0xf]
  %v2149 = vld [vmem:[%s6 + $0x3f0] sm:$0xf]
  %v2150 = vld [vmem:[%s6 + $0x3f4] sm:$0xf]
  %v2151 = vld [vmem:[%s6 + $0x3f8] sm:$0xf]
  %v2152 = vld [vmem:[%s6 + $0x3fc] sm:$0xf]
  %v2153 = vperm.slane %v141, 4
  %v2410 = vunpack.c.l.b16 %v1897
  %v2411 = vunpack.c.l.b16 %v1898
  %v2412 = vunpack.c.l.b16 %v1899
  %v2413 = vunpack.c.l.b16 %v1900
  %v2414 = vunpack.c.l.b16 %v1901
  %v2415 = vunpack.c.l.b16 %v1902
  %v2416 = vunpack.c.l.b16 %v1903
  %v2417 = vunpack.c.l.b16 %v1904
  %v2418 = vunpack.c.l.b16 %v1905
  %v2419 = vunpack.c.l.b16 %v1906
  %v2420 = vunpack.c.l.b16 %v1907
  %v2421 = vunpack.c.l.b16 %v1908
  %v2422 = vunpack.c.l.b16 %v1909
  %v2423 = vunpack.c.l.b16 %v1910
  %v2424 = vunpack.c.l.b16 %v1911
  %v2425 = vunpack.c.l.b16 %v1912
  %v2426 = vunpack.c.l.b16 %v1913
  %v2427 = vunpack.c.l.b16 %v1914
  %v2428 = vunpack.c.l.b16 %v1915
  %v2429 = vunpack.c.l.b16 %v1916
  %v2430 = vunpack.c.l.b16 %v1917
  %v2431 = vunpack.c.l.b16 %v1918
  %v2432 = vunpack.c.l.b16 %v1919
  %v2433 = vunpack.c.l.b16 %v1920
  %v2434 = vunpack.c.l.b16 %v1921
  %v2435 = vunpack.c.l.b16 %v1922
  %v2436 = vunpack.c.l.b16 %v1923
  %v2437 = vunpack.c.l.b16 %v1924
  %v2438 = vunpack.c.l.b16 %v1925
  %v2439 = vunpack.c.l.b16 %v1926
  %v2440 = vunpack.c.l.b16 %v1927
  %v2441 = vunpack.c.l.b16 %v1928
  %v2442 = vunpack.c.l.b16 %v1929
  %v2443 = vunpack.c.l.b16 %v1930
  %v2444 = vunpack.c.l.b16 %v1931
  %v2445 = vunpack.c.l.b16 %v1932
  %v2446 = vunpack.c.l.b16 %v1933
  %v2447 = vunpack.c.l.b16 %v1934
  %v2448 = vunpack.c.l.b16 %v1935
  %v2449 = vunpack.c.l.b16 %v1936
  %v2450 = vunpack.c.l.b16 %v1937
  %v2451 = vunpack.c.l.b16 %v1938
  %v2452 = vunpack.c.l.b16 %v1939
  %v2453 = vunpack.c.l.b16 %v1940
  %v2454 = vunpack.c.l.b16 %v1941
  %v2455 = vunpack.c.l.b16 %v1942
  %v2456 = vunpack.c.l.b16 %v1943
  %v2457 = vunpack.c.l.b16 %v1944
  %v2458 = vunpack.c.l.b16 %v1945
  %v2459 = vunpack.c.l.b16 %v1946
  %v2460 = vunpack.c.l.b16 %v1947
  %v2461 = vunpack.c.l.b16 %v1948
  %v2462 = vunpack.c.l.b16 %v1949
  %v2463 = vunpack.c.l.b16 %v1950
  %v2464 = vunpack.c.l.b16 %v1951
  %v2465 = vunpack.c.l.b16 %v1952
  %v2466 = vunpack.c.l.b16 %v1953
  %v2467 = vunpack.c.l.b16 %v1954
  %v2468 = vunpack.c.l.b16 %v1955
  %v2469 = vunpack.c.l.b16 %v1956
  %v2470 = vunpack.c.l.b16 %v1957
  %v2471 = vunpack.c.l.b16 %v1958
  %v2472 = vunpack.c.l.b16 %v1959
  %v2473 = vunpack.c.l.b16 %v1960
  %v2474 = vunpack.c.l.b16 %v1961
  %v2475 = vunpack.c.l.b16 %v1962
  %v2476 = vunpack.c.l.b16 %v1963
  %v2477 = vunpack.c.l.b16 %v1964
  %v2478 = vunpack.c.l.b16 %v1965
  %v2479 = vunpack.c.l.b16 %v1966
  %v2480 = vunpack.c.l.b16 %v1967
  %v2481 = vunpack.c.l.b16 %v1968
  %v2482 = vunpack.c.l.b16 %v1969
  %v2483 = vunpack.c.l.b16 %v1970
  %v2484 = vunpack.c.l.b16 %v1971
  %v2485 = vunpack.c.l.b16 %v1972
  %v2486 = vunpack.c.l.b16 %v1973
  %v2487 = vunpack.c.l.b16 %v1974
  %v2488 = vunpack.c.l.b16 %v1975
  %v2489 = vunpack.c.l.b16 %v1976
  %v2490 = vunpack.c.l.b16 %v1977
  %v2491 = vunpack.c.l.b16 %v1978
  %v2492 = vunpack.c.l.b16 %v1979
  %v2493 = vunpack.c.l.b16 %v1980
  %v2494 = vunpack.c.l.b16 %v1981
  %v2495 = vunpack.c.l.b16 %v1982
  %v2496 = vunpack.c.l.b16 %v1983
  %v2497 = vunpack.c.l.b16 %v1984
  %v2498 = vunpack.c.l.b16 %v1985
  %v2499 = vunpack.c.l.b16 %v1986
  %v2500 = vunpack.c.l.b16 %v1987
  %v2501 = vunpack.c.l.b16 %v1988
  %v2502 = vunpack.c.l.b16 %v1989
  %v2503 = vunpack.c.l.b16 %v1990
  %v2504 = vunpack.c.l.b16 %v1991
  %v2505 = vunpack.c.l.b16 %v1992
  %v2506 = vunpack.c.l.b16 %v1993
  %v2507 = vunpack.c.l.b16 %v1994
  %v2508 = vunpack.c.l.b16 %v1995
  %v2509 = vunpack.c.l.b16 %v1996
  %v2510 = vunpack.c.l.b16 %v1997
  %v2511 = vunpack.c.l.b16 %v1998
  %v2512 = vunpack.c.l.b16 %v1999
  %v2513 = vunpack.c.l.b16 %v2000
  %v2514 = vunpack.c.l.b16 %v2001
  %v2515 = vunpack.c.l.b16 %v2002
  %v2516 = vunpack.c.l.b16 %v2003
  %v2517 = vunpack.c.l.b16 %v2004
  %v2518 = vunpack.c.l.b16 %v2005
  %v2519 = vunpack.c.l.b16 %v2006
  %v2520 = vunpack.c.l.b16 %v2007
  %v2521 = vunpack.c.l.b16 %v2008
  %v2522 = vunpack.c.l.b16 %v2009
  %v2523 = vunpack.c.l.b16 %v2010
  %v2524 = vunpack.c.l.b16 %v2011
  %v2525 = vunpack.c.l.b16 %v2012
  %v2526 = vunpack.c.l.b16 %v2013
  %v2527 = vunpack.c.l.b16 %v2014
  %v2528 = vunpack.c.l.b16 %v2015
  %v2529 = vunpack.c.l.b16 %v2016
  %v2530 = vunpack.c.l.b16 %v2017
  %v2531 = vunpack.c.l.b16 %v2018
  %v2532 = vunpack.c.l.b16 %v2019
  %v2533 = vunpack.c.l.b16 %v2020
  %v2534 = vunpack.c.l.b16 %v2021
  %v2535 = vunpack.c.l.b16 %v2022
  %v2536 = vunpack.c.l.b16 %v2023
  %v2537 = vunpack.c.l.b16 %v2024
  %v2538 = vunpack.c.l.b16 %v2025
  %v2539 = vunpack.c.l.b16 %v2026
  %v2540 = vunpack.c.l.b16 %v2027
  %v2541 = vunpack.c.l.b16 %v2028
  %v2542 = vunpack.c.l.b16 %v2029
  %v2543 = vunpack.c.l.b16 %v2030
  %v2544 = vunpack.c.l.b16 %v2031
  %v2545 = vunpack.c.l.b16 %v2032
  %v2546 = vunpack.c.l.b16 %v2033
  %v2547 = vunpack.c.l.b16 %v2034
  %v2548 = vunpack.c.l.b16 %v2035
  %v2549 = vunpack.c.l.b16 %v2036
  %v2550 = vunpack.c.l.b16 %v2037
  %v2551 = vunpack.c.l.b16 %v2038
  %v2552 = vunpack.c.l.b16 %v2039
  %v2553 = vunpack.c.l.b16 %v2040
  %v2554 = vunpack.c.l.b16 %v2041
  %v2555 = vunpack.c.l.b16 %v2042
  %v2556 = vunpack.c.l.b16 %v2043
  %v2557 = vunpack.c.l.b16 %v2044
  %v2558 = vunpack.c.l.b16 %v2045
  %v2559 = vunpack.c.l.b16 %v2046
  %v2560 = vunpack.c.l.b16 %v2047
  %v2561 = vunpack.c.l.b16 %v2048
  %v2562 = vunpack.c.l.b16 %v2049
  %v2563 = vunpack.c.l.b16 %v2050
  %v2564 = vunpack.c.l.b16 %v2051
  %v2565 = vunpack.c.l.b16 %v2052
  %v2566 = vunpack.c.l.b16 %v2053
  %v2567 = vunpack.c.l.b16 %v2054
  %v2568 = vunpack.c.l.b16 %v2055
  %v2569 = vunpack.c.l.b16 %v2056
  %v2570 = vunpack.c.l.b16 %v2057
  %v2571 = vunpack.c.l.b16 %v2058
  %v2572 = vunpack.c.l.b16 %v2059
  %v2573 = vunpack.c.l.b16 %v2060
  %v2574 = vunpack.c.l.b16 %v2061
  %v2575 = vunpack.c.l.b16 %v2062
  %v2576 = vunpack.c.l.b16 %v2063
  %v2577 = vunpack.c.l.b16 %v2064
  %v2578 = vunpack.c.l.b16 %v2065
  %v2579 = vunpack.c.l.b16 %v2066
  %v2580 = vunpack.c.l.b16 %v2067
  %v2581 = vunpack.c.l.b16 %v2068
  %v2582 = vunpack.c.l.b16 %v2069
  %v2583 = vunpack.c.l.b16 %v2070
  %v2584 = vunpack.c.l.b16 %v2071
  %v2585 = vunpack.c.l.b16 %v2072
  %v2586 = vunpack.c.l.b16 %v2073
  %v2587 = vunpack.c.l.b16 %v2074
  %v2588 = vunpack.c.l.b16 %v2075
  %v2589 = vunpack.c.l.b16 %v2076
  %v2590 = vunpack.c.l.b16 %v2077
  %v2591 = vunpack.c.l.b16 %v2078
  %v2592 = vunpack.c.l.b16 %v2079
  %v2593 = vunpack.c.l.b16 %v2080
  %v2594 = vunpack.c.l.b16 %v2081
  %v2595 = vunpack.c.l.b16 %v2082
  %v2596 = vunpack.c.l.b16 %v2083
  %v2597 = vunpack.c.l.b16 %v2084
  %v2598 = vunpack.c.l.b16 %v2085
  %v2599 = vunpack.c.l.b16 %v2086
  %v2600 = vunpack.c.l.b16 %v2087
  %v2601 = vunpack.c.l.b16 %v2088
  %v2602 = vunpack.c.l.b16 %v2089
  %v2603 = vunpack.c.l.b16 %v2090
  %v2604 = vunpack.c.l.b16 %v2091
  %v2605 = vunpack.c.l.b16 %v2092
  %v2606 = vunpack.c.l.b16 %v2093
  %v2607 = vunpack.c.l.b16 %v2094
  %v2608 = vunpack.c.l.b16 %v2095
  %v2609 = vunpack.c.l.b16 %v2096
  %v2610 = vunpack.c.l.b16 %v2097
  %v2611 = vunpack.c.l.b16 %v2098
  %v2612 = vunpack.c.l.b16 %v2099
  %v2613 = vunpack.c.l.b16 %v2100
  %v2614 = vunpack.c.l.b16 %v2101
  %v2615 = vunpack.c.l.b16 %v2102
  %v2616 = vunpack.c.l.b16 %v2103
  %v2617 = vunpack.c.l.b16 %v2104
  %v2618 = vunpack.c.l.b16 %v2105
  %v2619 = vunpack.c.l.b16 %v2106
  %v2620 = vunpack.c.l.b16 %v2107
  %v2621 = vunpack.c.l.b16 %v2108
  %v2622 = vunpack.c.l.b16 %v2109
  %v2623 = vunpack.c.l.b16 %v2110
  %v2624 = vunpack.c.l.b16 %v2111
  %v2625 = vunpack.c.l.b16 %v2112
  %v2626 = vunpack.c.l.b16 %v2113
  %v2627 = vunpack.c.l.b16 %v2114
  %v2628 = vunpack.c.l.b16 %v2115
  %v2629 = vunpack.c.l.b16 %v2116
  %v2630 = vunpack.c.l.b16 %v2117
  %v2631 = vunpack.c.l.b16 %v2118
  %v2632 = vunpack.c.l.b16 %v2119
  %v2633 = vunpack.c.l.b16 %v2120
  %v2634 = vunpack.c.l.b16 %v2121
  %v2635 = vunpack.c.l.b16 %v2122
  %v2636 = vunpack.c.l.b16 %v2123
  %v2637 = vunpack.c.l.b16 %v2124
  %v2638 = vunpack.c.l.b16 %v2125
  %v2639 = vunpack.c.l.b16 %v2126
  %v2640 = vunpack.c.l.b16 %v2127
  %v2641 = vunpack.c.l.b16 %v2128
  %v2642 = vunpack.c.l.b16 %v2129
  %v2643 = vunpack.c.l.b16 %v2130
  %v2644 = vunpack.c.l.b16 %v2131
  %v2645 = vunpack.c.l.b16 %v2132
  %v2646 = vunpack.c.l.b16 %v2133
  %v2647 = vunpack.c.l.b16 %v2134
  %v2648 = vunpack.c.l.b16 %v2135
  %v2649 = vunpack.c.l.b16 %v2136
  %v2650 = vunpack.c.l.b16 %v2137
  %v2651 = vunpack.c.l.b16 %v2138
  %v2652 = vunpack.c.l.b16 %v2139
  %v2653 = vunpack.c.l.b16 %v2140
  %v2654 = vunpack.c.l.b16 %v2141
  %v2655 = vunpack.c.l.b16 %v2142
  %v2656 = vunpack.c.l.b16 %v2143
  %v2657 = vunpack.c.l.b16 %v2144
  %v2658 = vunpack.c.l.b16 %v2145
  %v2659 = vunpack.c.l.b16 %v2146
  %v2660 = vunpack.c.l.b16 %v2147
  %v2661 = vunpack.c.l.b16 %v2148
  %v2662 = vunpack.c.l.b16 %v2149
  %v2663 = vunpack.c.l.b16 %v2150
  %v2664 = vunpack.c.l.b16 %v2151
  %v2665 = vunpack.c.l.b16 %v2152
  %v2666 = vpack.c.b16 %v2411, %v2410
  %v2667 = vpack.c.b16 %v2413, %v2412
  %v2668 = vpack.c.b16 %v2415, %v2414
  %v2669 = vpack.c.b16 %v2417, %v2416
  %v2670 = vpack.c.b16 %v2419, %v2418
  %v2671 = vpack.c.b16 %v2421, %v2420
  %v2672 = vpack.c.b16 %v2423, %v2422
  %v2673 = vpack.c.b16 %v2425, %v2424
  %v2674 = vpack.c.b16 %v2427, %v2426
  %v2675 = vpack.c.b16 %v2429, %v2428
  %v2676 = vpack.c.b16 %v2431, %v2430
  %v2677 = vpack.c.b16 %v2433, %v2432
  %v2678 = vpack.c.b16 %v2435, %v2434
  %v2679 = vpack.c.b16 %v2437, %v2436
  %v2680 = vpack.c.b16 %v2439, %v2438
  %v2681 = vpack.c.b16 %v2441, %v2440
  %v2682 = vpack.c.b16 %v2443, %v2442
  %v2683 = vpack.c.b16 %v2445, %v2444
  %v2684 = vpack.c.b16 %v2447, %v2446
  %v2685 = vpack.c.b16 %v2449, %v2448
  %v2686 = vpack.c.b16 %v2451, %v2450
  %v2687 = vpack.c.b16 %v2453, %v2452
  %v2688 = vpack.c.b16 %v2455, %v2454
  %v2689 = vpack.c.b16 %v2457, %v2456
  %v2690 = vpack.c.b16 %v2459, %v2458
  %v2691 = vpack.c.b16 %v2461, %v2460
  %v2692 = vpack.c.b16 %v2463, %v2462
  %v2693 = vpack.c.b16 %v2465, %v2464
  %v2694 = vpack.c.b16 %v2467, %v2466
  %v2695 = vpack.c.b16 %v2469, %v2468
  %v2696 = vpack.c.b16 %v2471, %v2470
  %v2697 = vpack.c.b16 %v2473, %v2472
  %v2698 = vpack.c.b16 %v2475, %v2474
  %v2699 = vpack.c.b16 %v2477, %v2476
  %v2700 = vpack.c.b16 %v2479, %v2478
  %v2701 = vpack.c.b16 %v2481, %v2480
  %v2702 = vpack.c.b16 %v2483, %v2482
  %v2703 = vpack.c.b16 %v2485, %v2484
  %v2704 = vpack.c.b16 %v2487, %v2486
  %v2705 = vpack.c.b16 %v2489, %v2488
  %v2706 = vpack.c.b16 %v2491, %v2490
  %v2707 = vpack.c.b16 %v2493, %v2492
  %v2708 = vpack.c.b16 %v2495, %v2494
  %v2709 = vpack.c.b16 %v2497, %v2496
  %v2710 = vpack.c.b16 %v2499, %v2498
  %v2711 = vpack.c.b16 %v2501, %v2500
  %v2712 = vpack.c.b16 %v2503, %v2502
  %v2713 = vpack.c.b16 %v2505, %v2504
  %v2714 = vpack.c.b16 %v2507, %v2506
  %v2715 = vpack.c.b16 %v2509, %v2508
  %v2716 = vpack.c.b16 %v2511, %v2510
  %v2717 = vpack.c.b16 %v2513, %v2512
  %v2718 = vpack.c.b16 %v2515, %v2514
  %v2719 = vpack.c.b16 %v2517, %v2516
  %v2720 = vpack.c.b16 %v2519, %v2518
  %v2721 = vpack.c.b16 %v2521, %v2520
  %v2722 = vpack.c.b16 %v2523, %v2522
  %v2723 = vpack.c.b16 %v2525, %v2524
  %v2724 = vpack.c.b16 %v2527, %v2526
  %v2725 = vpack.c.b16 %v2529, %v2528
  %v2726 = vpack.c.b16 %v2531, %v2530
  %v2727 = vpack.c.b16 %v2533, %v2532
  %v2728 = vpack.c.b16 %v2535, %v2534
  %v2729 = vpack.c.b16 %v2537, %v2536
  %v2730 = vpack.c.b16 %v2539, %v2538
  %v2731 = vpack.c.b16 %v2541, %v2540
  %v2732 = vpack.c.b16 %v2543, %v2542
  %v2733 = vpack.c.b16 %v2545, %v2544
  %v2734 = vpack.c.b16 %v2547, %v2546
  %v2735 = vpack.c.b16 %v2549, %v2548
  %v2736 = vpack.c.b16 %v2551, %v2550
  %v2737 = vpack.c.b16 %v2553, %v2552
  %v2738 = vpack.c.b16 %v2555, %v2554
  %v2739 = vpack.c.b16 %v2557, %v2556
  %v2740 = vpack.c.b16 %v2559, %v2558
  %v2741 = vpack.c.b16 %v2561, %v2560
  %v2742 = vpack.c.b16 %v2563, %v2562
  %v2743 = vpack.c.b16 %v2565, %v2564
  %v2744 = vpack.c.b16 %v2567, %v2566
  %v2745 = vpack.c.b16 %v2569, %v2568
  %v2746 = vpack.c.b16 %v2571, %v2570
  %v2747 = vpack.c.b16 %v2573, %v2572
  %v2748 = vpack.c.b16 %v2575, %v2574
  %v2749 = vpack.c.b16 %v2577, %v2576
  %v2750 = vpack.c.b16 %v2579, %v2578
  %v2751 = vpack.c.b16 %v2581, %v2580
  %v2752 = vpack.c.b16 %v2583, %v2582
  %v2753 = vpack.c.b16 %v2585, %v2584
  %v2754 = vpack.c.b16 %v2587, %v2586
  %v2755 = vpack.c.b16 %v2589, %v2588
  %v2756 = vpack.c.b16 %v2591, %v2590
  %v2757 = vpack.c.b16 %v2593, %v2592
  %v2758 = vpack.c.b16 %v2595, %v2594
  %v2759 = vpack.c.b16 %v2597, %v2596
  %v2760 = vpack.c.b16 %v2599, %v2598
  %v2761 = vpack.c.b16 %v2601, %v2600
  %v2762 = vpack.c.b16 %v2603, %v2602
  %v2763 = vpack.c.b16 %v2605, %v2604
  %v2764 = vpack.c.b16 %v2607, %v2606
  %v2765 = vpack.c.b16 %v2609, %v2608
  %v2766 = vpack.c.b16 %v2611, %v2610
  %v2767 = vpack.c.b16 %v2613, %v2612
  %v2768 = vpack.c.b16 %v2615, %v2614
  %v2769 = vpack.c.b16 %v2617, %v2616
  %v2770 = vpack.c.b16 %v2619, %v2618
  %v2771 = vpack.c.b16 %v2621, %v2620
  %v2772 = vpack.c.b16 %v2623, %v2622
  %v2773 = vpack.c.b16 %v2625, %v2624
  %v2774 = vpack.c.b16 %v2627, %v2626
  %v2775 = vpack.c.b16 %v2629, %v2628
  %v2776 = vpack.c.b16 %v2631, %v2630
  %v2777 = vpack.c.b16 %v2633, %v2632
  %v2778 = vpack.c.b16 %v2635, %v2634
  %v2779 = vpack.c.b16 %v2637, %v2636
  %v2780 = vpack.c.b16 %v2639, %v2638
  %v2781 = vpack.c.b16 %v2641, %v2640
  %v2782 = vpack.c.b16 %v2643, %v2642
  %v2783 = vpack.c.b16 %v2645, %v2644
  %v2784 = vpack.c.b16 %v2647, %v2646
  %v2785 = vpack.c.b16 %v2649, %v2648
  %v2786 = vpack.c.b16 %v2651, %v2650
  %v2787 = vpack.c.b16 %v2653, %v2652
  %v2788 = vpack.c.b16 %v2655, %v2654
  %v2789 = vpack.c.b16 %v2657, %v2656
  %v2790 = vpack.c.b16 %v2659, %v2658
  %v2791 = vpack.c.b16 %v2661, %v2660
  %v2792 = vpack.c.b16 %v2663, %v2662
  %v2793 = vpack.c.b16 %v2665, %v2664
  %2922 = vmatpush.bf16.msra.mxu0 %v2673
  %2923 = vmatpush.bf16.msra.mxu0 %v2672
  %2924 = vmatpush.bf16.msra.mxu0 %v2671
  %2925 = vmatpush.bf16.msra.mxu0 %v2670
  %2926 = vmatpush.bf16.msra.mxu0 %v2669
  %2927 = vmatpush.bf16.msra.mxu0 %v2668
  %2928 = vmatpush.bf16.msra.mxu0 %v2667
  %2929 = vmatpush.bf16.msra.mxu0 %v2666
  %2930 = vmatmul.bf16.gmra.mxu0 %v1865
  %v2931 = vpop.f32.mrf.mxu0
  %v2932 = vadd.f32 %v2153, %v2931
  %v2933 = vpop.f32.mrf.mxu0
  %v2934 = vadd.f32 %v2153, %v2933
  %2935 = vmatmul.bf16.gmra.mxu0 %v1881
  %v2936 = vpop.f32.mrf.mxu0
  %v2937 = vadd.f32 %v2153, %v2936
  %v2938 = vpop.f32.mrf.mxu0
  %v2939 = vadd.f32 %v2153, %v2938
  %2940 = vdwg.mxu0
  %2941 = vmatpush.bf16.msra.mxu0 %v2681
  %2942 = vmatpush.bf16.msra.mxu0 %v2680
  %2943 = vmatpush.bf16.msra.mxu0 %v2679
  %2944 = vmatpush.bf16.msra.mxu0 %v2678
  %2945 = vmatpush.bf16.msra.mxu0 %v2677
  %2946 = vmatpush.bf16.msra.mxu0 %v2676
  %2947 = vmatpush.bf16.msra.mxu0 %v2675
  %2948 = vmatpush.bf16.msra.mxu0 %v2674
  %2949 = vmatmul.bf16.gmra.mxu0 %v1866
  %v2950 = vpop.f32.mrf.mxu0
  %v2951 = vadd.f32 %v2932, %v2950
  %v2952 = vpop.f32.mrf.mxu0
  %v2953 = vadd.f32 %v2934, %v2952
  %2954 = vmatmul.bf16.gmra.mxu0 %v1882
  %v2955 = vpop.f32.mrf.mxu0
  %v2956 = vadd.f32 %v2937, %v2955
  %v2957 = vpop.f32.mrf.mxu0
  %v2958 = vadd.f32 %v2939, %v2957
  %2959 = vdwg.mxu0
  %2960 = vmatpush.bf16.msra.mxu0 %v2689
  %2961 = vmatpush.bf16.msra.mxu0 %v2688
  %2962 = vmatpush.bf16.msra.mxu0 %v2687
  %2963 = vmatpush.bf16.msra.mxu0 %v2686
  %2964 = vmatpush.bf16.msra.mxu0 %v2685
  %2965 = vmatpush.bf16.msra.mxu0 %v2684
  %2966 = vmatpush.bf16.msra.mxu0 %v2683
  %2967 = vmatpush.bf16.msra.mxu0 %v2682
  %2968 = vmatmul.bf16.gmra.mxu0 %v1867
  %v2969 = vpop.f32.mrf.mxu0
  %v2970 = vadd.f32 %v2951, %v2969
  %v2971 = vpop.f32.mrf.mxu0
  %v2972 = vadd.f32 %v2953, %v2971
  %2973 = vmatmul.bf16.gmra.mxu0 %v1883
  %v2974 = vpop.f32.mrf.mxu0
  %v2975 = vadd.f32 %v2956, %v2974
  %v2976 = vpop.f32.mrf.mxu0
  %v2977 = vadd.f32 %v2958, %v2976
  %2978 = vdwg.mxu0
  %2979 = vmatpush.bf16.msra.mxu0 %v2697
  %2980 = vmatpush.bf16.msra.mxu0 %v2696
  %2981 = vmatpush.bf16.msra.mxu0 %v2695
  %2982 = vmatpush.bf16.msra.mxu0 %v2694
  %2983 = vmatpush.bf16.msra.mxu0 %v2693
  %2984 = vmatpush.bf16.msra.mxu0 %v2692
  %2985 = vmatpush.bf16.msra.mxu0 %v2691
  %2986 = vmatpush.bf16.msra.mxu0 %v2690
  %2987 = vmatmul.bf16.gmra.mxu0 %v1868
  %v2988 = vpop.f32.mrf.mxu0
  %v2989 = vadd.f32 %v2970, %v2988
  %v2990 = vpop.f32.mrf.mxu0
  %v2991 = vadd.f32 %v2972, %v2990
  %2992 = vmatmul.bf16.gmra.mxu0 %v1884
  %v2993 = vpop.f32.mrf.mxu0
  %v2994 = vadd.f32 %v2975, %v2993
  %v2995 = vpop.f32.mrf.mxu0
  %v2996 = vadd.f32 %v2977, %v2995
  %2997 = vdwg.mxu0
  %2998 = vmatpush.bf16.msra.mxu0 %v2705
  %2999 = vmatpush.bf16.msra.mxu0 %v2704
  %3000 = vmatpush.bf16.msra.mxu0 %v2703
  %3001 = vmatpush.bf16.msra.mxu0 %v2702
  %3002 = vmatpush.bf16.msra.mxu0 %v2701
  %3003 = vmatpush.bf16.msra.mxu0 %v2700
  %3004 = vmatpush.bf16.msra.mxu0 %v2699
  %3005 = vmatpush.bf16.msra.mxu0 %v2698
  %3006 = vmatmul.bf16.gmra.mxu0 %v1869
  %v3007 = vpop.f32.mrf.mxu0
  %v3008 = vadd.f32 %v2989, %v3007
  %v3009 = vpop.f32.mrf.mxu0
  %v3010 = vadd.f32 %v2991, %v3009
  %3011 = vmatmul.bf16.gmra.mxu0 %v1885
  %v3012 = vpop.f32.mrf.mxu0
  %v3013 = vadd.f32 %v2994, %v3012
  %v3014 = vpop.f32.mrf.mxu0
  %v3015 = vadd.f32 %v2996, %v3014
  %3016 = vdwg.mxu0
  %3017 = vmatpush.bf16.msra.mxu0 %v2713
  %3018 = vmatpush.bf16.msra.mxu0 %v2712
  %3019 = vmatpush.bf16.msra.mxu0 %v2711
  %3020 = vmatpush.bf16.msra.mxu0 %v2710
  %3021 = vmatpush.bf16.msra.mxu0 %v2709
  %3022 = vmatpush.bf16.msra.mxu0 %v2708
  %3023 = vmatpush.bf16.msra.mxu0 %v2707
  %3024 = vmatpush.bf16.msra.mxu0 %v2706
  %3025 = vmatmul.bf16.gmra.mxu0 %v1870
  %v3026 = vpop.f32.mrf.mxu0
  %v3027 = vadd.f32 %v3008, %v3026
  %v3028 = vpop.f32.mrf.mxu0
  %v3029 = vadd.f32 %v3010, %v3028
  %3030 = vmatmul.bf16.gmra.mxu0 %v1886
  %v3031 = vpop.f32.mrf.mxu0
  %v3032 = vadd.f32 %v3013, %v3031
  %v3033 = vpop.f32.mrf.mxu0
  %v3034 = vadd.f32 %v3015, %v3033
  %3035 = vdwg.mxu0
  %3036 = vmatpush.bf16.msra.mxu0 %v2721
  %3037 = vmatpush.bf16.msra.mxu0 %v2720
  %3038 = vmatpush.bf16.msra.mxu0 %v2719
  %3039 = vmatpush.bf16.msra.mxu0 %v2718
  %3040 = vmatpush.bf16.msra.mxu0 %v2717
  %3041 = vmatpush.bf16.msra.mxu0 %v2716
  %3042 = vmatpush.bf16.msra.mxu0 %v2715
  %3043 = vmatpush.bf16.msra.mxu0 %v2714
  %3044 = vmatmul.bf16.gmra.mxu0 %v1871
  %v3045 = vpop.f32.mrf.mxu0
  %v3046 = vadd.f32 %v3027, %v3045
  %v3047 = vpop.f32.mrf.mxu0
  %v3048 = vadd.f32 %v3029, %v3047
  %3049 = vmatmul.bf16.gmra.mxu0 %v1887
  %v3050 = vpop.f32.mrf.mxu0
  %v3051 = vadd.f32 %v3032, %v3050
  %v3052 = vpop.f32.mrf.mxu0
  %v3053 = vadd.f32 %v3034, %v3052
  %3054 = vdwg.mxu0
  %3055 = vmatpush.bf16.msra.mxu0 %v2729
  %3056 = vmatpush.bf16.msra.mxu0 %v2728
  %3057 = vmatpush.bf16.msra.mxu0 %v2727
  %3058 = vmatpush.bf16.msra.mxu0 %v2726
  %3059 = vmatpush.bf16.msra.mxu0 %v2725
  %3060 = vmatpush.bf16.msra.mxu0 %v2724
  %3061 = vmatpush.bf16.msra.mxu0 %v2723
  %3062 = vmatpush.bf16.msra.mxu0 %v2722
  %3063 = vmatmul.bf16.gmra.mxu0 %v1872
  %v3064 = vpop.f32.mrf.mxu0
  %v3065 = vadd.f32 %v3046, %v3064
  %v3066 = vpop.f32.mrf.mxu0
  %v3067 = vadd.f32 %v3048, %v3066
  %3068 = vmatmul.bf16.gmra.mxu0 %v1888
  %v3069 = vpop.f32.mrf.mxu0
  %v3070 = vadd.f32 %v3051, %v3069
  %v3071 = vpop.f32.mrf.mxu0
  %v3072 = vadd.f32 %v3053, %v3071
  %3073 = vdwg.mxu0
  %3074 = vmatpush.bf16.msra.mxu0 %v2737
  %3075 = vmatpush.bf16.msra.mxu0 %v2736
  %3076 = vmatpush.bf16.msra.mxu0 %v2735
  %3077 = vmatpush.bf16.msra.mxu0 %v2734
  %3078 = vmatpush.bf16.msra.mxu0 %v2733
  %3079 = vmatpush.bf16.msra.mxu0 %v2732
  %3080 = vmatpush.bf16.msra.mxu0 %v2731
  %3081 = vmatpush.bf16.msra.mxu0 %v2730
  %3082 = vmatmul.bf16.gmra.mxu0 %v1873
  %v3083 = vpop.f32.mrf.mxu0
  %v3084 = vadd.f32 %v3065, %v3083
  %v3085 = vpop.f32.mrf.mxu0
  %v3086 = vadd.f32 %v3067, %v3085
  %3087 = vmatmul.bf16.gmra.mxu0 %v1889
  %v3088 = vpop.f32.mrf.mxu0
  %v3089 = vadd.f32 %v3070, %v3088
  %v3090 = vpop.f32.mrf.mxu0
  %v3091 = vadd.f32 %v3072, %v3090
  %3092 = vdwg.mxu0
  %3093 = vmatpush.bf16.msra.mxu0 %v2745
  %3094 = vmatpush.bf16.msra.mxu0 %v2744
  %3095 = vmatpush.bf16.msra.mxu0 %v2743
  %3096 = vmatpush.bf16.msra.mxu0 %v2742
  %3097 = vmatpush.bf16.msra.mxu0 %v2741
  %3098 = vmatpush.bf16.msra.mxu0 %v2740
  %3099 = vmatpush.bf16.msra.mxu0 %v2739
  %3100 = vmatpush.bf16.msra.mxu0 %v2738
  %3101 = vmatmul.bf16.gmra.mxu0 %v1874
  %v3102 = vpop.f32.mrf.mxu0
  %v3103 = vadd.f32 %v3084, %v3102
  %v3104 = vpop.f32.mrf.mxu0
  %v3105 = vadd.f32 %v3086, %v3104
  %3106 = vmatmul.bf16.gmra.mxu0 %v1890
  %v3107 = vpop.f32.mrf.mxu0
  %v3108 = vadd.f32 %v3089, %v3107
  %v3109 = vpop.f32.mrf.mxu0
  %v3110 = vadd.f32 %v3091, %v3109
  %3111 = vdwg.mxu0
  %3112 = vmatpush.bf16.msra.mxu0 %v2753
  %3113 = vmatpush.bf16.msra.mxu0 %v2752
  %3114 = vmatpush.bf16.msra.mxu0 %v2751
  %3115 = vmatpush.bf16.msra.mxu0 %v2750
  %3116 = vmatpush.bf16.msra.mxu0 %v2749
  %3117 = vmatpush.bf16.msra.mxu0 %v2748
  %3118 = vmatpush.bf16.msra.mxu0 %v2747
  %3119 = vmatpush.bf16.msra.mxu0 %v2746
  %3120 = vmatmul.bf16.gmra.mxu0 %v1875
  %v3121 = vpop.f32.mrf.mxu0
  %v3122 = vadd.f32 %v3103, %v3121
  %v3123 = vpop.f32.mrf.mxu0
  %v3124 = vadd.f32 %v3105, %v3123
  %3125 = vmatmul.bf16.gmra.mxu0 %v1891
  %v3126 = vpop.f32.mrf.mxu0
  %v3127 = vadd.f32 %v3108, %v3126
  %v3128 = vpop.f32.mrf.mxu0
  %v3129 = vadd.f32 %v3110, %v3128
  %3130 = vdwg.mxu0
  %3131 = vmatpush.bf16.msra.mxu0 %v2761
  %3132 = vmatpush.bf16.msra.mxu0 %v2760
  %3133 = vmatpush.bf16.msra.mxu0 %v2759
  %3134 = vmatpush.bf16.msra.mxu0 %v2758
  %3135 = vmatpush.bf16.msra.mxu0 %v2757
  %3136 = vmatpush.bf16.msra.mxu0 %v2756
  %3137 = vmatpush.bf16.msra.mxu0 %v2755
  %3138 = vmatpush.bf16.msra.mxu0 %v2754
  %3139 = vmatmul.bf16.gmra.mxu0 %v1876
  %v3140 = vpop.f32.mrf.mxu0
  %v3141 = vadd.f32 %v3122, %v3140
  %v3142 = vpop.f32.mrf.mxu0
  %v3143 = vadd.f32 %v3124, %v3142
  %3144 = vmatmul.bf16.gmra.mxu0 %v1892
  %v3145 = vpop.f32.mrf.mxu0
  %v3146 = vadd.f32 %v3127, %v3145
  %v3147 = vpop.f32.mrf.mxu0
  %v3148 = vadd.f32 %v3129, %v3147
  %3149 = vdwg.mxu0
  %3150 = vmatpush.bf16.msra.mxu0 %v2769
  %3151 = vmatpush.bf16.msra.mxu0 %v2768
  %3152 = vmatpush.bf16.msra.mxu0 %v2767
  %3153 = vmatpush.bf16.msra.mxu0 %v2766
  %3154 = vmatpush.bf16.msra.mxu0 %v2765
  %3155 = vmatpush.bf16.msra.mxu0 %v2764
  %3156 = vmatpush.bf16.msra.mxu0 %v2763
  %3157 = vmatpush.bf16.msra.mxu0 %v2762
  %3158 = vmatmul.bf16.gmra.mxu0 %v1877
  %v3159 = vpop.f32.mrf.mxu0
  %v3160 = vadd.f32 %v3141, %v3159
  %v3161 = vpop.f32.mrf.mxu0
  %v3162 = vadd.f32 %v3143, %v3161
  %3163 = vmatmul.bf16.gmra.mxu0 %v1893
  %v3164 = vpop.f32.mrf.mxu0
  %v3165 = vadd.f32 %v3146, %v3164
  %v3166 = vpop.f32.mrf.mxu0
  %v3167 = vadd.f32 %v3148, %v3166
  %3168 = vdwg.mxu0
  %3169 = vmatpush.bf16.msra.mxu0 %v2777
  %3170 = vmatpush.bf16.msra.mxu0 %v2776
  %3171 = vmatpush.bf16.msra.mxu0 %v2775
  %3172 = vmatpush.bf16.msra.mxu0 %v2774
  %3173 = vmatpush.bf16.msra.mxu0 %v2773
  %3174 = vmatpush.bf16.msra.mxu0 %v2772
  %3175 = vmatpush.bf16.msra.mxu0 %v2771
  %3176 = vmatpush.bf16.msra.mxu0 %v2770
  %3177 = vmatmul.bf16.gmra.mxu0 %v1878
  %v3178 = vpop.f32.mrf.mxu0
  %v3179 = vadd.f32 %v3160, %v3178
  %v3180 = vpop.f32.mrf.mxu0
  %v3181 = vadd.f32 %v3162, %v3180
  %3182 = vmatmul.bf16.gmra.mxu0 %v1894
  %v3183 = vpop.f32.mrf.mxu0
  %v3184 = vadd.f32 %v3165, %v3183
  %v3185 = vpop.f32.mrf.mxu0
  %v3186 = vadd.f32 %v3167, %v3185
  %3187 = vdwg.mxu0
  %3188 = vmatpush.bf16.msra.mxu0 %v2785
  %3189 = vmatpush.bf16.msra.mxu0 %v2784
  %3190 = vmatpush.bf16.msra.mxu0 %v2783
  %3191 = vmatpush.bf16.msra.mxu0 %v2782
  %3192 = vmatpush.bf16.msra.mxu0 %v2781
  %3193 = vmatpush.bf16.msra.mxu0 %v2780
  %3194 = vmatpush.bf16.msra.mxu0 %v2779
  %3195 = vmatpush.bf16.msra.mxu0 %v2778
  %3196 = vmatmul.bf16.gmra.mxu0 %v1879
  %v3197 = vpop.f32.mrf.mxu0
  %v3198 = vadd.f32 %v3179, %v3197
  %v3199 = vpop.f32.mrf.mxu0
  %v3200 = vadd.f32 %v3181, %v3199
  %3201 = vmatmul.bf16.gmra.mxu0 %v1895
  %v3202 = vpop.f32.mrf.mxu0
  %v3203 = vadd.f32 %v3184, %v3202
  %v3204 = vpop.f32.mrf.mxu0
  %v3205 = vadd.f32 %v3186, %v3204
  %3206 = vdwg.mxu0
  %3207 = vmatpush.bf16.msra.mxu0 %v2793
  %3208 = vmatpush.bf16.msra.mxu0 %v2792
  %3209 = vmatpush.bf16.msra.mxu0 %v2791
  %3210 = vmatpush.bf16.msra.mxu0 %v2790
  %3211 = vmatpush.bf16.msra.mxu0 %v2789
  %3212 = vmatpush.bf16.msra.mxu0 %v2788
  %3213 = vmatpush.bf16.msra.mxu0 %v2787
  %3214 = vmatpush.bf16.msra.mxu0 %v2786
  %3215 = vmatmul.bf16.gmra.mxu0 %v1880
  %v3216 = vpop.f32.mrf.mxu0
  %v3217 = vadd.f32 %v3198, %v3216
  %v3218 = vpop.f32.mrf.mxu0
  %v3219 = vadd.f32 %v3200, %v3218
  %3220 = vmatmul.bf16.gmra.mxu0 %v1896
  %v3221 = vpop.f32.mrf.mxu0
  %v3222 = vadd.f32 %v3203, %v3221
  %v3223 = vpop.f32.mrf.mxu0
  %v3224 = vadd.f32 %v3205, %v3223
  %3225 = vdwg.mxu0
  %v3226 = vadd.f32 %v1257, %v3217
  %v3227 = vadd.f32 %v1258, %v3219
  %v3228 = vadd.f32 %v1259, %v3222
  %v3229 = vadd.f32 %v1260, %v3224
  %v3230 = vsel %vm157, %v3226, 0.0
  %3231 = vadd.xlane.f32.xlu0 %v3230
  %v3232 = vpop.xlane.xlu0 %3231
  %v3233 = vsel %vm157, %v3227, 0.0
  %3234 = vadd.xlane.f32.xlu0 %v3233
  %v3235 = vpop.xlane.xlu0 %3234
  %v3236 = vsel %vm157, %v3228, 0.0
  %3237 = vadd.xlane.f32.xlu0 %v3236
  %v3238 = vpop.xlane.xlu0 %3237
  %v3239 = vsel %vm157, %v3229, 0.0
  %3240 = vadd.xlane.f32.xlu0 %v3239
  %v3241 = vpop.xlane.xlu0 %3240
  %v3242 = vmul.f32 %v3232, %v1174
  %v3243 = vmul.f32 %v3235, %v1174
  %v3244 = vmul.f32 %v3238, %v1174
  %v3245 = vmul.f32 %v3241, %v1174
  %v3246 = vsub.f32 %v3226, %v3242
  %v3247 = vsub.f32 %v3227, %v3243
  %v3248 = vsub.f32 %v3228, %v3244
  %v3249 = vsub.f32 %v3229, %v3245
  %v3250 = vmul.f32 %v3246, %v3246
  %v3251 = vmul.f32 %v3247, %v3247
  %v3252 = vmul.f32 %v3248, %v3248
  %v3253 = vmul.f32 %v3249, %v3249
  %v3254 = vsel %vm157, %v3250, 0.0
  %3255 = vadd.xlane.f32.xlu0 %v3254
  %v3256 = vpop.xlane.xlu0 %3255
  %v3257 = vsel %vm157, %v3251, 0.0
  %3258 = vadd.xlane.f32.xlu0 %v3257
  %v3259 = vpop.xlane.xlu0 %3258
  %v3260 = vsel %vm157, %v3252, 0.0
  %3261 = vadd.xlane.f32.xlu0 %v3260
  %v3262 = vpop.xlane.xlu0 %3261
  %v3263 = vsel %vm157, %v3253, 0.0
  %3264 = vadd.xlane.f32.xlu0 %v3263
  %v3265 = vpop.xlane.xlu0 %3264
  %v3266 = vmul.f32 %v3256, %v1174
  %v3267 = vmul.f32 %v3259, %v1174
  %v3268 = vmul.f32 %v3262, %v1174
  %v3269 = vmul.f32 %v3265, %v1174
  %v3270 = vadd.f32 %v3266, 1e-05
  %v3271 = vadd.f32 %v3267, 1e-05
  %v3272 = vadd.f32 %v3268, 1e-05
  %v3273 = vadd.f32 %v3269, 1e-05
  %v3274 = vrsqrt.pop %v3270
  %v3275 = vmul.f32 %v3274, %v3270
  %v3276 = vmul.f32 %v3275, %v3274
  %v3277 = vmul.f32 0.5, %v3276
  %v3278 = vsub.f32 1.5, %v3277
  %v3279 = vmul.f32 %v3274, %v3278
  %vm3280 = vweird.f32 %v3270
  %vm3281 = vweird.f32 %v3274
  %vm3282 = vmor %vm3280, %vm3281
  %v3283 = vsel %vm3282, %v3274, %v3279
  %v3284 = vrsqrt.pop %v3271
  %v3285 = vmul.f32 %v3284, %v3271
  %v3286 = vmul.f32 %v3285, %v3284
  %v3287 = vmul.f32 0.5, %v3286
  %v3288 = vsub.f32 1.5, %v3287
  %v3289 = vmul.f32 %v3284, %v3288
  %vm3290 = vweird.f32 %v3271
  %vm3291 = vweird.f32 %v3284
  %vm3292 = vmor %vm3290, %vm3291
  %v3293 = vsel %vm3292, %v3284, %v3289
  %v3294 = vrsqrt.pop %v3272
  %v3295 = vmul.f32 %v3294, %v3272
  %v3296 = vmul.f32 %v3295, %v3294
  %v3297 = vmul.f32 0.5, %v3296
  %v3298 = vsub.f32 1.5, %v3297
  %v3299 = vmul.f32 %v3294, %v3298
  %vm3300 = vweird.f32 %v3272
  %vm3301 = vweird.f32 %v3294
  %vm3302 = vmor %vm3300, %vm3301
  %v3303 = vsel %vm3302, %v3294, %v3299
  %v3304 = vrsqrt.pop %v3273
  %v3305 = vmul.f32 %v3304, %v3273
  %v3306 = vmul.f32 %v3305, %v3304
  %v3307 = vmul.f32 0.5, %v3306
  %v3308 = vsub.f32 1.5, %v3307
  %v3309 = vmul.f32 %v3304, %v3308
  %vm3310 = vweird.f32 %v3273
  %vm3311 = vweird.f32 %v3304
  %vm3312 = vmor %vm3310, %vm3311
  %v3313 = vsel %vm3312, %v3304, %v3309
  %v3314 = vmul.f32 %v3246, %v3283
  %v3315 = vmul.f32 %v3247, %v3293
  %v3316 = vmul.f32 %v3248, %v3303
  %v3317 = vmul.f32 %v3249, %v3313
  %v3318 = vperm.slane %v141, 5
  %v3319 = vmul.f32 %v3314, %v3318
  %v3320 = vmul.f32 %v3315, %v3318
  %v3321 = vmul.f32 %v3316, %v3318
  %v3322 = vmul.f32 %v3317, %v3318
  %v3323 = vperm.slane %v141, 6
  %v3324 = vadd.f32 %v3319, %v3323
  %v3325 = vadd.f32 %v3320, %v3323
  %v3326 = vadd.f32 %v3321, %v3323
  %v3327 = vadd.f32 %v3322, %v3323
  %s3328 = scalar_lea.vmem %s2, 16
  %v3329 = vld [vmem:[%s3328] sm:$0xf]
  %v3330 = vld [vmem:[%s3328 + $0x4] sm:$0xf]
  %v3331 = vld [vmem:[%s3328 + $0x8] sm:$0xf]
  %v3332 = vld [vmem:[%s3328 + $0xc] sm:$0xf]
  %s3333 = scalar_lea.vmem %s3, 8
  %v3334 = vld [vmem:[%s3333] sm:$0xff]
  %v3335 = vpack.c.bf16 %v3325, %v3324
  %v3336 = vpack.c.bf16 %v3327, %v3326
  %v3337 = vperm.slane %v3334, 0
  %v3342 = vunpack.c.l.b16 %v3329
  %v3343 = vunpack.c.l.b16 %v3330
  %v3344 = vunpack.c.l.b16 %v3331
  %v3345 = vunpack.c.l.b16 %v3332
  %v3346 = vpack.c.b16 %v3343, %v3342
  %v3347 = vpack.c.b16 %v3345, %v3344
  %v3351 = vsel %vm157, %v3335, 0
  %v3354 = vsel %vm157, %v3336, 0
  %3356 = vmatpush.bf16.msra.mxu0 0
  %3357 = vmatpush.bf16.msra.mxu0 0
  %3358 = vmatpush.bf16.msra.mxu0 0
  %3359 = vmatpush.bf16.msra.mxu0 0
  %3360 = vmatpush.bf16.msra.mxu0 0
  %3361 = vmatpush.bf16.msra.mxu0 0
  %3362 = vmatpush.bf16.msra.mxu0 %v3347
  %3363 = vmatpush.bf16.msra.mxu0 %v3346
  %3364 = vmatmul.bf16.gmra.mxu0 %v3351
  %v3365 = vpop.f32.mrf.mxu0
  %v3366 = vadd.f32 %v3337, %v3365
  %v3367 = vpop.f32.mrf.mxu0
  %v3368 = vadd.f32 %v3337, %v3367
  %3369 = vmatmul.bf16.gmra.mxu0 %v3354
  %v3370 = vpop.f32.mrf.mxu0
  %v3371 = vadd.f32 %v3337, %v3370
  %v3372 = vpop.f32.mrf.mxu0
  %v3373 = vadd.f32 %v3337, %v3372
  %3374 = vdwg.mxu0
  %3379 = vrot.lane.b32.xlu0 %v3366, 120
  %v3380 = vpop.permute.xlu0 %3379
  %3381 = vrot.lane.b32.xlu0 %v3368, 120
  %v3382 = vpop.permute.xlu0 %3381
  %3383 = vrot.lane.b32.xlu0 %v3371, 120
  %v3384 = vpop.permute.xlu0 %3383
  %3385 = vrot.lane.b32.xlu0 %v3373, 120
  %v3386 = vpop.permute.xlu0 %3385
  %3391 = vrot.lane.b32.xlu0 %v3366, 112
  %v3392 = vpop.permute.xlu0 %3391
  %3393 = vrot.lane.b32.xlu0 %v3368, 112
  %v3394 = vpop.permute.xlu0 %3393
  %3395 = vrot.lane.b32.xlu0 %v3371, 112
  %v3396 = vpop.permute.xlu0 %3395
  %3397 = vrot.lane.b32.xlu0 %v3373, 112
  %v3398 = vpop.permute.xlu0 %3397
  %3403 = vrot.lane.b32.xlu0 %v3366, 104
  %v3404 = vpop.permute.xlu0 %3403
  %3405 = vrot.lane.b32.xlu0 %v3368, 104
  %v3406 = vpop.permute.xlu0 %3405
  %3407 = vrot.lane.b32.xlu0 %v3371, 104
  %v3408 = vpop.permute.xlu0 %3407
  %3409 = vrot.lane.b32.xlu0 %v3373, 104
  %v3410 = vpop.permute.xlu0 %3409
  %v3415 = vpack.c.bf16 %v3366, %v3366
  %v3416 = vpack.c.bf16 %v3368, %v3368
  %v3417 = vpack.c.bf16 %v3371, %v3371
  %v3418 = vpack.c.bf16 %v3373, %v3373
  %v3419 = vpack.c.bf16 %v3380, %v3380
  %v3420 = vpack.c.bf16 %v3382, %v3382
  %v3421 = vpack.c.bf16 %v3384, %v3384
  %v3422 = vpack.c.bf16 %v3386, %v3386
  %v3423 = vpack.c.bf16 %v3392, %v3392
  %v3424 = vpack.c.bf16 %v3394, %v3394
  %v3425 = vpack.c.bf16 %v3396, %v3396
  %v3426 = vpack.c.bf16 %v3398, %v3398
  %v3427 = vpack.c.bf16 %v3404, %v3404
  %v3428 = vpack.c.bf16 %v3406, %v3406
  %v3429 = vpack.c.bf16 %v3408, %v3408
  %v3430 = vpack.c.bf16 %v3410, %v3410
  %v3433 = vunpack.c.l.b16 %v3415
  %v3434 = vunpack.c.l.b16 %v3416
  %v3435 = vpack.c.b16 %v3434, %v3433
  %3436 = vrot.lane.b32.xlu0 %v3435, 96
  %v3437 = vpop.permute.xlu0 %3436
  %v3439 = vsel %vm246, %v3435, 0
  %v3442 = vsel %vm246, %v3437, 0
  %3444 = vmatpush.bf16.xpose.msra.mxu0 0
  %3445 = vmatpush.bf16.xpose.msra.mxu0 0
  %3446 = vmatpush.bf16.xpose.msra.mxu0 0
  %3447 = vmatpush.bf16.xpose.msra.mxu0 0
  %3448 = vmatpush.bf16.xpose.msra.mxu0 0
  %3449 = vmatpush.bf16.xpose.msra.mxu0 0
  %3450 = vmatpush.bf16.xpose.msra.mxu0 0
  %3451 = vmatpush.bf16.xpose.msra.mxu0 %v3442
  %3452 = vmatmul.bf16.gmra.mxu0 %v3439
  %v3453 = vpop.f32.mrf.mxu0
  %v3454 = vadd.f32 %v135, %v3453
  %v3455 = vpop.f32.mrf.mxu0
  %v3456 = vadd.f32 %v136, %v3455
  %3457 = vdwg.mxu0
  %v3460 = vunpack.c.l.b16 %v3417
  %v3461 = vunpack.c.l.b16 %v3418
  %v3462 = vpack.c.b16 %v3461, %v3460
  %3463 = vrot.lane.b32.xlu0 %v3462, 96
  %v3464 = vpop.permute.xlu0 %3463
  %v3466 = vsel %vm246, %v3462, 0
  %v3469 = vsel %vm246, %v3464, 0
  %3471 = vmatpush.bf16.xpose.msra.mxu0 0
  %3472 = vmatpush.bf16.xpose.msra.mxu0 0
  %3473 = vmatpush.bf16.xpose.msra.mxu0 0
  %3474 = vmatpush.bf16.xpose.msra.mxu0 0
  %3475 = vmatpush.bf16.xpose.msra.mxu0 0
  %3476 = vmatpush.bf16.xpose.msra.mxu0 0
  %3477 = vmatpush.bf16.xpose.msra.mxu0 0
  %3478 = vmatpush.bf16.xpose.msra.mxu0 %v3469
  %3479 = vmatmul.bf16.gmra.mxu0 %v3466
  %v3480 = vpop.f32.mrf.mxu0
  %v3481 = vadd.f32 %v135, %v3480
  %v3482 = vpop.f32.mrf.mxu0
  %v3483 = vadd.f32 %v136, %v3482
  %3484 = vdwg.mxu0
  %v3487 = vunpack.c.l.b16 %v3419
  %v3488 = vunpack.c.l.b16 %v3420
  %v3489 = vpack.c.b16 %v3488, %v3487
  %3490 = vrot.lane.b32.xlu0 %v3489, 96
  %v3491 = vpop.permute.xlu0 %3490
  %v3493 = vsel %vm246, %v3489, 0
  %v3496 = vsel %vm246, %v3491, 0
  %3498 = vmatpush.bf16.xpose.msra.mxu0 0
  %3499 = vmatpush.bf16.xpose.msra.mxu0 0
  %3500 = vmatpush.bf16.xpose.msra.mxu0 0
  %3501 = vmatpush.bf16.xpose.msra.mxu0 0
  %3502 = vmatpush.bf16.xpose.msra.mxu0 0
  %3503 = vmatpush.bf16.xpose.msra.mxu0 0
  %3504 = vmatpush.bf16.xpose.msra.mxu0 0
  %3505 = vmatpush.bf16.xpose.msra.mxu0 %v3496
  %3506 = vmatmul.bf16.gmra.mxu0 %v3493
  %v3507 = vpop.f32.mrf.mxu0
  %v3508 = vadd.f32 %v135, %v3507
  %v3509 = vpop.f32.mrf.mxu0
  %v3510 = vadd.f32 %v136, %v3509
  %3511 = vdwg.mxu0
  %v3514 = vunpack.c.l.b16 %v3421
  %v3515 = vunpack.c.l.b16 %v3422
  %v3516 = vpack.c.b16 %v3515, %v3514
  %3517 = vrot.lane.b32.xlu0 %v3516, 96
  %v3518 = vpop.permute.xlu0 %3517
  %v3520 = vsel %vm246, %v3516, 0
  %v3523 = vsel %vm246, %v3518, 0
  %3525 = vmatpush.bf16.xpose.msra.mxu0 0
  %3526 = vmatpush.bf16.xpose.msra.mxu0 0
  %3527 = vmatpush.bf16.xpose.msra.mxu0 0
  %3528 = vmatpush.bf16.xpose.msra.mxu0 0
  %3529 = vmatpush.bf16.xpose.msra.mxu0 0
  %3530 = vmatpush.bf16.xpose.msra.mxu0 0
  %3531 = vmatpush.bf16.xpose.msra.mxu0 0
  %3532 = vmatpush.bf16.xpose.msra.mxu0 %v3523
  %3533 = vmatmul.bf16.gmra.mxu0 %v3520
  %v3534 = vpop.f32.mrf.mxu0
  %v3535 = vadd.f32 %v135, %v3534
  %v3536 = vpop.f32.mrf.mxu0
  %v3537 = vadd.f32 %v136, %v3536
  %3538 = vdwg.mxu0
  %v3541 = vunpack.c.l.b16 %v3423
  %v3542 = vunpack.c.l.b16 %v3424
  %v3543 = vpack.c.b16 %v3542, %v3541
  %3544 = vrot.lane.b32.xlu0 %v3543, 96
  %v3545 = vpop.permute.xlu0 %3544
  %v3547 = vsel %vm246, %v3543, 0
  %v3550 = vsel %vm246, %v3545, 0
  %3552 = vmatpush.bf16.xpose.msra.mxu0 0
  %3553 = vmatpush.bf16.xpose.msra.mxu0 0
  %3554 = vmatpush.bf16.xpose.msra.mxu0 0
  %3555 = vmatpush.bf16.xpose.msra.mxu0 0
  %3556 = vmatpush.bf16.xpose.msra.mxu0 0
  %3557 = vmatpush.bf16.xpose.msra.mxu0 0
  %3558 = vmatpush.bf16.xpose.msra.mxu0 0
  %3559 = vmatpush.bf16.xpose.msra.mxu0 %v3550
  %3560 = vmatmul.bf16.gmra.mxu0 %v3547
  %v3561 = vpop.f32.mrf.mxu0
  %v3562 = vadd.f32 %v135, %v3561
  %v3563 = vpop.f32.mrf.mxu0
  %v3564 = vadd.f32 %v136, %v3563
  %3565 = vdwg.mxu0
  %v3568 = vunpack.c.l.b16 %v3425
  %v3569 = vunpack.c.l.b16 %v3426
  %v3570 = vpack.c.b16 %v3569, %v3568
  %3571 = vrot.lane.b32.xlu0 %v3570, 96
  %v3572 = vpop.permute.xlu0 %3571
  %v3574 = vsel %vm246, %v3570, 0
  %v3577 = vsel %vm246, %v3572, 0
  %3579 = vmatpush.bf16.xpose.msra.mxu0 0
  %3580 = vmatpush.bf16.xpose.msra.mxu0 0
  %3581 = vmatpush.bf16.xpose.msra.mxu0 0
  %3582 = vmatpush.bf16.xpose.msra.mxu0 0
  %3583 = vmatpush.bf16.xpose.msra.mxu0 0
  %3584 = vmatpush.bf16.xpose.msra.mxu0 0
  %3585 = vmatpush.bf16.xpose.msra.mxu0 0
  %3586 = vmatpush.bf16.xpose.msra.mxu0 %v3577
  %3587 = vmatmul.bf16.gmra.mxu0 %v3574
  %v3588 = vpop.f32.mrf.mxu0
  %v3589 = vadd.f32 %v135, %v3588
  %v3590 = vpop.f32.mrf.mxu0
  %v3591 = vadd.f32 %v136, %v3590
  %3592 = vdwg.mxu0
  %v3595 = vunpack.c.l.b16 %v3427
  %v3596 = vunpack.c.l.b16 %v3428
  %v3597 = vpack.c.b16 %v3596, %v3595
  %3598 = vrot.lane.b32.xlu0 %v3597, 96
  %v3599 = vpop.permute.xlu0 %3598
  %v3601 = vsel %vm246, %v3597, 0
  %v3604 = vsel %vm246, %v3599, 0
  %3606 = vmatpush.bf16.xpose.msra.mxu0 0
  %3607 = vmatpush.bf16.xpose.msra.mxu0 0
  %3608 = vmatpush.bf16.xpose.msra.mxu0 0
  %3609 = vmatpush.bf16.xpose.msra.mxu0 0
  %3610 = vmatpush.bf16.xpose.msra.mxu0 0
  %3611 = vmatpush.bf16.xpose.msra.mxu0 0
  %3612 = vmatpush.bf16.xpose.msra.mxu0 0
  %3613 = vmatpush.bf16.xpose.msra.mxu0 %v3604
  %3614 = vmatmul.bf16.gmra.mxu0 %v3601
  %v3615 = vpop.f32.mrf.mxu0
  %v3616 = vadd.f32 %v135, %v3615
  %v3617 = vpop.f32.mrf.mxu0
  %v3618 = vadd.f32 %v136, %v3617
  %3619 = vdwg.mxu0
  %v3622 = vunpack.c.l.b16 %v3429
  %v3623 = vunpack.c.l.b16 %v3430
  %v3624 = vpack.c.b16 %v3623, %v3622
  %3625 = vrot.lane.b32.xlu0 %v3624, 96
  %v3626 = vpop.permute.xlu0 %3625
  %v3628 = vsel %vm246, %v3624, 0
  %v3631 = vsel %vm246, %v3626, 0
  %3633 = vmatpush.bf16.xpose.msra.mxu0 0
  %3634 = vmatpush.bf16.xpose.msra.mxu0 0
  %3635 = vmatpush.bf16.xpose.msra.mxu0 0
  %3636 = vmatpush.bf16.xpose.msra.mxu0 0
  %3637 = vmatpush.bf16.xpose.msra.mxu0 0
  %3638 = vmatpush.bf16.xpose.msra.mxu0 0
  %3639 = vmatpush.bf16.xpose.msra.mxu0 0
  %3640 = vmatpush.bf16.xpose.msra.mxu0 %v3631
  %3641 = vmatmul.bf16.gmra.mxu0 %v3628
  %v3642 = vpop.f32.mrf.mxu0
  %v3643 = vadd.f32 %v135, %v3642
  %v3644 = vpop.f32.mrf.mxu0
  %v3645 = vadd.f32 %v136, %v3644
  %3646 = vdwg.mxu0
  %v3647 = vsel %vm456, %v3454, -inf
  %3648 = vmax.xlane.f32.xlu0 %v3647
  %v3649 = vpop.xlane.xlu0 %3648
  %v3650 = vsel %vm456, %v3456, -inf
  %3651 = vmax.xlane.f32.xlu0 %v3650
  %v3652 = vpop.xlane.xlu0 %3651
  %v3653 = vsel %vm456, %v3481, -inf
  %3654 = vmax.xlane.f32.xlu0 %v3653
  %v3655 = vpop.xlane.xlu0 %3654
  %v3656 = vsel %vm456, %v3483, -inf
  %3657 = vmax.xlane.f32.xlu0 %v3656
  %v3658 = vpop.xlane.xlu0 %3657
  %v3659 = vsel %vm456, %v3508, -inf
  %3660 = vmax.xlane.f32.xlu0 %v3659
  %v3661 = vpop.xlane.xlu0 %3660
  %v3662 = vsel %vm456, %v3510, -inf
  %3663 = vmax.xlane.f32.xlu0 %v3662
  %v3664 = vpop.xlane.xlu0 %3663
  %v3665 = vsel %vm456, %v3535, -inf
  %3666 = vmax.xlane.f32.xlu0 %v3665
  %v3667 = vpop.xlane.xlu0 %3666
  %v3668 = vsel %vm456, %v3537, -inf
  %3669 = vmax.xlane.f32.xlu0 %v3668
  %v3670 = vpop.xlane.xlu0 %3669
  %v3671 = vsel %vm456, %v3562, -inf
  %3672 = vmax.xlane.f32.xlu0 %v3671
  %v3673 = vpop.xlane.xlu0 %3672
  %v3674 = vsel %vm456, %v3564, -inf
  %3675 = vmax.xlane.f32.xlu0 %v3674
  %v3676 = vpop.xlane.xlu0 %3675
  %v3677 = vsel %vm456, %v3589, -inf
  %3678 = vmax.xlane.f32.xlu0 %v3677
  %v3679 = vpop.xlane.xlu0 %3678
  %v3680 = vsel %vm456, %v3591, -inf
  %3681 = vmax.xlane.f32.xlu0 %v3680
  %v3682 = vpop.xlane.xlu0 %3681
  %v3683 = vsel %vm456, %v3616, -inf
  %3684 = vmax.xlane.f32.xlu0 %v3683
  %v3685 = vpop.xlane.xlu0 %3684
  %v3686 = vsel %vm456, %v3618, -inf
  %3687 = vmax.xlane.f32.xlu0 %v3686
  %v3688 = vpop.xlane.xlu0 %3687
  %v3689 = vsel %vm456, %v3643, -inf
  %3690 = vmax.xlane.f32.xlu0 %v3689
  %v3691 = vpop.xlane.xlu0 %3690
  %v3692 = vsel %vm456, %v3645, -inf
  %3693 = vmax.xlane.f32.xlu0 %v3692
  %v3694 = vpop.xlane.xlu0 %3693
  %v3695 = vsub.f32 %v3454, %v3649
  %v3696 = vsub.f32 %v3456, %v3652
  %v3697 = vsub.f32 %v3481, %v3655
  %v3698 = vsub.f32 %v3483, %v3658
  %v3699 = vsub.f32 %v3508, %v3661
  %v3700 = vsub.f32 %v3510, %v3664
  %v3701 = vsub.f32 %v3535, %v3667
  %v3702 = vsub.f32 %v3537, %v3670
  %v3703 = vsub.f32 %v3562, %v3673
  %v3704 = vsub.f32 %v3564, %v3676
  %v3705 = vsub.f32 %v3589, %v3679
  %v3706 = vsub.f32 %v3591, %v3682
  %v3707 = vsub.f32 %v3616, %v3685
  %v3708 = vsub.f32 %v3618, %v3688
  %v3709 = vsub.f32 %v3643, %v3691
  %v3710 = vsub.f32 %v3645, %v3694
  %v3711 = vmul.f32 %v3695, 1.442695
  %v3712 = vpow.pop %v3711
  %v3713 = vmul.f32 %v3696, 1.442695
  %v3714 = vpow.pop %v3713
  %v3715 = vmul.f32 %v3697, 1.442695
  %v3716 = vpow.pop %v3715
  %v3717 = vmul.f32 %v3698, 1.442695
  %v3718 = vpow.pop %v3717
  %v3719 = vmul.f32 %v3699, 1.442695
  %v3720 = vpow.pop %v3719
  %v3721 = vmul.f32 %v3700, 1.442695
  %v3722 = vpow.pop %v3721
  %v3723 = vmul.f32 %v3701, 1.442695
  %v3724 = vpow.pop %v3723
  %v3725 = vmul.f32 %v3702, 1.442695
  %v3726 = vpow.pop %v3725
  %v3727 = vmul.f32 %v3703, 1.442695
  %v3728 = vpow.pop %v3727
  %v3729 = vmul.f32 %v3704, 1.442695
  %v3730 = vpow.pop %v3729
  %v3731 = vmul.f32 %v3705, 1.442695
  %v3732 = vpow.pop %v3731
  %v3733 = vmul.f32 %v3706, 1.442695
  %v3734 = vpow.pop %v3733
  %v3735 = vmul.f32 %v3707, 1.442695
  %v3736 = vpow.pop %v3735
  %v3737 = vmul.f32 %v3708, 1.442695
  %v3738 = vpow.pop %v3737
  %v3739 = vmul.f32 %v3709, 1.442695
  %v3740 = vpow.pop %v3739
  %v3741 = vmul.f32 %v3710, 1.442695
  %v3742 = vpow.pop %v3741
  %v3743 = vsel %vm456, %v3712, 0.0
  %3744 = vadd.xlane.f32.xlu0 %v3743
  %v3745 = vpop.xlane.xlu0 %3744
  %v3746 = vsel %vm456, %v3714, 0.0
  %3747 = vadd.xlane.f32.xlu0 %v3746
  %v3748 = vpop.xlane.xlu0 %3747
  %v3749 = vsel %vm456, %v3716, 0.0
  %3750 = vadd.xlane.f32.xlu0 %v3749
  %v3751 = vpop.xlane.xlu0 %3750
  %v3752 = vsel %vm456, %v3718, 0.0
  %3753 = vadd.xlane.f32.xlu0 %v3752
  %v3754 = vpop.xlane.xlu0 %3753
  %v3755 = vsel %vm456, %v3720, 0.0
  %3756 = vadd.xlane.f32.xlu0 %v3755
  %v3757 = vpop.xlane.xlu0 %3756
  %v3758 = vsel %vm456, %v3722, 0.0
  %3759 = vadd.xlane.f32.xlu0 %v3758
  %v3760 = vpop.xlane.xlu0 %3759
  %v3761 = vsel %vm456, %v3724, 0.0
  %3762 = vadd.xlane.f32.xlu0 %v3761
  %v3763 = vpop.xlane.xlu0 %3762
  %v3764 = vsel %vm456, %v3726, 0.0
  %3765 = vadd.xlane.f32.xlu0 %v3764
  %v3766 = vpop.xlane.xlu0 %3765
  %v3767 = vsel %vm456, %v3728, 0.0
  %3768 = vadd.xlane.f32.xlu0 %v3767
  %v3769 = vpop.xlane.xlu0 %3768
  %v3770 = vsel %vm456, %v3730, 0.0
  %3771 = vadd.xlane.f32.xlu0 %v3770
  %v3772 = vpop.xlane.xlu0 %3771
  %v3773 = vsel %vm456, %v3732, 0.0
  %3774 = vadd.xlane.f32.xlu0 %v3773
  %v3775 = vpop.xlane.xlu0 %3774
  %v3776 = vsel %vm456, %v3734, 0.0
  %3777 = vadd.xlane.f32.xlu0 %v3776
  %v3778 = vpop.xlane.xlu0 %3777
  %v3779 = vsel %vm456, %v3736, 0.0
  %3780 = vadd.xlane.f32.xlu0 %v3779
  %v3781 = vpop.xlane.xlu0 %3780
  %v3782 = vsel %vm456, %v3738, 0.0
  %3783 = vadd.xlane.f32.xlu0 %v3782
  %v3784 = vpop.xlane.xlu0 %3783
  %v3785 = vsel %vm456, %v3740, 0.0
  %3786 = vadd.xlane.f32.xlu0 %v3785
  %v3787 = vpop.xlane.xlu0 %3786
  %v3788 = vsel %vm456, %v3742, 0.0
  %3789 = vadd.xlane.f32.xlu0 %v3788
  %v3790 = vpop.xlane.xlu0 %3789
  %v3791 = vrcp.pop %v3745
  %v3792 = vmul.f32 %v3745, %v3791
  %v3793 = vsub.f32 1.0, %v3792
  %v3794 = vmul.f32 %v3791, %v3793
  %v3795 = vadd.f32 %v3791, %v3794
  %vm3796 = vweird.f32 %v3745
  %vm3797 = vweird.f32 %v3791
  %vm3798 = vmor %vm3796, %vm3797
  %v3799 = vsel %vm3798, %v3791, %v3795
  %v3800 = vand.u32 2147483647, %v3745
  %vm3801 = vcmp.eq.f32.partialorder %v3800, 8.507059e+37
  %v3802 = vand.u32 %v3745, 2147483648
  %v3803 = vor.u32 1.1754944e-38, %v3802
  %v3804 = vsel %vm3801, %v3803, %v3799
  %v3805 = vmul.f32 %v3712, %v3804
  %v3806 = vrcp.pop %v3748
  %v3807 = vmul.f32 %v3748, %v3806
  %v3808 = vsub.f32 1.0, %v3807
  %v3809 = vmul.f32 %v3806, %v3808
  %v3810 = vadd.f32 %v3806, %v3809
  %vm3811 = vweird.f32 %v3748
  %vm3812 = vweird.f32 %v3806
  %vm3813 = vmor %vm3811, %vm3812
  %v3814 = vsel %vm3813, %v3806, %v3810
  %v3815 = vand.u32 2147483647, %v3748
  %vm3816 = vcmp.eq.f32.partialorder %v3815, 8.507059e+37
  %v3817 = vand.u32 %v3748, 2147483648
  %v3818 = vor.u32 1.1754944e-38, %v3817
  %v3819 = vsel %vm3816, %v3818, %v3814
  %v3820 = vmul.f32 %v3714, %v3819
  %v3821 = vrcp.pop %v3751
  %v3822 = vmul.f32 %v3751, %v3821
  %v3823 = vsub.f32 1.0, %v3822
  %v3824 = vmul.f32 %v3821, %v3823
  %v3825 = vadd.f32 %v3821, %v3824
  %vm3826 = vweird.f32 %v3751
  %vm3827 = vweird.f32 %v3821
  %vm3828 = vmor %vm3826, %vm3827
  %v3829 = vsel %vm3828, %v3821, %v3825
  %v3830 = vand.u32 2147483647, %v3751
  %vm3831 = vcmp.eq.f32.partialorder %v3830, 8.507059e+37
  %v3832 = vand.u32 %v3751, 2147483648
  %v3833 = vor.u32 1.1754944e-38, %v3832
  %v3834 = vsel %vm3831, %v3833, %v3829
  %v3835 = vmul.f32 %v3716, %v3834
  %v3836 = vrcp.pop %v3754
  %v3837 = vmul.f32 %v3754, %v3836
  %v3838 = vsub.f32 1.0, %v3837
  %v3839 = vmul.f32 %v3836, %v3838
  %v3840 = vadd.f32 %v3836, %v3839
  %vm3841 = vweird.f32 %v3754
  %vm3842 = vweird.f32 %v3836
  %vm3843 = vmor %vm3841, %vm3842
  %v3844 = vsel %vm3843, %v3836, %v3840
  %v3845 = vand.u32 2147483647, %v3754
  %vm3846 = vcmp.eq.f32.partialorder %v3845, 8.507059e+37
  %v3847 = vand.u32 %v3754, 2147483648
  %v3848 = vor.u32 1.1754944e-38, %v3847
  %v3849 = vsel %vm3846, %v3848, %v3844
  %v3850 = vmul.f32 %v3718, %v3849
  %v3851 = vrcp.pop %v3757
  %v3852 = vmul.f32 %v3757, %v3851
  %v3853 = vsub.f32 1.0, %v3852
  %v3854 = vmul.f32 %v3851, %v3853
  %v3855 = vadd.f32 %v3851, %v3854
  %vm3856 = vweird.f32 %v3757
  %vm3857 = vweird.f32 %v3851
  %vm3858 = vmor %vm3856, %vm3857
  %v3859 = vsel %vm3858, %v3851, %v3855
  %v3860 = vand.u32 2147483647, %v3757
  %vm3861 = vcmp.eq.f32.partialorder %v3860, 8.507059e+37
  %v3862 = vand.u32 %v3757, 2147483648
  %v3863 = vor.u32 1.1754944e-38, %v3862
  %v3864 = vsel %vm3861, %v3863, %v3859
  %v3865 = vmul.f32 %v3720, %v3864
  %v3866 = vrcp.pop %v3760
  %v3867 = vmul.f32 %v3760, %v3866
  %v3868 = vsub.f32 1.0, %v3867
  %v3869 = vmul.f32 %v3866, %v3868
  %v3870 = vadd.f32 %v3866, %v3869
  %vm3871 = vweird.f32 %v3760
  %vm3872 = vweird.f32 %v3866
  %vm3873 = vmor %vm3871, %vm3872
  %v3874 = vsel %vm3873, %v3866, %v3870
  %v3875 = vand.u32 2147483647, %v3760
  %vm3876 = vcmp.eq.f32.partialorder %v3875, 8.507059e+37
  %v3877 = vand.u32 %v3760, 2147483648
  %v3878 = vor.u32 1.1754944e-38, %v3877
  %v3879 = vsel %vm3876, %v3878, %v3874
  %v3880 = vmul.f32 %v3722, %v3879
  %v3881 = vrcp.pop %v3763
  %v3882 = vmul.f32 %v3763, %v3881
  %v3883 = vsub.f32 1.0, %v3882
  %v3884 = vmul.f32 %v3881, %v3883
  %v3885 = vadd.f32 %v3881, %v3884
  %vm3886 = vweird.f32 %v3763
  %vm3887 = vweird.f32 %v3881
  %vm3888 = vmor %vm3886, %vm3887
  %v3889 = vsel %vm3888, %v3881, %v3885
  %v3890 = vand.u32 2147483647, %v3763
  %vm3891 = vcmp.eq.f32.partialorder %v3890, 8.507059e+37
  %v3892 = vand.u32 %v3763, 2147483648
  %v3893 = vor.u32 1.1754944e-38, %v3892
  %v3894 = vsel %vm3891, %v3893, %v3889
  %v3895 = vmul.f32 %v3724, %v3894
  %v3896 = vrcp.pop %v3766
  %v3897 = vmul.f32 %v3766, %v3896
  %v3898 = vsub.f32 1.0, %v3897
  %v3899 = vmul.f32 %v3896, %v3898
  %v3900 = vadd.f32 %v3896, %v3899
  %vm3901 = vweird.f32 %v3766
  %vm3902 = vweird.f32 %v3896
  %vm3903 = vmor %vm3901, %vm3902
  %v3904 = vsel %vm3903, %v3896, %v3900
  %v3905 = vand.u32 2147483647, %v3766
  %vm3906 = vcmp.eq.f32.partialorder %v3905, 8.507059e+37
  %v3907 = vand.u32 %v3766, 2147483648
  %v3908 = vor.u32 1.1754944e-38, %v3907
  %v3909 = vsel %vm3906, %v3908, %v3904
  %v3910 = vmul.f32 %v3726, %v3909
  %v3911 = vrcp.pop %v3769
  %v3912 = vmul.f32 %v3769, %v3911
  %v3913 = vsub.f32 1.0, %v3912
  %v3914 = vmul.f32 %v3911, %v3913
  %v3915 = vadd.f32 %v3911, %v3914
  %vm3916 = vweird.f32 %v3769
  %vm3917 = vweird.f32 %v3911
  %vm3918 = vmor %vm3916, %vm3917
  %v3919 = vsel %vm3918, %v3911, %v3915
  %v3920 = vand.u32 2147483647, %v3769
  %vm3921 = vcmp.eq.f32.partialorder %v3920, 8.507059e+37
  %v3922 = vand.u32 %v3769, 2147483648
  %v3923 = vor.u32 1.1754944e-38, %v3922
  %v3924 = vsel %vm3921, %v3923, %v3919
  %v3925 = vmul.f32 %v3728, %v3924
  %v3926 = vrcp.pop %v3772
  %v3927 = vmul.f32 %v3772, %v3926
  %v3928 = vsub.f32 1.0, %v3927
  %v3929 = vmul.f32 %v3926, %v3928
  %v3930 = vadd.f32 %v3926, %v3929
  %vm3931 = vweird.f32 %v3772
  %vm3932 = vweird.f32 %v3926
  %vm3933 = vmor %vm3931, %vm3932
  %v3934 = vsel %vm3933, %v3926, %v3930
  %v3935 = vand.u32 2147483647, %v3772
  %vm3936 = vcmp.eq.f32.partialorder %v3935, 8.507059e+37
  %v3937 = vand.u32 %v3772, 2147483648
  %v3938 = vor.u32 1.1754944e-38, %v3937
  %v3939 = vsel %vm3936, %v3938, %v3934
  %v3940 = vmul.f32 %v3730, %v3939
  %v3941 = vrcp.pop %v3775
  %v3942 = vmul.f32 %v3775, %v3941
  %v3943 = vsub.f32 1.0, %v3942
  %v3944 = vmul.f32 %v3941, %v3943
  %v3945 = vadd.f32 %v3941, %v3944
  %vm3946 = vweird.f32 %v3775
  %vm3947 = vweird.f32 %v3941
  %vm3948 = vmor %vm3946, %vm3947
  %v3949 = vsel %vm3948, %v3941, %v3945
  %v3950 = vand.u32 2147483647, %v3775
  %vm3951 = vcmp.eq.f32.partialorder %v3950, 8.507059e+37
  %v3952 = vand.u32 %v3775, 2147483648
  %v3953 = vor.u32 1.1754944e-38, %v3952
  %v3954 = vsel %vm3951, %v3953, %v3949
  %v3955 = vmul.f32 %v3732, %v3954
  %v3956 = vrcp.pop %v3778
  %v3957 = vmul.f32 %v3778, %v3956
  %v3958 = vsub.f32 1.0, %v3957
  %v3959 = vmul.f32 %v3956, %v3958
  %v3960 = vadd.f32 %v3956, %v3959
  %vm3961 = vweird.f32 %v3778
  %vm3962 = vweird.f32 %v3956
  %vm3963 = vmor %vm3961, %vm3962
  %v3964 = vsel %vm3963, %v3956, %v3960
  %v3965 = vand.u32 2147483647, %v3778
  %vm3966 = vcmp.eq.f32.partialorder %v3965, 8.507059e+37
  %v3967 = vand.u32 %v3778, 2147483648
  %v3968 = vor.u32 1.1754944e-38, %v3967
  %v3969 = vsel %vm3966, %v3968, %v3964
  %v3970 = vmul.f32 %v3734, %v3969
  %v3971 = vrcp.pop %v3781
  %v3972 = vmul.f32 %v3781, %v3971
  %v3973 = vsub.f32 1.0, %v3972
  %v3974 = vmul.f32 %v3971, %v3973
  %v3975 = vadd.f32 %v3971, %v3974
  %vm3976 = vweird.f32 %v3781
  %vm3977 = vweird.f32 %v3971
  %vm3978 = vmor %vm3976, %vm3977
  %v3979 = vsel %vm3978, %v3971, %v3975
  %v3980 = vand.u32 2147483647, %v3781
  %vm3981 = vcmp.eq.f32.partialorder %v3980, 8.507059e+37
  %v3982 = vand.u32 %v3781, 2147483648
  %v3983 = vor.u32 1.1754944e-38, %v3982
  %v3984 = vsel %vm3981, %v3983, %v3979
  %v3985 = vmul.f32 %v3736, %v3984
  %v3986 = vrcp.pop %v3784
  %v3987 = vmul.f32 %v3784, %v3986
  %v3988 = vsub.f32 1.0, %v3987
  %v3989 = vmul.f32 %v3986, %v3988
  %v3990 = vadd.f32 %v3986, %v3989
  %vm3991 = vweird.f32 %v3784
  %vm3992 = vweird.f32 %v3986
  %vm3993 = vmor %vm3991, %vm3992
  %v3994 = vsel %vm3993, %v3986, %v3990
  %v3995 = vand.u32 2147483647, %v3784
  %vm3996 = vcmp.eq.f32.partialorder %v3995, 8.507059e+37
  %v3997 = vand.u32 %v3784, 2147483648
  %v3998 = vor.u32 1.1754944e-38, %v3997
  %v3999 = vsel %vm3996, %v3998, %v3994
  %v4000 = vmul.f32 %v3738, %v3999
  %v4001 = vrcp.pop %v3787
  %v4002 = vmul.f32 %v3787, %v4001
  %v4003 = vsub.f32 1.0, %v4002
  %v4004 = vmul.f32 %v4001, %v4003
  %v4005 = vadd.f32 %v4001, %v4004
  %vm4006 = vweird.f32 %v3787
  %vm4007 = vweird.f32 %v4001
  %vm4008 = vmor %vm4006, %vm4007
  %v4009 = vsel %vm4008, %v4001, %v4005
  %v4010 = vand.u32 2147483647, %v3787
  %vm4011 = vcmp.eq.f32.partialorder %v4010, 8.507059e+37
  %v4012 = vand.u32 %v3787, 2147483648
  %v4013 = vor.u32 1.1754944e-38, %v4012
  %v4014 = vsel %vm4011, %v4013, %v4009
  %v4015 = vmul.f32 %v3740, %v4014
  %v4016 = vrcp.pop %v3790
  %v4017 = vmul.f32 %v3790, %v4016
  %v4018 = vsub.f32 1.0, %v4017
  %v4019 = vmul.f32 %v4016, %v4018
  %v4020 = vadd.f32 %v4016, %v4019
  %vm4021 = vweird.f32 %v3790
  %vm4022 = vweird.f32 %v4016
  %vm4023 = vmor %vm4021, %vm4022
  %v4024 = vsel %vm4023, %v4016, %v4020
  %v4025 = vand.u32 2147483647, %v3790
  %vm4026 = vcmp.eq.f32.partialorder %v4025, 8.507059e+37
  %v4027 = vand.u32 %v3790, 2147483648
  %v4028 = vor.u32 1.1754944e-38, %v4027
  %v4029 = vsel %vm4026, %v4028, %v4024
  %v4030 = vmul.f32 %v3742, %v4029
  %v4031 = vpack.c.bf16 %v3805, %v3805
  %v4032 = vpack.c.bf16 %v3820, %v3820
  %v4033 = vpack.c.bf16 %v3835, %v3835
  %v4034 = vpack.c.bf16 %v3850, %v3850
  %v4035 = vpack.c.bf16 %v3865, %v3865
  %v4036 = vpack.c.bf16 %v3880, %v3880
  %v4037 = vpack.c.bf16 %v3895, %v3895
  %v4038 = vpack.c.bf16 %v3910, %v3910
  %v4039 = vpack.c.bf16 %v3925, %v3925
  %v4040 = vpack.c.bf16 %v3940, %v3940
  %v4041 = vpack.c.bf16 %v3955, %v3955
  %v4042 = vpack.c.bf16 %v3970, %v3970
  %v4043 = vpack.c.bf16 %v3985, %v3985
  %v4044 = vpack.c.bf16 %v4000, %v4000
  %v4045 = vpack.c.bf16 %v4015, %v4015
  %v4046 = vpack.c.bf16 %v4030, %v4030
  %v4049 = vunpack.c.l.b16 %v4031
  %v4050 = vunpack.c.l.b16 %v4032
  %v4051 = vpack.c.b16 %v4050, %v4049
  %4052 = vrot.lane.b32.xlu0 %v3435, 64
  %v4053 = vpop.permute.xlu0 %4052
  %v4056 = vsel %vm456, %v4051, 0
  %4058 = vmatpush.bf16.msra.mxu0 0
  %4059 = vmatpush.bf16.msra.mxu0 0
  %4060 = vmatpush.bf16.msra.mxu0 0
  %4061 = vmatpush.bf16.msra.mxu0 0
  %4062 = vmatpush.bf16.msra.mxu0 0
  %4063 = vmatpush.bf16.msra.mxu0 0
  %4064 = vmatpush.bf16.msra.mxu0 0
  %4065 = vmatpush.bf16.msra.mxu0 %v4053
  %4066 = vmatmul.bf16.gmra.mxu0 %v4056
  %v4067 = vpop.f32.mrf.mxu0
  %v4068 = vadd.f32 0.0, %v4067
  %v4069 = vpop.f32.mrf.mxu0
  %v4070 = vadd.f32 0.0, %v4069
  %4071 = vdwg.mxu0
  %v4074 = vunpack.c.l.b16 %v4033
  %v4075 = vunpack.c.l.b16 %v4034
  %v4076 = vpack.c.b16 %v4075, %v4074
  %4077 = vrot.lane.b32.xlu0 %v3462, 64
  %v4078 = vpop.permute.xlu0 %4077
  %v4081 = vsel %vm456, %v4076, 0
  %4083 = vmatpush.bf16.msra.mxu0 0
  %4084 = vmatpush.bf16.msra.mxu0 0
  %4085 = vmatpush.bf16.msra.mxu0 0
  %4086 = vmatpush.bf16.msra.mxu0 0
  %4087 = vmatpush.bf16.msra.mxu0 0
  %4088 = vmatpush.bf16.msra.mxu0 0
  %4089 = vmatpush.bf16.msra.mxu0 0
  %4090 = vmatpush.bf16.msra.mxu0 %v4078
  %4091 = vmatmul.bf16.gmra.mxu0 %v4081
  %v4092 = vpop.f32.mrf.mxu0
  %v4093 = vadd.f32 0.0, %v4092
  %v4094 = vpop.f32.mrf.mxu0
  %v4095 = vadd.f32 0.0, %v4094
  %4096 = vdwg.mxu0
  %v4099 = vunpack.c.l.b16 %v4035
  %v4100 = vunpack.c.l.b16 %v4036
  %v4101 = vpack.c.b16 %v4100, %v4099
  %4102 = vrot.lane.b32.xlu0 %v3489, 64
  %v4103 = vpop.permute.xlu0 %4102
  %v4106 = vsel %vm456, %v4101, 0
  %4108 = vmatpush.bf16.msra.mxu0 0
  %4109 = vmatpush.bf16.msra.mxu0 0
  %4110 = vmatpush.bf16.msra.mxu0 0
  %4111 = vmatpush.bf16.msra.mxu0 0
  %4112 = vmatpush.bf16.msra.mxu0 0
  %4113 = vmatpush.bf16.msra.mxu0 0
  %4114 = vmatpush.bf16.msra.mxu0 0
  %4115 = vmatpush.bf16.msra.mxu0 %v4103
  %4116 = vmatmul.bf16.gmra.mxu0 %v4106
  %v4117 = vpop.f32.mrf.mxu0
  %v4118 = vadd.f32 0.0, %v4117
  %v4119 = vpop.f32.mrf.mxu0
  %v4120 = vadd.f32 0.0, %v4119
  %4121 = vdwg.mxu0
  %v4124 = vunpack.c.l.b16 %v4037
  %v4125 = vunpack.c.l.b16 %v4038
  %v4126 = vpack.c.b16 %v4125, %v4124
  %4127 = vrot.lane.b32.xlu0 %v3516, 64
  %v4128 = vpop.permute.xlu0 %4127
  %v4131 = vsel %vm456, %v4126, 0
  %4133 = vmatpush.bf16.msra.mxu0 0
  %4134 = vmatpush.bf16.msra.mxu0 0
  %4135 = vmatpush.bf16.msra.mxu0 0
  %4136 = vmatpush.bf16.msra.mxu0 0
  %4137 = vmatpush.bf16.msra.mxu0 0
  %4138 = vmatpush.bf16.msra.mxu0 0
  %4139 = vmatpush.bf16.msra.mxu0 0
  %4140 = vmatpush.bf16.msra.mxu0 %v4128
  %4141 = vmatmul.bf16.gmra.mxu0 %v4131
  %v4142 = vpop.f32.mrf.mxu0
  %v4143 = vadd.f32 0.0, %v4142
  %v4144 = vpop.f32.mrf.mxu0
  %v4145 = vadd.f32 0.0, %v4144
  %4146 = vdwg.mxu0
  %v4149 = vunpack.c.l.b16 %v4039
  %v4150 = vunpack.c.l.b16 %v4040
  %v4151 = vpack.c.b16 %v4150, %v4149
  %4152 = vrot.lane.b32.xlu0 %v3543, 64
  %v4153 = vpop.permute.xlu0 %4152
  %v4156 = vsel %vm456, %v4151, 0
  %4158 = vmatpush.bf16.msra.mxu0 0
  %4159 = vmatpush.bf16.msra.mxu0 0
  %4160 = vmatpush.bf16.msra.mxu0 0
  %4161 = vmatpush.bf16.msra.mxu0 0
  %4162 = vmatpush.bf16.msra.mxu0 0
  %4163 = vmatpush.bf16.msra.mxu0 0
  %4164 = vmatpush.bf16.msra.mxu0 0
  %4165 = vmatpush.bf16.msra.mxu0 %v4153
  %4166 = vmatmul.bf16.gmra.mxu0 %v4156
  %v4167 = vpop.f32.mrf.mxu0
  %v4168 = vadd.f32 0.0, %v4167
  %v4169 = vpop.f32.mrf.mxu0
  %v4170 = vadd.f32 0.0, %v4169
  %4171 = vdwg.mxu0
  %v4174 = vunpack.c.l.b16 %v4041
  %v4175 = vunpack.c.l.b16 %v4042
  %v4176 = vpack.c.b16 %v4175, %v4174
  %4177 = vrot.lane.b32.xlu0 %v3570, 64
  %v4178 = vpop.permute.xlu0 %4177
  %v4181 = vsel %vm456, %v4176, 0
  %4183 = vmatpush.bf16.msra.mxu0 0
  %4184 = vmatpush.bf16.msra.mxu0 0
  %4185 = vmatpush.bf16.msra.mxu0 0
  %4186 = vmatpush.bf16.msra.mxu0 0
  %4187 = vmatpush.bf16.msra.mxu0 0
  %4188 = vmatpush.bf16.msra.mxu0 0
  %4189 = vmatpush.bf16.msra.mxu0 0
  %4190 = vmatpush.bf16.msra.mxu0 %v4178
  %4191 = vmatmul.bf16.gmra.mxu0 %v4181
  %v4192 = vpop.f32.mrf.mxu0
  %v4193 = vadd.f32 0.0, %v4192
  %v4194 = vpop.f32.mrf.mxu0
  %v4195 = vadd.f32 0.0, %v4194
  %4196 = vdwg.mxu0
  %v4199 = vunpack.c.l.b16 %v4043
  %v4200 = vunpack.c.l.b16 %v4044
  %v4201 = vpack.c.b16 %v4200, %v4199
  %4202 = vrot.lane.b32.xlu0 %v3597, 64
  %v4203 = vpop.permute.xlu0 %4202
  %v4206 = vsel %vm456, %v4201, 0
  %4208 = vmatpush.bf16.msra.mxu0 0
  %4209 = vmatpush.bf16.msra.mxu0 0
  %4210 = vmatpush.bf16.msra.mxu0 0
  %4211 = vmatpush.bf16.msra.mxu0 0
  %4212 = vmatpush.bf16.msra.mxu0 0
  %4213 = vmatpush.bf16.msra.mxu0 0
  %4214 = vmatpush.bf16.msra.mxu0 0
  %4215 = vmatpush.bf16.msra.mxu0 %v4203
  %4216 = vmatmul.bf16.gmra.mxu0 %v4206
  %v4217 = vpop.f32.mrf.mxu0
  %v4218 = vadd.f32 0.0, %v4217
  %v4219 = vpop.f32.mrf.mxu0
  %v4220 = vadd.f32 0.0, %v4219
  %4221 = vdwg.mxu0
  %v4224 = vunpack.c.l.b16 %v4045
  %v4225 = vunpack.c.l.b16 %v4046
  %v4226 = vpack.c.b16 %v4225, %v4224
  %4227 = vrot.lane.b32.xlu0 %v3624, 64
  %v4228 = vpop.permute.xlu0 %4227
  %v4231 = vsel %vm456, %v4226, 0
  %4233 = vmatpush.bf16.msra.mxu0 0
  %4234 = vmatpush.bf16.msra.mxu0 0
  %4235 = vmatpush.bf16.msra.mxu0 0
  %4236 = vmatpush.bf16.msra.mxu0 0
  %4237 = vmatpush.bf16.msra.mxu0 0
  %4238 = vmatpush.bf16.msra.mxu0 0
  %4239 = vmatpush.bf16.msra.mxu0 0
  %4240 = vmatpush.bf16.msra.mxu0 %v4228
  %4241 = vmatmul.bf16.gmra.mxu0 %v4231
  %v4242 = vpop.f32.mrf.mxu0
  %v4243 = vadd.f32 0.0, %v4242
  %v4244 = vpop.f32.mrf.mxu0
  %v4245 = vadd.f32 0.0, %v4244
  %4246 = vdwg.mxu0
  %4251 = vrot.lane.b32.xlu0 %v4118, 8
  %v4252 = vpop.permute.xlu0 %4251
  %4253 = vrot.lane.b32.xlu0 %v4120, 8
  %v4254 = vpop.permute.xlu0 %4253
  %4255 = vrot.lane.b32.xlu0 %v4143, 8
  %v4256 = vpop.permute.xlu0 %4255
  %4257 = vrot.lane.b32.xlu0 %v4145, 8
  %v4258 = vpop.permute.xlu0 %4257
  %4267 = vrot.lane.b32.xlu0 %v4168, 16
  %v4268 = vpop.permute.xlu0 %4267
  %4269 = vrot.lane.b32.xlu0 %v4170, 16
  %v4270 = vpop.permute.xlu0 %4269
  %4271 = vrot.lane.b32.xlu0 %v4193, 16
  %v4272 = vpop.permute.xlu0 %4271
  %4273 = vrot.lane.b32.xlu0 %v4195, 16
  %v4274 = vpop.permute.xlu0 %4273
  %4283 = vrot.lane.b32.xlu0 %v4218, 24
  %v4284 = vpop.permute.xlu0 %4283
  %4285 = vrot.lane.b32.xlu0 %v4220, 24
  %v4286 = vpop.permute.xlu0 %4285
  %4287 = vrot.lane.b32.xlu0 %v4243, 24
  %v4288 = vpop.permute.xlu0 %4287
  %4289 = vrot.lane.b32.xlu0 %v4245, 24
  %v4290 = vpop.permute.xlu0 %4289
  %v4295 = vsel %vm246, %v4068, %v4252
  %v4296 = vsel %vm246, %v4070, %v4254
  %v4297 = vsel %vm246, %v4093, %v4256
  %v4298 = vsel %vm246, %v4095, %v4258
  %v4299 = vsel %vm456, %v4295, %v4268
  %v4300 = vsel %vm456, %v4296, %v4270
  %v4301 = vsel %vm456, %v4297, %v4272
  %v4302 = vsel %vm456, %v4298, %v4274
  %v4303 = vsel %vm1113, %v4299, %v4284
  %v4304 = vsel %vm1113, %v4300, %v4286
  %v4305 = vsel %vm1113, %v4301, %v4288
  %v4306 = vsel %vm1113, %v4302, %v4290
  %v4307 = vpack.c.bf16 %v4304, %v4303
  %v4308 = vpack.c.bf16 %v4306, %v4305
  %v4309 = vperm.slane %v3334, 1
  %4310 = vrot.lane.b32.xlu0 %v3346, 32
  %v4311 = vpop.permute.xlu0 %4310
  %4312 = vrot.lane.b32.xlu0 %v3347, 32
  %v4313 = vpop.permute.xlu0 %4312
  %v4317 = vsel %vm157, %v4307, 0
  %v4320 = vsel %vm157, %v4308, 0
  %4322 = vmatpush.bf16.msra.mxu0 0
  %4323 = vmatpush.bf16.msra.mxu0 0
  %4324 = vmatpush.bf16.msra.mxu0 0
  %4325 = vmatpush.bf16.msra.mxu0 0
  %4326 = vmatpush.bf16.msra.mxu0 0
  %4327 = vmatpush.bf16.msra.mxu0 0
  %4328 = vmatpush.bf16.msra.mxu0 %v4313
  %4329 = vmatpush.bf16.msra.mxu0 %v4311
  %4330 = vmatmul.bf16.gmra.mxu0 %v4317
  %v4331 = vpop.f32.mrf.mxu0
  %v4332 = vadd.f32 %v4309, %v4331
  %v4333 = vpop.f32.mrf.mxu0
  %v4334 = vadd.f32 %v4309, %v4333
  %4335 = vmatmul.bf16.gmra.mxu0 %v4320
  %v4336 = vpop.f32.mrf.mxu0
  %v4337 = vadd.f32 %v4309, %v4336
  %v4338 = vpop.f32.mrf.mxu0
  %v4339 = vadd.f32 %v4309, %v4338
  %4340 = vdwg.mxu0
  %v4341 = vadd.f32 %v3324, %v4332
  %v4342 = vadd.f32 %v3325, %v4334
  %v4343 = vadd.f32 %v3326, %v4337
  %v4344 = vadd.f32 %v3327, %v4339
  %v4345 = vsel %vm157, %v4341, 0.0
  %4346 = vadd.xlane.f32.xlu0 %v4345
  %v4347 = vpop.xlane.xlu0 %4346
  %v4348 = vsel %vm157, %v4342, 0.0
  %4349 = vadd.xlane.f32.xlu0 %v4348
  %v4350 = vpop.xlane.xlu0 %4349
  %v4351 = vsel %vm157, %v4343, 0.0
  %4352 = vadd.xlane.f32.xlu0 %v4351
  %v4353 = vpop.xlane.xlu0 %4352
  %v4354 = vsel %vm157, %v4344, 0.0
  %4355 = vadd.xlane.f32.xlu0 %v4354
  %v4356 = vpop.xlane.xlu0 %4355
  %v4357 = vmul.f32 %v4347, %v1174
  %v4358 = vmul.f32 %v4350, %v1174
  %v4359 = vmul.f32 %v4353, %v1174
  %v4360 = vmul.f32 %v4356, %v1174
  %v4361 = vsub.f32 %v4341, %v4357
  %v4362 = vsub.f32 %v4342, %v4358
  %v4363 = vsub.f32 %v4343, %v4359
  %v4364 = vsub.f32 %v4344, %v4360
  %v4365 = vmul.f32 %v4361, %v4361
  %v4366 = vmul.f32 %v4362, %v4362
  %v4367 = vmul.f32 %v4363, %v4363
  %v4368 = vmul.f32 %v4364, %v4364
  %v4369 = vsel %vm157, %v4365, 0.0
  %4370 = vadd.xlane.f32.xlu0 %v4369
  %v4371 = vpop.xlane.xlu0 %4370
  %v4372 = vsel %vm157, %v4366, 0.0
  %4373 = vadd.xlane.f32.xlu0 %v4372
  %v4374 = vpop.xlane.xlu0 %4373
  %v4375 = vsel %vm157, %v4367, 0.0
  %4376 = vadd.xlane.f32.xlu0 %v4375
  %v4377 = vpop.xlane.xlu0 %4376
  %v4378 = vsel %vm157, %v4368, 0.0
  %4379 = vadd.xlane.f32.xlu0 %v4378
  %v4380 = vpop.xlane.xlu0 %4379
  %v4381 = vmul.f32 %v4371, %v1174
  %v4382 = vmul.f32 %v4374, %v1174
  %v4383 = vmul.f32 %v4377, %v1174
  %v4384 = vmul.f32 %v4380, %v1174
  %v4385 = vadd.f32 %v4381, 1e-05
  %v4386 = vadd.f32 %v4382, 1e-05
  %v4387 = vadd.f32 %v4383, 1e-05
  %v4388 = vadd.f32 %v4384, 1e-05
  %v4389 = vrsqrt.pop %v4385
  %v4390 = vmul.f32 %v4389, %v4385
  %v4391 = vmul.f32 %v4390, %v4389
  %v4392 = vmul.f32 0.5, %v4391
  %v4393 = vsub.f32 1.5, %v4392
  %v4394 = vmul.f32 %v4389, %v4393
  %vm4395 = vweird.f32 %v4385
  %vm4396 = vweird.f32 %v4389
  %vm4397 = vmor %vm4395, %vm4396
  %v4398 = vsel %vm4397, %v4389, %v4394
  %v4399 = vrsqrt.pop %v4386
  %v4400 = vmul.f32 %v4399, %v4386
  %v4401 = vmul.f32 %v4400, %v4399
  %v4402 = vmul.f32 0.5, %v4401
  %v4403 = vsub.f32 1.5, %v4402
  %v4404 = vmul.f32 %v4399, %v4403
  %vm4405 = vweird.f32 %v4386
  %vm4406 = vweird.f32 %v4399
  %vm4407 = vmor %vm4405, %vm4406
  %v4408 = vsel %vm4407, %v4399, %v4404
  %v4409 = vrsqrt.pop %v4387
  %v4410 = vmul.f32 %v4409, %v4387
  %v4411 = vmul.f32 %v4410, %v4409
  %v4412 = vmul.f32 0.5, %v4411
  %v4413 = vsub.f32 1.5, %v4412
  %v4414 = vmul.f32 %v4409, %v4413
  %vm4415 = vweird.f32 %v4387
  %vm4416 = vweird.f32 %v4409
  %vm4417 = vmor %vm4415, %vm4416
  %v4418 = vsel %vm4417, %v4409, %v4414
  %v4419 = vrsqrt.pop %v4388
  %v4420 = vmul.f32 %v4419, %v4388
  %v4421 = vmul.f32 %v4420, %v4419
  %v4422 = vmul.f32 0.5, %v4421
  %v4423 = vsub.f32 1.5, %v4422
  %v4424 = vmul.f32 %v4419, %v4423
  %vm4425 = vweird.f32 %v4388
  %vm4426 = vweird.f32 %v4419
  %vm4427 = vmor %vm4425, %vm4426
  %v4428 = vsel %vm4427, %v4419, %v4424
  %v4429 = vmul.f32 %v4361, %v4398
  %v4430 = vmul.f32 %v4362, %v4408
  %v4431 = vmul.f32 %v4363, %v4418
  %v4432 = vmul.f32 %v4364, %v4428
  %v4433 = vperm.slane %v3334, 2
  %v4434 = vmul.f32 %v4429, %v4433
  %v4435 = vmul.f32 %v4430, %v4433
  %v4436 = vmul.f32 %v4431, %v4433
  %v4437 = vmul.f32 %v4432, %v4433
  %v4438 = vperm.slane %v3334, 3
  %v4439 = vadd.f32 %v4434, %v4438
  %v4440 = vadd.f32 %v4435, %v4438
  %v4441 = vadd.f32 %v4436, %v4438
  %v4442 = vadd.f32 %v4437, %v4438
  %v4443 = vpack.c.bf16 %v4440, %v4439
  %v4444 = vpack.c.bf16 %v4442, %v4441
  %s4445 = scalar_lea.vmem %s4, 256
  %v4446 = vld [vmem:[%s4445] sm:$0xff]
  %v4447 = vld [vmem:[%s4445 + $0x8] sm:$0xff]
  %v4448 = vld [vmem:[%s4445 + $0x10] sm:$0xff]
  %v4449 = vld [vmem:[%s4445 + $0x18] sm:$0xff]
  %v4450 = vld [vmem:[%s4445 + $0x20] sm:$0xff]
  %v4451 = vld [vmem:[%s4445 + $0x28] sm:$0xff]
  %v4452 = vld [vmem:[%s4445 + $0x30] sm:$0xff]
  %v4453 = vld [vmem:[%s4445 + $0x38] sm:$0xff]
  %v4454 = vld [vmem:[%s4445 + $0x40] sm:$0xff]
  %v4455 = vld [vmem:[%s4445 + $0x48] sm:$0xff]
  %v4456 = vld [vmem:[%s4445 + $0x50] sm:$0xff]
  %v4457 = vld [vmem:[%s4445 + $0x58] sm:$0xff]
  %v4458 = vld [vmem:[%s4445 + $0x60] sm:$0xff]
  %v4459 = vld [vmem:[%s4445 + $0x68] sm:$0xff]
  %v4460 = vld [vmem:[%s4445 + $0x70] sm:$0xff]
  %v4461 = vld [vmem:[%s4445 + $0x78] sm:$0xff]
  %v4462 = vld [vmem:[%s4445 + $0x80] sm:$0xff]
  %v4463 = vld [vmem:[%s4445 + $0x88] sm:$0xff]
  %v4464 = vld [vmem:[%s4445 + $0x90] sm:$0xff]
  %v4465 = vld [vmem:[%s4445 + $0x98] sm:$0xff]
  %v4466 = vld [vmem:[%s4445 + $0xa0] sm:$0xff]
  %v4467 = vld [vmem:[%s4445 + $0xa8] sm:$0xff]
  %v4468 = vld [vmem:[%s4445 + $0xb0] sm:$0xff]
  %v4469 = vld [vmem:[%s4445 + $0xb8] sm:$0xff]
  %v4470 = vld [vmem:[%s4445 + $0xc0] sm:$0xff]
  %v4471 = vld [vmem:[%s4445 + $0xc8] sm:$0xff]
  %v4472 = vld [vmem:[%s4445 + $0xd0] sm:$0xff]
  %v4473 = vld [vmem:[%s4445 + $0xd8] sm:$0xff]
  %v4474 = vld [vmem:[%s4445 + $0xe0] sm:$0xff]
  %v4475 = vld [vmem:[%s4445 + $0xe8] sm:$0xff]
  %v4476 = vld [vmem:[%s4445 + $0xf0] sm:$0xff]
  %v4477 = vld [vmem:[%s4445 + $0xf8] sm:$0xff]
  %s4478 = scalar_lea.vmem %s5, 16
  %v4479 = vld [vmem:[%s4478] sm:$0xff]
  %v4480 = vld [vmem:[%s4478 + $0x8] sm:$0xff]
  %v4483 = vperm.slane %v4479, 0
  %v4484 = vperm.slane %v4479, 1
  %v4485 = vperm.slane %v4479, 2
  %v4486 = vperm.slane %v4479, 3
  %v4487 = vperm.slane %v4479, 4
  %v4488 = vperm.slane %v4479, 5
  %v4489 = vperm.slane %v4479, 6
  %v4490 = vperm.slane %v4479, 7
  %v4491 = vperm.slane %v4480, 0
  %v4492 = vperm.slane %v4480, 1
  %v4493 = vperm.slane %v4480, 2
  %v4494 = vperm.slane %v4480, 3
  %v4495 = vperm.slane %v4480, 4
  %v4496 = vperm.slane %v4480, 5
  %v4497 = vperm.slane %v4480, 6
  %v4498 = vperm.slane %v4480, 7
  %v4547 = vunpack.c.l.b16 %v4446
  %v4548 = vunpack.c.h.b16 %v4446
  %v4549 = vunpack.c.l.b16 %v4447
  %v4550 = vunpack.c.h.b16 %v4447
  %v4551 = vunpack.c.l.b16 %v4448
  %v4552 = vunpack.c.h.b16 %v4448
  %v4553 = vunpack.c.l.b16 %v4449
  %v4554 = vunpack.c.h.b16 %v4449
  %v4555 = vunpack.c.l.b16 %v4450
  %v4556 = vunpack.c.h.b16 %v4450
  %v4557 = vunpack.c.l.b16 %v4451
  %v4558 = vunpack.c.h.b16 %v4451
  %v4559 = vunpack.c.l.b16 %v4452
  %v4560 = vunpack.c.h.b16 %v4452
  %v4561 = vunpack.c.l.b16 %v4453
  %v4562 = vunpack.c.h.b16 %v4453
  %v4563 = vunpack.c.l.b16 %v4454
  %v4564 = vunpack.c.h.b16 %v4454
  %v4565 = vunpack.c.l.b16 %v4455
  %v4566 = vunpack.c.h.b16 %v4455
  %v4567 = vunpack.c.l.b16 %v4456
  %v4568 = vunpack.c.h.b16 %v4456
  %v4569 = vunpack.c.l.b16 %v4457
  %v4570 = vunpack.c.h.b16 %v4457
  %v4571 = vunpack.c.l.b16 %v4458
  %v4572 = vunpack.c.h.b16 %v4458
  %v4573 = vunpack.c.l.b16 %v4459
  %v4574 = vunpack.c.h.b16 %v4459
  %v4575 = vunpack.c.l.b16 %v4460
  %v4576 = vunpack.c.h.b16 %v4460
  %v4577 = vunpack.c.l.b16 %v4461
  %v4578 = vunpack.c.h.b16 %v4461
  %v4579 = vunpack.c.l.b16 %v4462
  %v4580 = vunpack.c.h.b16 %v4462
  %v4581 = vunpack.c.l.b16 %v4463
  %v4582 = vunpack.c.h.b16 %v4463
  %v4583 = vunpack.c.l.b16 %v4464
  %v4584 = vunpack.c.h.b16 %v4464
  %v4585 = vunpack.c.l.b16 %v4465
  %v4586 = vunpack.c.h.b16 %v4465
  %v4587 = vunpack.c.l.b16 %v4466
  %v4588 = vunpack.c.h.b16 %v4466
  %v4589 = vunpack.c.l.b16 %v4467
  %v4590 = vunpack.c.h.b16 %v4467
  %v4591 = vunpack.c.l.b16 %v4468
  %v4592 = vunpack.c.h.b16 %v4468
  %v4593 = vunpack.c.l.b16 %v4469
  %v4594 = vunpack.c.h.b16 %v4469
  %v4595 = vunpack.c.l.b16 %v4470
  %v4596 = vunpack.c.h.b16 %v4470
  %v4597 = vunpack.c.l.b16 %v4471
  %v4598 = vunpack.c.h.b16 %v4471
  %v4599 = vunpack.c.l.b16 %v4472
  %v4600 = vunpack.c.h.b16 %v4472
  %v4601 = vunpack.c.l.b16 %v4473
  %v4602 = vunpack.c.h.b16 %v4473
  %v4603 = vunpack.c.l.b16 %v4474
  %v4604 = vunpack.c.h.b16 %v4474
  %v4605 = vunpack.c.l.b16 %v4475
  %v4606 = vunpack.c.h.b16 %v4475
  %v4607 = vunpack.c.l.b16 %v4476
  %v4608 = vunpack.c.h.b16 %v4476
  %v4609 = vunpack.c.l.b16 %v4477
  %v4610 = vunpack.c.h.b16 %v4477
  %v4611 = vpack.c.b16 %v4563, %v4547
  %v4612 = vpack.c.b16 %v4564, %v4548
  %v4613 = vpack.c.b16 %v4565, %v4549
  %v4614 = vpack.c.b16 %v4566, %v4550
  %v4615 = vpack.c.b16 %v4567, %v4551
  %v4616 = vpack.c.b16 %v4568, %v4552
  %v4617 = vpack.c.b16 %v4569, %v4553
  %v4618 = vpack.c.b16 %v4570, %v4554
  %v4619 = vpack.c.b16 %v4571, %v4555
  %v4620 = vpack.c.b16 %v4572, %v4556
  %v4621 = vpack.c.b16 %v4573, %v4557
  %v4622 = vpack.c.b16 %v4574, %v4558
  %v4623 = vpack.c.b16 %v4575, %v4559
  %v4624 = vpack.c.b16 %v4576, %v4560
  %v4625 = vpack.c.b16 %v4577, %v4561
  %v4626 = vpack.c.b16 %v4578, %v4562
  %v4627 = vpack.c.b16 %v4595, %v4579
  %v4628 = vpack.c.b16 %v4596, %v4580
  %v4629 = vpack.c.b16 %v4597, %v4581
  %v4630 = vpack.c.b16 %v4598, %v4582
  %v4631 = vpack.c.b16 %v4599, %v4583
  %v4632 = vpack.c.b16 %v4600, %v4584
  %v4633 = vpack.c.b16 %v4601, %v4585
  %v4634 = vpack.c.b16 %v4602, %v4586
  %v4635 = vpack.c.b16 %v4603, %v4587
  %v4636 = vpack.c.b16 %v4604, %v4588
  %v4637 = vpack.c.b16 %v4605, %v4589
  %v4638 = vpack.c.b16 %v4606, %v4590
  %v4639 = vpack.c.b16 %v4607, %v4591
  %v4640 = vpack.c.b16 %v4608, %v4592
  %v4641 = vpack.c.b16 %v4609, %v4593
  %v4642 = vpack.c.b16 %v4610, %v4594
  %v4676 = vsel %vm157, %v4443, 0
  %v4679 = vsel %vm157, %v4444, 0
  %4681 = vmatpush.bf16.msra.mxu0 0
  %4682 = vmatpush.bf16.msra.mxu0 0
  %4683 = vmatpush.bf16.msra.mxu0 0
  %4684 = vmatpush.bf16.msra.mxu0 0
  %4685 = vmatpush.bf16.msra.mxu0 0
  %4686 = vmatpush.bf16.msra.mxu0 0
  %4687 = vmatpush.bf16.msra.mxu0 %v4627
  %4688 = vmatpush.bf16.msra.mxu0 %v4611
  %4689 = vmatmul.bf16.gmra.mxu0 %v4676
  %v4690 = vpop.f32.mrf.mxu0
  %v4691 = vadd.f32 %v4483, %v4690
  %v4692 = vpop.f32.mrf.mxu0
  %v4693 = vadd.f32 %v4483, %v4692
  %4694 = vmatmul.bf16.gmra.mxu0 %v4679
  %v4695 = vpop.f32.mrf.mxu0
  %v4696 = vadd.f32 %v4483, %v4695
  %v4697 = vpop.f32.mrf.mxu0
  %v4698 = vadd.f32 %v4483, %v4697
  %4699 = vdwg.mxu0
  %4700 = vmatpush.bf16.msra.mxu0 0
  %4701 = vmatpush.bf16.msra.mxu0 0
  %4702 = vmatpush.bf16.msra.mxu0 0
  %4703 = vmatpush.bf16.msra.mxu0 0
  %4704 = vmatpush.bf16.msra.mxu0 0
  %4705 = vmatpush.bf16.msra.mxu0 0
  %4706 = vmatpush.bf16.msra.mxu0 %v4628
  %4707 = vmatpush.bf16.msra.mxu0 %v4612
  %4708 = vmatmul.bf16.gmra.mxu0 %v4676
  %v4709 = vpop.f32.mrf.mxu0
  %v4710 = vadd.f32 %v4484, %v4709
  %v4711 = vpop.f32.mrf.mxu0
  %v4712 = vadd.f32 %v4484, %v4711
  %4713 = vmatmul.bf16.gmra.mxu0 %v4679
  %v4714 = vpop.f32.mrf.mxu0
  %v4715 = vadd.f32 %v4484, %v4714
  %v4716 = vpop.f32.mrf.mxu0
  %v4717 = vadd.f32 %v4484, %v4716
  %4718 = vdwg.mxu0
  %4719 = vmatpush.bf16.msra.mxu0 0
  %4720 = vmatpush.bf16.msra.mxu0 0
  %4721 = vmatpush.bf16.msra.mxu0 0
  %4722 = vmatpush.bf16.msra.mxu0 0
  %4723 = vmatpush.bf16.msra.mxu0 0
  %4724 = vmatpush.bf16.msra.mxu0 0
  %4725 = vmatpush.bf16.msra.mxu0 %v4629
  %4726 = vmatpush.bf16.msra.mxu0 %v4613
  %4727 = vmatmul.bf16.gmra.mxu0 %v4676
  %v4728 = vpop.f32.mrf.mxu0
  %v4729 = vadd.f32 %v4485, %v4728
  %v4730 = vpop.f32.mrf.mxu0
  %v4731 = vadd.f32 %v4485, %v4730
  %4732 = vmatmul.bf16.gmra.mxu0 %v4679
  %v4733 = vpop.f32.mrf.mxu0
  %v4734 = vadd.f32 %v4485, %v4733
  %v4735 = vpop.f32.mrf.mxu0
  %v4736 = vadd.f32 %v4485, %v4735
  %4737 = vdwg.mxu0
  %4738 = vmatpush.bf16.msra.mxu0 0
  %4739 = vmatpush.bf16.msra.mxu0 0
  %4740 = vmatpush.bf16.msra.mxu0 0
  %4741 = vmatpush.bf16.msra.mxu0 0
  %4742 = vmatpush.bf16.msra.mxu0 0
  %4743 = vmatpush.bf16.msra.mxu0 0
  %4744 = vmatpush.bf16.msra.mxu0 %v4630
  %4745 = vmatpush.bf16.msra.mxu0 %v4614
  %4746 = vmatmul.bf16.gmra.mxu0 %v4676
  %v4747 = vpop.f32.mrf.mxu0
  %v4748 = vadd.f32 %v4486, %v4747
  %v4749 = vpop.f32.mrf.mxu0
  %v4750 = vadd.f32 %v4486, %v4749
  %4751 = vmatmul.bf16.gmra.mxu0 %v4679
  %v4752 = vpop.f32.mrf.mxu0
  %v4753 = vadd.f32 %v4486, %v4752
  %v4754 = vpop.f32.mrf.mxu0
  %v4755 = vadd.f32 %v4486, %v4754
  %4756 = vdwg.mxu0
  %4757 = vmatpush.bf16.msra.mxu0 0
  %4758 = vmatpush.bf16.msra.mxu0 0
  %4759 = vmatpush.bf16.msra.mxu0 0
  %4760 = vmatpush.bf16.msra.mxu0 0
  %4761 = vmatpush.bf16.msra.mxu0 0
  %4762 = vmatpush.bf16.msra.mxu0 0
  %4763 = vmatpush.bf16.msra.mxu0 %v4631
  %4764 = vmatpush.bf16.msra.mxu0 %v4615
  %4765 = vmatmul.bf16.gmra.mxu0 %v4676
  %v4766 = vpop.f32.mrf.mxu0
  %v4767 = vadd.f32 %v4487, %v4766
  %v4768 = vpop.f32.mrf.mxu0
  %v4769 = vadd.f32 %v4487, %v4768
  %4770 = vmatmul.bf16.gmra.mxu0 %v4679
  %v4771 = vpop.f32.mrf.mxu0
  %v4772 = vadd.f32 %v4487, %v4771
  %v4773 = vpop.f32.mrf.mxu0
  %v4774 = vadd.f32 %v4487, %v4773
  %4775 = vdwg.mxu0
  %4776 = vmatpush.bf16.msra.mxu0 0
  %4777 = vmatpush.bf16.msra.mxu0 0
  %4778 = vmatpush.bf16.msra.mxu0 0
  %4779 = vmatpush.bf16.msra.mxu0 0
  %4780 = vmatpush.bf16.msra.mxu0 0
  %4781 = vmatpush.bf16.msra.mxu0 0
  %4782 = vmatpush.bf16.msra.mxu0 %v4632
  %4783 = vmatpush.bf16.msra.mxu0 %v4616
  %4784 = vmatmul.bf16.gmra.mxu0 %v4676
  %v4785 = vpop.f32.mrf.mxu0
  %v4786 = vadd.f32 %v4488, %v4785
  %v4787 = vpop.f32.mrf.mxu0
  %v4788 = vadd.f32 %v4488, %v4787
  %4789 = vmatmul.bf16.gmra.mxu0 %v4679
  %v4790 = vpop.f32.mrf.mxu0
  %v4791 = vadd.f32 %v4488, %v4790
  %v4792 = vpop.f32.mrf.mxu0
  %v4793 = vadd.f32 %v4488, %v4792
  %4794 = vdwg.mxu0
  %4795 = vmatpush.bf16.msra.mxu0 0
  %4796 = vmatpush.bf16.msra.mxu0 0
  %4797 = vmatpush.bf16.msra.mxu0 0
  %4798 = vmatpush.bf16.msra.mxu0 0
  %4799 = vmatpush.bf16.msra.mxu0 0
  %4800 = vmatpush.bf16.msra.mxu0 0
  %4801 = vmatpush.bf16.msra.mxu0 %v4633
  %4802 = vmatpush.bf16.msra.mxu0 %v4617
  %4803 = vmatmul.bf16.gmra.mxu0 %v4676
  %v4804 = vpop.f32.mrf.mxu0
  %v4805 = vadd.f32 %v4489, %v4804
  %v4806 = vpop.f32.mrf.mxu0
  %v4807 = vadd.f32 %v4489, %v4806
  %4808 = vmatmul.bf16.gmra.mxu0 %v4679
  %v4809 = vpop.f32.mrf.mxu0
  %v4810 = vadd.f32 %v4489, %v4809
  %v4811 = vpop.f32.mrf.mxu0
  %v4812 = vadd.f32 %v4489, %v4811
  %4813 = vdwg.mxu0
  %4814 = vmatpush.bf16.msra.mxu0 0
  %4815 = vmatpush.bf16.msra.mxu0 0
  %4816 = vmatpush.bf16.msra.mxu0 0
  %4817 = vmatpush.bf16.msra.mxu0 0
  %4818 = vmatpush.bf16.msra.mxu0 0
  %4819 = vmatpush.bf16.msra.mxu0 0
  %4820 = vmatpush.bf16.msra.mxu0 %v4634
  %4821 = vmatpush.bf16.msra.mxu0 %v4618
  %4822 = vmatmul.bf16.gmra.mxu0 %v4676
  %v4823 = vpop.f32.mrf.mxu0
  %v4824 = vadd.f32 %v4490, %v4823
  %v4825 = vpop.f32.mrf.mxu0
  %v4826 = vadd.f32 %v4490, %v4825
  %4827 = vmatmul.bf16.gmra.mxu0 %v4679
  %v4828 = vpop.f32.mrf.mxu0
  %v4829 = vadd.f32 %v4490, %v4828
  %v4830 = vpop.f32.mrf.mxu0
  %v4831 = vadd.f32 %v4490, %v4830
  %4832 = vdwg.mxu0
  %4833 = vmatpush.bf16.msra.mxu0 0
  %4834 = vmatpush.bf16.msra.mxu0 0
  %4835 = vmatpush.bf16.msra.mxu0 0
  %4836 = vmatpush.bf16.msra.mxu0 0
  %4837 = vmatpush.bf16.msra.mxu0 0
  %4838 = vmatpush.bf16.msra.mxu0 0
  %4839 = vmatpush.bf16.msra.mxu0 %v4635
  %4840 = vmatpush.bf16.msra.mxu0 %v4619
  %4841 = vmatmul.bf16.gmra.mxu0 %v4676
  %v4842 = vpop.f32.mrf.mxu0
  %v4843 = vadd.f32 %v4491, %v4842
  %v4844 = vpop.f32.mrf.mxu0
  %v4845 = vadd.f32 %v4491, %v4844
  %4846 = vmatmul.bf16.gmra.mxu0 %v4679
  %v4847 = vpop.f32.mrf.mxu0
  %v4848 = vadd.f32 %v4491, %v4847
  %v4849 = vpop.f32.mrf.mxu0
  %v4850 = vadd.f32 %v4491, %v4849
  %4851 = vdwg.mxu0
  %4852 = vmatpush.bf16.msra.mxu0 0
  %4853 = vmatpush.bf16.msra.mxu0 0
  %4854 = vmatpush.bf16.msra.mxu0 0
  %4855 = vmatpush.bf16.msra.mxu0 0
  %4856 = vmatpush.bf16.msra.mxu0 0
  %4857 = vmatpush.bf16.msra.mxu0 0
  %4858 = vmatpush.bf16.msra.mxu0 %v4636
  %4859 = vmatpush.bf16.msra.mxu0 %v4620
  %4860 = vmatmul.bf16.gmra.mxu0 %v4676
  %v4861 = vpop.f32.mrf.mxu0
  %v4862 = vadd.f32 %v4492, %v4861
  %v4863 = vpop.f32.mrf.mxu0
  %v4864 = vadd.f32 %v4492, %v4863
  %4865 = vmatmul.bf16.gmra.mxu0 %v4679
  %v4866 = vpop.f32.mrf.mxu0
  %v4867 = vadd.f32 %v4492, %v4866
  %v4868 = vpop.f32.mrf.mxu0
  %v4869 = vadd.f32 %v4492, %v4868
  %4870 = vdwg.mxu0
  %4871 = vmatpush.bf16.msra.mxu0 0
  %4872 = vmatpush.bf16.msra.mxu0 0
  %4873 = vmatpush.bf16.msra.mxu0 0
  %4874 = vmatpush.bf16.msra.mxu0 0
  %4875 = vmatpush.bf16.msra.mxu0 0
  %4876 = vmatpush.bf16.msra.mxu0 0
  %4877 = vmatpush.bf16.msra.mxu0 %v4637
  %4878 = vmatpush.bf16.msra.mxu0 %v4621
  %4879 = vmatmul.bf16.gmra.mxu0 %v4676
  %v4880 = vpop.f32.mrf.mxu0
  %v4881 = vadd.f32 %v4493, %v4880
  %v4882 = vpop.f32.mrf.mxu0
  %v4883 = vadd.f32 %v4493, %v4882
  %4884 = vmatmul.bf16.gmra.mxu0 %v4679
  %v4885 = vpop.f32.mrf.mxu0
  %v4886 = vadd.f32 %v4493, %v4885
  %v4887 = vpop.f32.mrf.mxu0
  %v4888 = vadd.f32 %v4493, %v4887
  %4889 = vdwg.mxu0
  %4890 = vmatpush.bf16.msra.mxu0 0
  %4891 = vmatpush.bf16.msra.mxu0 0
  %4892 = vmatpush.bf16.msra.mxu0 0
  %4893 = vmatpush.bf16.msra.mxu0 0
  %4894 = vmatpush.bf16.msra.mxu0 0
  %4895 = vmatpush.bf16.msra.mxu0 0
  %4896 = vmatpush.bf16.msra.mxu0 %v4638
  %4897 = vmatpush.bf16.msra.mxu0 %v4622
  %4898 = vmatmul.bf16.gmra.mxu0 %v4676
  %v4899 = vpop.f32.mrf.mxu0
  %v4900 = vadd.f32 %v4494, %v4899
  %v4901 = vpop.f32.mrf.mxu0
  %v4902 = vadd.f32 %v4494, %v4901
  %4903 = vmatmul.bf16.gmra.mxu0 %v4679
  %v4904 = vpop.f32.mrf.mxu0
  %v4905 = vadd.f32 %v4494, %v4904
  %v4906 = vpop.f32.mrf.mxu0
  %v4907 = vadd.f32 %v4494, %v4906
  %4908 = vdwg.mxu0
  %4909 = vmatpush.bf16.msra.mxu0 0
  %4910 = vmatpush.bf16.msra.mxu0 0
  %4911 = vmatpush.bf16.msra.mxu0 0
  %4912 = vmatpush.bf16.msra.mxu0 0
  %4913 = vmatpush.bf16.msra.mxu0 0
  %4914 = vmatpush.bf16.msra.mxu0 0
  %4915 = vmatpush.bf16.msra.mxu0 %v4639
  %4916 = vmatpush.bf16.msra.mxu0 %v4623
  %4917 = vmatmul.bf16.gmra.mxu0 %v4676
  %v4918 = vpop.f32.mrf.mxu0
  %v4919 = vadd.f32 %v4495, %v4918
  %v4920 = vpop.f32.mrf.mxu0
  %v4921 = vadd.f32 %v4495, %v4920
  %4922 = vmatmul.bf16.gmra.mxu0 %v4679
  %v4923 = vpop.f32.mrf.mxu0
  %v4924 = vadd.f32 %v4495, %v4923
  %v4925 = vpop.f32.mrf.mxu0
  %v4926 = vadd.f32 %v4495, %v4925
  %4927 = vdwg.mxu0
  %4928 = vmatpush.bf16.msra.mxu0 0
  %4929 = vmatpush.bf16.msra.mxu0 0
  %4930 = vmatpush.bf16.msra.mxu0 0
  %4931 = vmatpush.bf16.msra.mxu0 0
  %4932 = vmatpush.bf16.msra.mxu0 0
  %4933 = vmatpush.bf16.msra.mxu0 0
  %4934 = vmatpush.bf16.msra.mxu0 %v4640
  %4935 = vmatpush.bf16.msra.mxu0 %v4624
  %4936 = vmatmul.bf16.gmra.mxu0 %v4676
  %v4937 = vpop.f32.mrf.mxu0
  %v4938 = vadd.f32 %v4496, %v4937
  %v4939 = vpop.f32.mrf.mxu0
  %v4940 = vadd.f32 %v4496, %v4939
  %4941 = vmatmul.bf16.gmra.mxu0 %v4679
  %v4942 = vpop.f32.mrf.mxu0
  %v4943 = vadd.f32 %v4496, %v4942
  %v4944 = vpop.f32.mrf.mxu0
  %v4945 = vadd.f32 %v4496, %v4944
  %4946 = vdwg.mxu0
  %4947 = vmatpush.bf16.msra.mxu0 0
  %4948 = vmatpush.bf16.msra.mxu0 0
  %4949 = vmatpush.bf16.msra.mxu0 0
  %4950 = vmatpush.bf16.msra.mxu0 0
  %4951 = vmatpush.bf16.msra.mxu0 0
  %4952 = vmatpush.bf16.msra.mxu0 0
  %4953 = vmatpush.bf16.msra.mxu0 %v4641
  %4954 = vmatpush.bf16.msra.mxu0 %v4625
  %4955 = vmatmul.bf16.gmra.mxu0 %v4676
  %v4956 = vpop.f32.mrf.mxu0
  %v4957 = vadd.f32 %v4497, %v4956
  %v4958 = vpop.f32.mrf.mxu0
  %v4959 = vadd.f32 %v4497, %v4958
  %4960 = vmatmul.bf16.gmra.mxu0 %v4679
  %v4961 = vpop.f32.mrf.mxu0
  %v4962 = vadd.f32 %v4497, %v4961
  %v4963 = vpop.f32.mrf.mxu0
  %v4964 = vadd.f32 %v4497, %v4963
  %4965 = vdwg.mxu0
  %4966 = vmatpush.bf16.msra.mxu0 0
  %4967 = vmatpush.bf16.msra.mxu0 0
  %4968 = vmatpush.bf16.msra.mxu0 0
  %4969 = vmatpush.bf16.msra.mxu0 0
  %4970 = vmatpush.bf16.msra.mxu0 0
  %4971 = vmatpush.bf16.msra.mxu0 0
  %4972 = vmatpush.bf16.msra.mxu0 %v4642
  %4973 = vmatpush.bf16.msra.mxu0 %v4626
  %4974 = vmatmul.bf16.gmra.mxu0 %v4676
  %v4975 = vpop.f32.mrf.mxu0
  %v4976 = vadd.f32 %v4498, %v4975
  %v4977 = vpop.f32.mrf.mxu0
  %v4978 = vadd.f32 %v4498, %v4977
  %4979 = vmatmul.bf16.gmra.mxu0 %v4679
  %v4980 = vpop.f32.mrf.mxu0
  %v4981 = vadd.f32 %v4498, %v4980
  %v4982 = vpop.f32.mrf.mxu0
  %v4983 = vadd.f32 %v4498, %v4982
  %4984 = vdwg.mxu0
  %v4985 = vmax.f32 %v4691, 0.0
  %v4986 = vmax.f32 %v4710, 0.0
  %v4987 = vmax.f32 %v4729, 0.0
  %v4988 = vmax.f32 %v4748, 0.0
  %v4989 = vmax.f32 %v4767, 0.0
  %v4990 = vmax.f32 %v4786, 0.0
  %v4991 = vmax.f32 %v4805, 0.0
  %v4992 = vmax.f32 %v4824, 0.0
  %v4993 = vmax.f32 %v4843, 0.0
  %v4994 = vmax.f32 %v4862, 0.0
  %v4995 = vmax.f32 %v4881, 0.0
  %v4996 = vmax.f32 %v4900, 0.0
  %v4997 = vmax.f32 %v4919, 0.0
  %v4998 = vmax.f32 %v4938, 0.0
  %v4999 = vmax.f32 %v4957, 0.0
  %v5000 = vmax.f32 %v4976, 0.0
  %v5001 = vmax.f32 %v4693, 0.0
  %v5002 = vmax.f32 %v4712, 0.0
  %v5003 = vmax.f32 %v4731, 0.0
  %v5004 = vmax.f32 %v4750, 0.0
  %v5005 = vmax.f32 %v4769, 0.0
  %v5006 = vmax.f32 %v4788, 0.0
  %v5007 = vmax.f32 %v4807, 0.0
  %v5008 = vmax.f32 %v4826, 0.0
  %v5009 = vmax.f32 %v4845, 0.0
  %v5010 = vmax.f32 %v4864, 0.0
  %v5011 = vmax.f32 %v4883, 0.0
  %v5012 = vmax.f32 %v4902, 0.0
  %v5013 = vmax.f32 %v4921, 0.0
  %v5014 = vmax.f32 %v4940, 0.0
  %v5015 = vmax.f32 %v4959, 0.0
  %v5016 = vmax.f32 %v4978, 0.0
  %v5017 = vmax.f32 %v4696, 0.0
  %v5018 = vmax.f32 %v4715, 0.0
  %v5019 = vmax.f32 %v4734, 0.0
  %v5020 = vmax.f32 %v4753, 0.0
  %v5021 = vmax.f32 %v4772, 0.0
  %v5022 = vmax.f32 %v4791, 0.0
  %v5023 = vmax.f32 %v4810, 0.0
  %v5024 = vmax.f32 %v4829, 0.0
  %v5025 = vmax.f32 %v4848, 0.0
  %v5026 = vmax.f32 %v4867, 0.0
  %v5027 = vmax.f32 %v4886, 0.0
  %v5028 = vmax.f32 %v4905, 0.0
  %v5029 = vmax.f32 %v4924, 0.0
  %v5030 = vmax.f32 %v4943, 0.0
  %v5031 = vmax.f32 %v4962, 0.0
  %v5032 = vmax.f32 %v4981, 0.0
  %v5033 = vmax.f32 %v4698, 0.0
  %v5034 = vmax.f32 %v4717, 0.0
  %v5035 = vmax.f32 %v4736, 0.0
  %v5036 = vmax.f32 %v4755, 0.0
  %v5037 = vmax.f32 %v4774, 0.0
  %v5038 = vmax.f32 %v4793, 0.0
  %v5039 = vmax.f32 %v4812, 0.0
  %v5040 = vmax.f32 %v4831, 0.0
  %v5041 = vmax.f32 %v4850, 0.0
  %v5042 = vmax.f32 %v4869, 0.0
  %v5043 = vmax.f32 %v4888, 0.0
  %v5044 = vmax.f32 %v4907, 0.0
  %v5045 = vmax.f32 %v4926, 0.0
  %v5046 = vmax.f32 %v4945, 0.0
  %v5047 = vmax.f32 %v4964, 0.0
  %v5048 = vmax.f32 %v4983, 0.0
  %v5049 = vpack.c.bf16 %v5001, %v4985
  %v5050 = vpack.c.bf16 %v5002, %v4986
  %v5051 = vpack.c.bf16 %v5003, %v4987
  %v5052 = vpack.c.bf16 %v5004, %v4988
  %v5053 = vpack.c.bf16 %v5005, %v4989
  %v5054 = vpack.c.bf16 %v5006, %v4990
  %v5055 = vpack.c.bf16 %v5007, %v4991
  %v5056 = vpack.c.bf16 %v5008, %v4992
  %v5057 = vpack.c.bf16 %v5009, %v4993
  %v5058 = vpack.c.bf16 %v5010, %v4994
  %v5059 = vpack.c.bf16 %v5011, %v4995
  %v5060 = vpack.c.bf16 %v5012, %v4996
  %v5061 = vpack.c.bf16 %v5013, %v4997
  %v5062 = vpack.c.bf16 %v5014, %v4998
  %v5063 = vpack.c.bf16 %v5015, %v4999
  %v5064 = vpack.c.bf16 %v5016, %v5000
  %v5065 = vpack.c.bf16 %v5033, %v5017
  %v5066 = vpack.c.bf16 %v5034, %v5018
  %v5067 = vpack.c.bf16 %v5035, %v5019
  %v5068 = vpack.c.bf16 %v5036, %v5020
  %v5069 = vpack.c.bf16 %v5037, %v5021
  %v5070 = vpack.c.bf16 %v5038, %v5022
  %v5071 = vpack.c.bf16 %v5039, %v5023
  %v5072 = vpack.c.bf16 %v5040, %v5024
  %v5073 = vpack.c.bf16 %v5041, %v5025
  %v5074 = vpack.c.bf16 %v5042, %v5026
  %v5075 = vpack.c.bf16 %v5043, %v5027
  %v5076 = vpack.c.bf16 %v5044, %v5028
  %v5077 = vpack.c.bf16 %v5045, %v5029
  %v5078 = vpack.c.bf16 %v5046, %v5030
  %v5079 = vpack.c.bf16 %v5047, %v5031
  %v5080 = vpack.c.bf16 %v5048, %v5032
  %s5081 = scalar_lea.vmem %s6, 1024
  %v5082 = vld [vmem:[%s5081] sm:$0xf]
  %v5083 = vld [vmem:[%s5081 + $0x4] sm:$0xf]
  %v5084 = vld [vmem:[%s5081 + $0x8] sm:$0xf]
  %v5085 = vld [vmem:[%s5081 + $0xc] sm:$0xf]
  %v5086 = vld [vmem:[%s5081 + $0x10] sm:$0xf]
  %v5087 = vld [vmem:[%s5081 + $0x14] sm:$0xf]
  %v5088 = vld [vmem:[%s5081 + $0x18] sm:$0xf]
  %v5089 = vld [vmem:[%s5081 + $0x1c] sm:$0xf]
  %v5090 = vld [vmem:[%s5081 + $0x20] sm:$0xf]
  %v5091 = vld [vmem:[%s5081 + $0x24] sm:$0xf]
  %v5092 = vld [vmem:[%s5081 + $0x28] sm:$0xf]
  %v5093 = vld [vmem:[%s5081 + $0x2c] sm:$0xf]
  %v5094 = vld [vmem:[%s5081 + $0x30] sm:$0xf]
  %v5095 = vld [vmem:[%s5081 + $0x34] sm:$0xf]
  %v5096 = vld [vmem:[%s5081 + $0x38] sm:$0xf]
  %v5097 = vld [vmem:[%s5081 + $0x3c] sm:$0xf]
  %v5098 = vld [vmem:[%s5081 + $0x40] sm:$0xf]
  %v5099 = vld [vmem:[%s5081 + $0x44] sm:$0xf]
  %v5100 = vld [vmem:[%s5081 + $0x48] sm:$0xf]
  %v5101 = vld [vmem:[%s5081 + $0x4c] sm:$0xf]
  %v5102 = vld [vmem:[%s5081 + $0x50] sm:$0xf]
  %v5103 = vld [vmem:[%s5081 + $0x54] sm:$0xf]
  %v5104 = vld [vmem:[%s5081 + $0x58] sm:$0xf]
  %v5105 = vld [vmem:[%s5081 + $0x5c] sm:$0xf]
  %v5106 = vld [vmem:[%s5081 + $0x60] sm:$0xf]
  %v5107 = vld [vmem:[%s5081 + $0x64] sm:$0xf]
  %v5108 = vld [vmem:[%s5081 + $0x68] sm:$0xf]
  %v5109 = vld [vmem:[%s5081 + $0x6c] sm:$0xf]
  %v5110 = vld [vmem:[%s5081 + $0x70] sm:$0xf]
  %v5111 = vld [vmem:[%s5081 + $0x74] sm:$0xf]
  %v5112 = vld [vmem:[%s5081 + $0x78] sm:$0xf]
  %v5113 = vld [vmem:[%s5081 + $0x7c] sm:$0xf]
  %v5114 = vld [vmem:[%s5081 + $0x80] sm:$0xf]
  %v5115 = vld [vmem:[%s5081 + $0x84] sm:$0xf]
  %v5116 = vld [vmem:[%s5081 + $0x88] sm:$0xf]
  %v5117 = vld [vmem:[%s5081 + $0x8c] sm:$0xf]
  %v5118 = vld [vmem:[%s5081 + $0x90] sm:$0xf]
  %v5119 = vld [vmem:[%s5081 + $0x94] sm:$0xf]
  %v5120 = vld [vmem:[%s5081 + $0x98] sm:$0xf]
  %v5121 = vld [vmem:[%s5081 + $0x9c] sm:$0xf]
  %v5122 = vld [vmem:[%s5081 + $0xa0] sm:$0xf]
  %v5123 = vld [vmem:[%s5081 + $0xa4] sm:$0xf]
  %v5124 = vld [vmem:[%s5081 + $0xa8] sm:$0xf]
  %v5125 = vld [vmem:[%s5081 + $0xac] sm:$0xf]
  %v5126 = vld [vmem:[%s5081 + $0xb0] sm:$0xf]
  %v5127 = vld [vmem:[%s5081 + $0xb4] sm:$0xf]
  %v5128 = vld [vmem:[%s5081 + $0xb8] sm:$0xf]
  %v5129 = vld [vmem:[%s5081 + $0xbc] sm:$0xf]
  %v5130 = vld [vmem:[%s5081 + $0xc0] sm:$0xf]
  %v5131 = vld [vmem:[%s5081 + $0xc4] sm:$0xf]
  %v5132 = vld [vmem:[%s5081 + $0xc8] sm:$0xf]
  %v5133 = vld [vmem:[%s5081 + $0xcc] sm:$0xf]
  %v5134 = vld [vmem:[%s5081 + $0xd0] sm:$0xf]
  %v5135 = vld [vmem:[%s5081 + $0xd4] sm:$0xf]
  %v5136 = vld [vmem:[%s5081 + $0xd8] sm:$0xf]
  %v5137 = vld [vmem:[%s5081 + $0xdc] sm:$0xf]
  %v5138 = vld [vmem:[%s5081 + $0xe0] sm:$0xf]
  %v5139 = vld [vmem:[%s5081 + $0xe4] sm:$0xf]
  %v5140 = vld [vmem:[%s5081 + $0xe8] sm:$0xf]
  %v5141 = vld [vmem:[%s5081 + $0xec] sm:$0xf]
  %v5142 = vld [vmem:[%s5081 + $0xf0] sm:$0xf]
  %v5143 = vld [vmem:[%s5081 + $0xf4] sm:$0xf]
  %v5144 = vld [vmem:[%s5081 + $0xf8] sm:$0xf]
  %v5145 = vld [vmem:[%s5081 + $0xfc] sm:$0xf]
  %v5146 = vld [vmem:[%s5081 + $0x100] sm:$0xf]
  %v5147 = vld [vmem:[%s5081 + $0x104] sm:$0xf]
  %v5148 = vld [vmem:[%s5081 + $0x108] sm:$0xf]
  %v5149 = vld [vmem:[%s5081 + $0x10c] sm:$0xf]
  %v5150 = vld [vmem:[%s5081 + $0x110] sm:$0xf]
  %v5151 = vld [vmem:[%s5081 + $0x114] sm:$0xf]
  %v5152 = vld [vmem:[%s5081 + $0x118] sm:$0xf]
  %v5153 = vld [vmem:[%s5081 + $0x11c] sm:$0xf]
  %v5154 = vld [vmem:[%s5081 + $0x120] sm:$0xf]
  %v5155 = vld [vmem:[%s5081 + $0x124] sm:$0xf]
  %v5156 = vld [vmem:[%s5081 + $0x128] sm:$0xf]
  %v5157 = vld [vmem:[%s5081 + $0x12c] sm:$0xf]
  %v5158 = vld [vmem:[%s5081 + $0x130] sm:$0xf]
  %v5159 = vld [vmem:[%s5081 + $0x134] sm:$0xf]
  %v5160 = vld [vmem:[%s5081 + $0x138] sm:$0xf]
  %v5161 = vld [vmem:[%s5081 + $0x13c] sm:$0xf]
  %v5162 = vld [vmem:[%s5081 + $0x140] sm:$0xf]
  %v5163 = vld [vmem:[%s5081 + $0x144] sm:$0xf]
  %v5164 = vld [vmem:[%s5081 + $0x148] sm:$0xf]
  %v5165 = vld [vmem:[%s5081 + $0x14c] sm:$0xf]
  %v5166 = vld [vmem:[%s5081 + $0x150] sm:$0xf]
  %v5167 = vld [vmem:[%s5081 + $0x154] sm:$0xf]
  %v5168 = vld [vmem:[%s5081 + $0x158] sm:$0xf]
  %v5169 = vld [vmem:[%s5081 + $0x15c] sm:$0xf]
  %v5170 = vld [vmem:[%s5081 + $0x160] sm:$0xf]
  %v5171 = vld [vmem:[%s5081 + $0x164] sm:$0xf]
  %v5172 = vld [vmem:[%s5081 + $0x168] sm:$0xf]
  %v5173 = vld [vmem:[%s5081 + $0x16c] sm:$0xf]
  %v5174 = vld [vmem:[%s5081 + $0x170] sm:$0xf]
  %v5175 = vld [vmem:[%s5081 + $0x174] sm:$0xf]
  %v5176 = vld [vmem:[%s5081 + $0x178] sm:$0xf]
  %v5177 = vld [vmem:[%s5081 + $0x17c] sm:$0xf]
  %v5178 = vld [vmem:[%s5081 + $0x180] sm:$0xf]
  %v5179 = vld [vmem:[%s5081 + $0x184] sm:$0xf]
  %v5180 = vld [vmem:[%s5081 + $0x188] sm:$0xf]
  %v5181 = vld [vmem:[%s5081 + $0x18c] sm:$0xf]
  %v5182 = vld [vmem:[%s5081 + $0x190] sm:$0xf]
  %v5183 = vld [vmem:[%s5081 + $0x194] sm:$0xf]
  %v5184 = vld [vmem:[%s5081 + $0x198] sm:$0xf]
  %v5185 = vld [vmem:[%s5081 + $0x19c] sm:$0xf]
  %v5186 = vld [vmem:[%s5081 + $0x1a0] sm:$0xf]
  %v5187 = vld [vmem:[%s5081 + $0x1a4] sm:$0xf]
  %v5188 = vld [vmem:[%s5081 + $0x1a8] sm:$0xf]
  %v5189 = vld [vmem:[%s5081 + $0x1ac] sm:$0xf]
  %v5190 = vld [vmem:[%s5081 + $0x1b0] sm:$0xf]
  %v5191 = vld [vmem:[%s5081 + $0x1b4] sm:$0xf]
  %v5192 = vld [vmem:[%s5081 + $0x1b8] sm:$0xf]
  %v5193 = vld [vmem:[%s5081 + $0x1bc] sm:$0xf]
  %v5194 = vld [vmem:[%s5081 + $0x1c0] sm:$0xf]
  %v5195 = vld [vmem:[%s5081 + $0x1c4] sm:$0xf]
  %v5196 = vld [vmem:[%s5081 + $0x1c8] sm:$0xf]
  %v5197 = vld [vmem:[%s5081 + $0x1cc] sm:$0xf]
  %v5198 = vld [vmem:[%s5081 + $0x1d0] sm:$0xf]
  %v5199 = vld [vmem:[%s5081 + $0x1d4] sm:$0xf]
  %v5200 = vld [vmem:[%s5081 + $0x1d8] sm:$0xf]
  %v5201 = vld [vmem:[%s5081 + $0x1dc] sm:$0xf]
  %v5202 = vld [vmem:[%s5081 + $0x1e0] sm:$0xf]
  %v5203 = vld [vmem:[%s5081 + $0x1e4] sm:$0xf]
  %v5204 = vld [vmem:[%s5081 + $0x1e8] sm:$0xf]
  %v5205 = vld [vmem:[%s5081 + $0x1ec] sm:$0xf]
  %v5206 = vld [vmem:[%s5081 + $0x1f0] sm:$0xf]
  %v5207 = vld [vmem:[%s5081 + $0x1f4] sm:$0xf]
  %v5208 = vld [vmem:[%s5081 + $0x1f8] sm:$0xf]
  %v5209 = vld [vmem:[%s5081 + $0x1fc] sm:$0xf]
  %v5210 = vld [vmem:[%s5081 + $0x200] sm:$0xf]
  %v5211 = vld [vmem:[%s5081 + $0x204] sm:$0xf]
  %v5212 = vld [vmem:[%s5081 + $0x208] sm:$0xf]
  %v5213 = vld [vmem:[%s5081 + $0x20c] sm:$0xf]
  %v5214 = vld [vmem:[%s5081 + $0x210] sm:$0xf]
  %v5215 = vld [vmem:[%s5081 + $0x214] sm:$0xf]
  %v5216 = vld [vmem:[%s5081 + $0x218] sm:$0xf]
  %v5217 = vld [vmem:[%s5081 + $0x21c] sm:$0xf]
  %v5218 = vld [vmem:[%s5081 + $0x220] sm:$0xf]
  %v5219 = vld [vmem:[%s5081 + $0x224] sm:$0xf]
  %v5220 = vld [vmem:[%s5081 + $0x228] sm:$0xf]
  %v5221 = vld [vmem:[%s5081 + $0x22c] sm:$0xf]
  %v5222 = vld [vmem:[%s5081 + $0x230] sm:$0xf]
  %v5223 = vld [vmem:[%s5081 + $0x234] sm:$0xf]
  %v5224 = vld [vmem:[%s5081 + $0x238] sm:$0xf]
  %v5225 = vld [vmem:[%s5081 + $0x23c] sm:$0xf]
  %v5226 = vld [vmem:[%s5081 + $0x240] sm:$0xf]
  %v5227 = vld [vmem:[%s5081 + $0x244] sm:$0xf]
  %v5228 = vld [vmem:[%s5081 + $0x248] sm:$0xf]
  %v5229 = vld [vmem:[%s5081 + $0x24c] sm:$0xf]
  %v5230 = vld [vmem:[%s5081 + $0x250] sm:$0xf]
  %v5231 = vld [vmem:[%s5081 + $0x254] sm:$0xf]
  %v5232 = vld [vmem:[%s5081 + $0x258] sm:$0xf]
  %v5233 = vld [vmem:[%s5081 + $0x25c] sm:$0xf]
  %v5234 = vld [vmem:[%s5081 + $0x260] sm:$0xf]
  %v5235 = vld [vmem:[%s5081 + $0x264] sm:$0xf]
  %v5236 = vld [vmem:[%s5081 + $0x268] sm:$0xf]
  %v5237 = vld [vmem:[%s5081 + $0x26c] sm:$0xf]
  %v5238 = vld [vmem:[%s5081 + $0x270] sm:$0xf]
  %v5239 = vld [vmem:[%s5081 + $0x274] sm:$0xf]
  %v5240 = vld [vmem:[%s5081 + $0x278] sm:$0xf]
  %v5241 = vld [vmem:[%s5081 + $0x27c] sm:$0xf]
  %v5242 = vld [vmem:[%s5081 + $0x280] sm:$0xf]
  %v5243 = vld [vmem:[%s5081 + $0x284] sm:$0xf]
  %v5244 = vld [vmem:[%s5081 + $0x288] sm:$0xf]
  %v5245 = vld [vmem:[%s5081 + $0x28c] sm:$0xf]
  %v5246 = vld [vmem:[%s5081 + $0x290] sm:$0xf]
  %v5247 = vld [vmem:[%s5081 + $0x294] sm:$0xf]
  %v5248 = vld [vmem:[%s5081 + $0x298] sm:$0xf]
  %v5249 = vld [vmem:[%s5081 + $0x29c] sm:$0xf]
  %v5250 = vld [vmem:[%s5081 + $0x2a0] sm:$0xf]
  %v5251 = vld [vmem:[%s5081 + $0x2a4] sm:$0xf]
  %v5252 = vld [vmem:[%s5081 + $0x2a8] sm:$0xf]
  %v5253 = vld [vmem:[%s5081 + $0x2ac] sm:$0xf]
  %v5254 = vld [vmem:[%s5081 + $0x2b0] sm:$0xf]
  %v5255 = vld [vmem:[%s5081 + $0x2b4] sm:$0xf]
  %v5256 = vld [vmem:[%s5081 + $0x2b8] sm:$0xf]
  %v5257 = vld [vmem:[%s5081 + $0x2bc] sm:$0xf]
  %v5258 = vld [vmem:[%s5081 + $0x2c0] sm:$0xf]
  %v5259 = vld [vmem:[%s5081 + $0x2c4] sm:$0xf]
  %v5260 = vld [vmem:[%s5081 + $0x2c8] sm:$0xf]
  %v5261 = vld [vmem:[%s5081 + $0x2cc] sm:$0xf]
  %v5262 = vld [vmem:[%s5081 + $0x2d0] sm:$0xf]
  %v5263 = vld [vmem:[%s5081 + $0x2d4] sm:$0xf]
  %v5264 = vld [vmem:[%s5081 + $0x2d8] sm:$0xf]
  %v5265 = vld [vmem:[%s5081 + $0x2dc] sm:$0xf]
  %v5266 = vld [vmem:[%s5081 + $0x2e0] sm:$0xf]
  %v5267 = vld [vmem:[%s5081 + $0x2e4] sm:$0xf]
  %v5268 = vld [vmem:[%s5081 + $0x2e8] sm:$0xf]
  %v5269 = vld [vmem:[%s5081 + $0x2ec] sm:$0xf]
  %v5270 = vld [vmem:[%s5081 + $0x2f0] sm:$0xf]
  %v5271 = vld [vmem:[%s5081 + $0x2f4] sm:$0xf]
  %v5272 = vld [vmem:[%s5081 + $0x2f8] sm:$0xf]
  %v5273 = vld [vmem:[%s5081 + $0x2fc] sm:$0xf]
  %v5274 = vld [vmem:[%s5081 + $0x300] sm:$0xf]
  %v5275 = vld [vmem:[%s5081 + $0x304] sm:$0xf]
  %v5276 = vld [vmem:[%s5081 + $0x308] sm:$0xf]
  %v5277 = vld [vmem:[%s5081 + $0x30c] sm:$0xf]
  %v5278 = vld [vmem:[%s5081 + $0x310] sm:$0xf]
  %v5279 = vld [vmem:[%s5081 + $0x314] sm:$0xf]
  %v5280 = vld [vmem:[%s5081 + $0x318] sm:$0xf]
  %v5281 = vld [vmem:[%s5081 + $0x31c] sm:$0xf]
  %v5282 = vld [vmem:[%s5081 + $0x320] sm:$0xf]
  %v5283 = vld [vmem:[%s5081 + $0x324] sm:$0xf]
  %v5284 = vld [vmem:[%s5081 + $0x328] sm:$0xf]
  %v5285 = vld [vmem:[%s5081 + $0x32c] sm:$0xf]
  %v5286 = vld [vmem:[%s5081 + $0x330] sm:$0xf]
  %v5287 = vld [vmem:[%s5081 + $0x334] sm:$0xf]
  %v5288 = vld [vmem:[%s5081 + $0x338] sm:$0xf]
  %v5289 = vld [vmem:[%s5081 + $0x33c] sm:$0xf]
  %v5290 = vld [vmem:[%s5081 + $0x340] sm:$0xf]
  %v5291 = vld [vmem:[%s5081 + $0x344] sm:$0xf]
  %v5292 = vld [vmem:[%s5081 + $0x348] sm:$0xf]
  %v5293 = vld [vmem:[%s5081 + $0x34c] sm:$0xf]
  %v5294 = vld [vmem:[%s5081 + $0x350] sm:$0xf]
  %v5295 = vld [vmem:[%s5081 + $0x354] sm:$0xf]
  %v5296 = vld [vmem:[%s5081 + $0x358] sm:$0xf]
  %v5297 = vld [vmem:[%s5081 + $0x35c] sm:$0xf]
  %v5298 = vld [vmem:[%s5081 + $0x360] sm:$0xf]
  %v5299 = vld [vmem:[%s5081 + $0x364] sm:$0xf]
  %v5300 = vld [vmem:[%s5081 + $0x368] sm:$0xf]
  %v5301 = vld [vmem:[%s5081 + $0x36c] sm:$0xf]
  %v5302 = vld [vmem:[%s5081 + $0x370] sm:$0xf]
  %v5303 = vld [vmem:[%s5081 + $0x374] sm:$0xf]
  %v5304 = vld [vmem:[%s5081 + $0x378] sm:$0xf]
  %v5305 = vld [vmem:[%s5081 + $0x37c] sm:$0xf]
  %v5306 = vld [vmem:[%s5081 + $0x380] sm:$0xf]
  %v5307 = vld [vmem:[%s5081 + $0x384] sm:$0xf]
  %v5308 = vld [vmem:[%s5081 + $0x388] sm:$0xf]
  %v5309 = vld [vmem:[%s5081 + $0x38c] sm:$0xf]
  %v5310 = vld [vmem:[%s5081 + $0x390] sm:$0xf]
  %v5311 = vld [vmem:[%s5081 + $0x394] sm:$0xf]
  %v5312 = vld [vmem:[%s5081 + $0x398] sm:$0xf]
  %v5313 = vld [vmem:[%s5081 + $0x39c] sm:$0xf]
  %v5314 = vld [vmem:[%s5081 + $0x3a0] sm:$0xf]
  %v5315 = vld [vmem:[%s5081 + $0x3a4] sm:$0xf]
  %v5316 = vld [vmem:[%s5081 + $0x3a8] sm:$0xf]
  %v5317 = vld [vmem:[%s5081 + $0x3ac] sm:$0xf]
  %v5318 = vld [vmem:[%s5081 + $0x3b0] sm:$0xf]
  %v5319 = vld [vmem:[%s5081 + $0x3b4] sm:$0xf]
  %v5320 = vld [vmem:[%s5081 + $0x3b8] sm:$0xf]
  %v5321 = vld [vmem:[%s5081 + $0x3bc] sm:$0xf]
  %v5322 = vld [vmem:[%s5081 + $0x3c0] sm:$0xf]
  %v5323 = vld [vmem:[%s5081 + $0x3c4] sm:$0xf]
  %v5324 = vld [vmem:[%s5081 + $0x3c8] sm:$0xf]
  %v5325 = vld [vmem:[%s5081 + $0x3cc] sm:$0xf]
  %v5326 = vld [vmem:[%s5081 + $0x3d0] sm:$0xf]
  %v5327 = vld [vmem:[%s5081 + $0x3d4] sm:$0xf]
  %v5328 = vld [vmem:[%s5081 + $0x3d8] sm:$0xf]
  %v5329 = vld [vmem:[%s5081 + $0x3dc] sm:$0xf]
  %v5330 = vld [vmem:[%s5081 + $0x3e0] sm:$0xf]
  %v5331 = vld [vmem:[%s5081 + $0x3e4] sm:$0xf]
  %v5332 = vld [vmem:[%s5081 + $0x3e8] sm:$0xf]
  %v5333 = vld [vmem:[%s5081 + $0x3ec] sm:$0xf]
  %v5334 = vld [vmem:[%s5081 + $0x3f0] sm:$0xf]
  %v5335 = vld [vmem:[%s5081 + $0x3f4] sm:$0xf]
  %v5336 = vld [vmem:[%s5081 + $0x3f8] sm:$0xf]
  %v5337 = vld [vmem:[%s5081 + $0x3fc] sm:$0xf]
  %v5338 = vperm.slane %v3334, 4
  %v5595 = vunpack.c.l.b16 %v5082
  %v5596 = vunpack.c.l.b16 %v5083
  %v5597 = vunpack.c.l.b16 %v5084
  %v5598 = vunpack.c.l.b16 %v5085
  %v5599 = vunpack.c.l.b16 %v5086
  %v5600 = vunpack.c.l.b16 %v5087
  %v5601 = vunpack.c.l.b16 %v5088
  %v5602 = vunpack.c.l.b16 %v5089
  %v5603 = vunpack.c.l.b16 %v5090
  %v5604 = vunpack.c.l.b16 %v5091
  %v5605 = vunpack.c.l.b16 %v5092
  %v5606 = vunpack.c.l.b16 %v5093
  %v5607 = vunpack.c.l.b16 %v5094
  %v5608 = vunpack.c.l.b16 %v5095
  %v5609 = vunpack.c.l.b16 %v5096
  %v5610 = vunpack.c.l.b16 %v5097
  %v5611 = vunpack.c.l.b16 %v5098
  %v5612 = vunpack.c.l.b16 %v5099
  %v5613 = vunpack.c.l.b16 %v5100
  %v5614 = vunpack.c.l.b16 %v5101
  %v5615 = vunpack.c.l.b16 %v5102
  %v5616 = vunpack.c.l.b16 %v5103
  %v5617 = vunpack.c.l.b16 %v5104
  %v5618 = vunpack.c.l.b16 %v5105
  %v5619 = vunpack.c.l.b16 %v5106
  %v5620 = vunpack.c.l.b16 %v5107
  %v5621 = vunpack.c.l.b16 %v5108
  %v5622 = vunpack.c.l.b16 %v5109
  %v5623 = vunpack.c.l.b16 %v5110
  %v5624 = vunpack.c.l.b16 %v5111
  %v5625 = vunpack.c.l.b16 %v5112
  %v5626 = vunpack.c.l.b16 %v5113
  %v5627 = vunpack.c.l.b16 %v5114
  %v5628 = vunpack.c.l.b16 %v5115
  %v5629 = vunpack.c.l.b16 %v5116
  %v5630 = vunpack.c.l.b16 %v5117
  %v5631 = vunpack.c.l.b16 %v5118
  %v5632 = vunpack.c.l.b16 %v5119
  %v5633 = vunpack.c.l.b16 %v5120
  %v5634 = vunpack.c.l.b16 %v5121
  %v5635 = vunpack.c.l.b16 %v5122
  %v5636 = vunpack.c.l.b16 %v5123
  %v5637 = vunpack.c.l.b16 %v5124
  %v5638 = vunpack.c.l.b16 %v5125
  %v5639 = vunpack.c.l.b16 %v5126
  %v5640 = vunpack.c.l.b16 %v5127
  %v5641 = vunpack.c.l.b16 %v5128
  %v5642 = vunpack.c.l.b16 %v5129
  %v5643 = vunpack.c.l.b16 %v5130
  %v5644 = vunpack.c.l.b16 %v5131
  %v5645 = vunpack.c.l.b16 %v5132
  %v5646 = vunpack.c.l.b16 %v5133
  %v5647 = vunpack.c.l.b16 %v5134
  %v5648 = vunpack.c.l.b16 %v5135
  %v5649 = vunpack.c.l.b16 %v5136
  %v5650 = vunpack.c.l.b16 %v5137
  %v5651 = vunpack.c.l.b16 %v5138
  %v5652 = vunpack.c.l.b16 %v5139
  %v5653 = vunpack.c.l.b16 %v5140
  %v5654 = vunpack.c.l.b16 %v5141
  %v5655 = vunpack.c.l.b16 %v5142
  %v5656 = vunpack.c.l.b16 %v5143
  %v5657 = vunpack.c.l.b16 %v5144
  %v5658 = vunpack.c.l.b16 %v5145
  %v5659 = vunpack.c.l.b16 %v5146
  %v5660 = vunpack.c.l.b16 %v5147
  %v5661 = vunpack.c.l.b16 %v5148
  %v5662 = vunpack.c.l.b16 %v5149
  %v5663 = vunpack.c.l.b16 %v5150
  %v5664 = vunpack.c.l.b16 %v5151
  %v5665 = vunpack.c.l.b16 %v5152
  %v5666 = vunpack.c.l.b16 %v5153
  %v5667 = vunpack.c.l.b16 %v5154
  %v5668 = vunpack.c.l.b16 %v5155
  %v5669 = vunpack.c.l.b16 %v5156
  %v5670 = vunpack.c.l.b16 %v5157
  %v5671 = vunpack.c.l.b16 %v5158
  %v5672 = vunpack.c.l.b16 %v5159
  %v5673 = vunpack.c.l.b16 %v5160
  %v5674 = vunpack.c.l.b16 %v5161
  %v5675 = vunpack.c.l.b16 %v5162
  %v5676 = vunpack.c.l.b16 %v5163
  %v5677 = vunpack.c.l.b16 %v5164
  %v5678 = vunpack.c.l.b16 %v5165
  %v5679 = vunpack.c.l.b16 %v5166
  %v5680 = vunpack.c.l.b16 %v5167
  %v5681 = vunpack.c.l.b16 %v5168
  %v5682 = vunpack.c.l.b16 %v5169
  %v5683 = vunpack.c.l.b16 %v5170
  %v5684 = vunpack.c.l.b16 %v5171
  %v5685 = vunpack.c.l.b16 %v5172
  %v5686 = vunpack.c.l.b16 %v5173
  %v5687 = vunpack.c.l.b16 %v5174
  %v5688 = vunpack.c.l.b16 %v5175
  %v5689 = vunpack.c.l.b16 %v5176
  %v5690 = vunpack.c.l.b16 %v5177
  %v5691 = vunpack.c.l.b16 %v5178
  %v5692 = vunpack.c.l.b16 %v5179
  %v5693 = vunpack.c.l.b16 %v5180
  %v5694 = vunpack.c.l.b16 %v5181
  %v5695 = vunpack.c.l.b16 %v5182
  %v5696 = vunpack.c.l.b16 %v5183
  %v5697 = vunpack.c.l.b16 %v5184
  %v5698 = vunpack.c.l.b16 %v5185
  %v5699 = vunpack.c.l.b16 %v5186
  %v5700 = vunpack.c.l.b16 %v5187
  %v5701 = vunpack.c.l.b16 %v5188
  %v5702 = vunpack.c.l.b16 %v5189
  %v5703 = vunpack.c.l.b16 %v5190
  %v5704 = vunpack.c.l.b16 %v5191
  %v5705 = vunpack.c.l.b16 %v5192
  %v5706 = vunpack.c.l.b16 %v5193
  %v5707 = vunpack.c.l.b16 %v5194
  %v5708 = vunpack.c.l.b16 %v5195
  %v5709 = vunpack.c.l.b16 %v5196
  %v5710 = vunpack.c.l.b16 %v5197
  %v5711 = vunpack.c.l.b16 %v5198
  %v5712 = vunpack.c.l.b16 %v5199
  %v5713 = vunpack.c.l.b16 %v5200
  %v5714 = vunpack.c.l.b16 %v5201
  %v5715 = vunpack.c.l.b16 %v5202
  %v5716 = vunpack.c.l.b16 %v5203
  %v5717 = vunpack.c.l.b16 %v5204
  %v5718 = vunpack.c.l.b16 %v5205
  %v5719 = vunpack.c.l.b16 %v5206
  %v5720 = vunpack.c.l.b16 %v5207
  %v5721 = vunpack.c.l.b16 %v5208
  %v5722 = vunpack.c.l.b16 %v5209
  %v5723 = vunpack.c.l.b16 %v5210
  %v5724 = vunpack.c.l.b16 %v5211
  %v5725 = vunpack.c.l.b16 %v5212
  %v5726 = vunpack.c.l.b16 %v5213
  %v5727 = vunpack.c.l.b16 %v5214
  %v5728 = vunpack.c.l.b16 %v5215
  %v5729 = vunpack.c.l.b16 %v5216
  %v5730 = vunpack.c.l.b16 %v5217
  %v5731 = vunpack.c.l.b16 %v5218
  %v5732 = vunpack.c.l.b16 %v5219
  %v5733 = vunpack.c.l.b16 %v5220
  %v5734 = vunpack.c.l.b16 %v5221
  %v5735 = vunpack.c.l.b16 %v5222
  %v5736 = vunpack.c.l.b16 %v5223
  %v5737 = vunpack.c.l.b16 %v5224
  %v5738 = vunpack.c.l.b16 %v5225
  %v5739 = vunpack.c.l.b16 %v5226
  %v5740 = vunpack.c.l.b16 %v5227
  %v5741 = vunpack.c.l.b16 %v5228
  %v5742 = vunpack.c.l.b16 %v5229
  %v5743 = vunpack.c.l.b16 %v5230
  %v5744 = vunpack.c.l.b16 %v5231
  %v5745 = vunpack.c.l.b16 %v5232
  %v5746 = vunpack.c.l.b16 %v5233
  %v5747 = vunpack.c.l.b16 %v5234
  %v5748 = vunpack.c.l.b16 %v5235
  %v5749 = vunpack.c.l.b16 %v5236
  %v5750 = vunpack.c.l.b16 %v5237
  %v5751 = vunpack.c.l.b16 %v5238
  %v5752 = vunpack.c.l.b16 %v5239
  %v5753 = vunpack.c.l.b16 %v5240
  %v5754 = vunpack.c.l.b16 %v5241
  %v5755 = vunpack.c.l.b16 %v5242
  %v5756 = vunpack.c.l.b16 %v5243
  %v5757 = vunpack.c.l.b16 %v5244
  %v5758 = vunpack.c.l.b16 %v5245
  %v5759 = vunpack.c.l.b16 %v5246
  %v5760 = vunpack.c.l.b16 %v5247
  %v5761 = vunpack.c.l.b16 %v5248
  %v5762 = vunpack.c.l.b16 %v5249
  %v5763 = vunpack.c.l.b16 %v5250
  %v5764 = vunpack.c.l.b16 %v5251
  %v5765 = vunpack.c.l.b16 %v5252
  %v5766 = vunpack.c.l.b16 %v5253
  %v5767 = vunpack.c.l.b16 %v5254
  %v5768 = vunpack.c.l.b16 %v5255
  %v5769 = vunpack.c.l.b16 %v5256
  %v5770 = vunpack.c.l.b16 %v5257
  %v5771 = vunpack.c.l.b16 %v5258
  %v5772 = vunpack.c.l.b16 %v5259
  %v5773 = vunpack.c.l.b16 %v5260
  %v5774 = vunpack.c.l.b16 %v5261
  %v5775 = vunpack.c.l.b16 %v5262
  %v5776 = vunpack.c.l.b16 %v5263
  %v5777 = vunpack.c.l.b16 %v5264
  %v5778 = vunpack.c.l.b16 %v5265
  %v5779 = vunpack.c.l.b16 %v5266
  %v5780 = vunpack.c.l.b16 %v5267
  %v5781 = vunpack.c.l.b16 %v5268
  %v5782 = vunpack.c.l.b16 %v5269
  %v5783 = vunpack.c.l.b16 %v5270
  %v5784 = vunpack.c.l.b16 %v5271
  %v5785 = vunpack.c.l.b16 %v5272
  %v5786 = vunpack.c.l.b16 %v5273
  %v5787 = vunpack.c.l.b16 %v5274
  %v5788 = vunpack.c.l.b16 %v5275
  %v5789 = vunpack.c.l.b16 %v5276
  %v5790 = vunpack.c.l.b16 %v5277
  %v5791 = vunpack.c.l.b16 %v5278
  %v5792 = vunpack.c.l.b16 %v5279
  %v5793 = vunpack.c.l.b16 %v5280
  %v5794 = vunpack.c.l.b16 %v5281
  %v5795 = vunpack.c.l.b16 %v5282
  %v5796 = vunpack.c.l.b16 %v5283
  %v5797 = vunpack.c.l.b16 %v5284
  %v5798 = vunpack.c.l.b16 %v5285
  %v5799 = vunpack.c.l.b16 %v5286
  %v5800 = vunpack.c.l.b16 %v5287
  %v5801 = vunpack.c.l.b16 %v5288
  %v5802 = vunpack.c.l.b16 %v5289
  %v5803 = vunpack.c.l.b16 %v5290
  %v5804 = vunpack.c.l.b16 %v5291
  %v5805 = vunpack.c.l.b16 %v5292
  %v5806 = vunpack.c.l.b16 %v5293
  %v5807 = vunpack.c.l.b16 %v5294
  %v5808 = vunpack.c.l.b16 %v5295
  %v5809 = vunpack.c.l.b16 %v5296
  %v5810 = vunpack.c.l.b16 %v5297
  %v5811 = vunpack.c.l.b16 %v5298
  %v5812 = vunpack.c.l.b16 %v5299
  %v5813 = vunpack.c.l.b16 %v5300
  %v5814 = vunpack.c.l.b16 %v5301
  %v5815 = vunpack.c.l.b16 %v5302
  %v5816 = vunpack.c.l.b16 %v5303
  %v5817 = vunpack.c.l.b16 %v5304
  %v5818 = vunpack.c.l.b16 %v5305
  %v5819 = vunpack.c.l.b16 %v5306
  %v5820 = vunpack.c.l.b16 %v5307
  %v5821 = vunpack.c.l.b16 %v5308
  %v5822 = vunpack.c.l.b16 %v5309
  %v5823 = vunpack.c.l.b16 %v5310
  %v5824 = vunpack.c.l.b16 %v5311
  %v5825 = vunpack.c.l.b16 %v5312
  %v5826 = vunpack.c.l.b16 %v5313
  %v5827 = vunpack.c.l.b16 %v5314
  %v5828 = vunpack.c.l.b16 %v5315
  %v5829 = vunpack.c.l.b16 %v5316
  %v5830 = vunpack.c.l.b16 %v5317
  %v5831 = vunpack.c.l.b16 %v5318
  %v5832 = vunpack.c.l.b16 %v5319
  %v5833 = vunpack.c.l.b16 %v5320
  %v5834 = vunpack.c.l.b16 %v5321
  %v5835 = vunpack.c.l.b16 %v5322
  %v5836 = vunpack.c.l.b16 %v5323
  %v5837 = vunpack.c.l.b16 %v5324
  %v5838 = vunpack.c.l.b16 %v5325
  %v5839 = vunpack.c.l.b16 %v5326
  %v5840 = vunpack.c.l.b16 %v5327
  %v5841 = vunpack.c.l.b16 %v5328
  %v5842 = vunpack.c.l.b16 %v5329
  %v5843 = vunpack.c.l.b16 %v5330
  %v5844 = vunpack.c.l.b16 %v5331
  %v5845 = vunpack.c.l.b16 %v5332
  %v5846 = vunpack.c.l.b16 %v5333
  %v5847 = vunpack.c.l.b16 %v5334
  %v5848 = vunpack.c.l.b16 %v5335
  %v5849 = vunpack.c.l.b16 %v5336
  %v5850 = vunpack.c.l.b16 %v5337
  %v5851 = vpack.c.b16 %v5596, %v5595
  %v5852 = vpack.c.b16 %v5598, %v5597
  %v5853 = vpack.c.b16 %v5600, %v5599
  %v5854 = vpack.c.b16 %v5602, %v5601
  %v5855 = vpack.c.b16 %v5604, %v5603
  %v5856 = vpack.c.b16 %v5606, %v5605
  %v5857 = vpack.c.b16 %v5608, %v5607
  %v5858 = vpack.c.b16 %v5610, %v5609
  %v5859 = vpack.c.b16 %v5612, %v5611
  %v5860 = vpack.c.b16 %v5614, %v5613
  %v5861 = vpack.c.b16 %v5616, %v5615
  %v5862 = vpack.c.b16 %v5618, %v5617
  %v5863 = vpack.c.b16 %v5620, %v5619
  %v5864 = vpack.c.b16 %v5622, %v5621
  %v5865 = vpack.c.b16 %v5624, %v5623
  %v5866 = vpack.c.b16 %v5626, %v5625
  %v5867 = vpack.c.b16 %v5628, %v5627
  %v5868 = vpack.c.b16 %v5630, %v5629
  %v5869 = vpack.c.b16 %v5632, %v5631
  %v5870 = vpack.c.b16 %v5634, %v5633
  %v5871 = vpack.c.b16 %v5636, %v5635
  %v5872 = vpack.c.b16 %v5638, %v5637
  %v5873 = vpack.c.b16 %v5640, %v5639
  %v5874 = vpack.c.b16 %v5642, %v5641
  %v5875 = vpack.c.b16 %v5644, %v5643
  %v5876 = vpack.c.b16 %v5646, %v5645
  %v5877 = vpack.c.b16 %v5648, %v5647
  %v5878 = vpack.c.b16 %v5650, %v5649
  %v5879 = vpack.c.b16 %v5652, %v5651
  %v5880 = vpack.c.b16 %v5654, %v5653
  %v5881 = vpack.c.b16 %v5656, %v5655
  %v5882 = vpack.c.b16 %v5658, %v5657
  %v5883 = vpack.c.b16 %v5660, %v5659
  %v5884 = vpack.c.b16 %v5662, %v5661
  %v5885 = vpack.c.b16 %v5664, %v5663
  %v5886 = vpack.c.b16 %v5666, %v5665
  %v5887 = vpack.c.b16 %v5668, %v5667
  %v5888 = vpack.c.b16 %v5670, %v5669
  %v5889 = vpack.c.b16 %v5672, %v5671
  %v5890 = vpack.c.b16 %v5674, %v5673
  %v5891 = vpack.c.b16 %v5676, %v5675
  %v5892 = vpack.c.b16 %v5678, %v5677
  %v5893 = vpack.c.b16 %v5680, %v5679
  %v5894 = vpack.c.b16 %v5682, %v5681
  %v5895 = vpack.c.b16 %v5684, %v5683
  %v5896 = vpack.c.b16 %v5686, %v5685
  %v5897 = vpack.c.b16 %v5688, %v5687
  %v5898 = vpack.c.b16 %v5690, %v5689
  %v5899 = vpack.c.b16 %v5692, %v5691
  %v5900 = vpack.c.b16 %v5694, %v5693
  %v5901 = vpack.c.b16 %v5696, %v5695
  %v5902 = vpack.c.b16 %v5698, %v5697
  %v5903 = vpack.c.b16 %v5700, %v5699
  %v5904 = vpack.c.b16 %v5702, %v5701
  %v5905 = vpack.c.b16 %v5704, %v5703
  %v5906 = vpack.c.b16 %v5706, %v5705
  %v5907 = vpack.c.b16 %v5708, %v5707
  %v5908 = vpack.c.b16 %v5710, %v5709
  %v5909 = vpack.c.b16 %v5712, %v5711
  %v5910 = vpack.c.b16 %v5714, %v5713
  %v5911 = vpack.c.b16 %v5716, %v5715
  %v5912 = vpack.c.b16 %v5718, %v5717
  %v5913 = vpack.c.b16 %v5720, %v5719
  %v5914 = vpack.c.b16 %v5722, %v5721
  %v5915 = vpack.c.b16 %v5724, %v5723
  %v5916 = vpack.c.b16 %v5726, %v5725
  %v5917 = vpack.c.b16 %v5728, %v5727
  %v5918 = vpack.c.b16 %v5730, %v5729
  %v5919 = vpack.c.b16 %v5732, %v5731
  %v5920 = vpack.c.b16 %v5734, %v5733
  %v5921 = vpack.c.b16 %v5736, %v5735
  %v5922 = vpack.c.b16 %v5738, %v5737
  %v5923 = vpack.c.b16 %v5740, %v5739
  %v5924 = vpack.c.b16 %v5742, %v5741
  %v5925 = vpack.c.b16 %v5744, %v5743
  %v5926 = vpack.c.b16 %v5746, %v5745
  %v5927 = vpack.c.b16 %v5748, %v5747
  %v5928 = vpack.c.b16 %v5750, %v5749
  %v5929 = vpack.c.b16 %v5752, %v5751
  %v5930 = vpack.c.b16 %v5754, %v5753
  %v5931 = vpack.c.b16 %v5756, %v5755
  %v5932 = vpack.c.b16 %v5758, %v5757
  %v5933 = vpack.c.b16 %v5760, %v5759
  %v5934 = vpack.c.b16 %v5762, %v5761
  %v5935 = vpack.c.b16 %v5764, %v5763
  %v5936 = vpack.c.b16 %v5766, %v5765
  %v5937 = vpack.c.b16 %v5768, %v5767
  %v5938 = vpack.c.b16 %v5770, %v5769
  %v5939 = vpack.c.b16 %v5772, %v5771
  %v5940 = vpack.c.b16 %v5774, %v5773
  %v5941 = vpack.c.b16 %v5776, %v5775
  %v5942 = vpack.c.b16 %v5778, %v5777
  %v5943 = vpack.c.b16 %v5780, %v5779
  %v5944 = vpack.c.b16 %v5782, %v5781
  %v5945 = vpack.c.b16 %v5784, %v5783
  %v5946 = vpack.c.b16 %v5786, %v5785
  %v5947 = vpack.c.b16 %v5788, %v5787
  %v5948 = vpack.c.b16 %v5790, %v5789
  %v5949 = vpack.c.b16 %v5792, %v5791
  %v5950 = vpack.c.b16 %v5794, %v5793
  %v5951 = vpack.c.b16 %v5796, %v5795
  %v5952 = vpack.c.b16 %v5798, %v5797
  %v5953 = vpack.c.b16 %v5800, %v5799
  %v5954 = vpack.c.b16 %v5802, %v5801
  %v5955 = vpack.c.b16 %v5804, %v5803
  %v5956 = vpack.c.b16 %v5806, %v5805
  %v5957 = vpack.c.b16 %v5808, %v5807
  %v5958 = vpack.c.b16 %v5810, %v5809
  %v5959 = vpack.c.b16 %v5812, %v5811
  %v5960 = vpack.c.b16 %v5814, %v5813
  %v5961 = vpack.c.b16 %v5816, %v5815
  %v5962 = vpack.c.b16 %v5818, %v5817
  %v5963 = vpack.c.b16 %v5820, %v5819
  %v5964 = vpack.c.b16 %v5822, %v5821
  %v5965 = vpack.c.b16 %v5824, %v5823
  %v5966 = vpack.c.b16 %v5826, %v5825
  %v5967 = vpack.c.b16 %v5828, %v5827
  %v5968 = vpack.c.b16 %v5830, %v5829
  %v5969 = vpack.c.b16 %v5832, %v5831
  %v5970 = vpack.c.b16 %v5834, %v5833
  %v5971 = vpack.c.b16 %v5836, %v5835
  %v5972 = vpack.c.b16 %v5838, %v5837
  %v5973 = vpack.c.b16 %v5840, %v5839
  %v5974 = vpack.c.b16 %v5842, %v5841
  %v5975 = vpack.c.b16 %v5844, %v5843
  %v5976 = vpack.c.b16 %v5846, %v5845
  %v5977 = vpack.c.b16 %v5848, %v5847
  %v5978 = vpack.c.b16 %v5850, %v5849
  %6107 = vmatpush.bf16.msra.mxu0 %v5858
  %6108 = vmatpush.bf16.msra.mxu0 %v5857
  %6109 = vmatpush.bf16.msra.mxu0 %v5856
  %6110 = vmatpush.bf16.msra.mxu0 %v5855
  %6111 = vmatpush.bf16.msra.mxu0 %v5854
  %6112 = vmatpush.bf16.msra.mxu0 %v5853
  %6113 = vmatpush.bf16.msra.mxu0 %v5852
  %6114 = vmatpush.bf16.msra.mxu0 %v5851
  %6115 = vmatmul.bf16.gmra.mxu0 %v5049
  %v6116 = vpop.f32.mrf.mxu0
  %v6117 = vadd.f32 %v5338, %v6116
  %v6118 = vpop.f32.mrf.mxu0
  %v6119 = vadd.f32 %v5338, %v6118
  %6120 = vmatmul.bf16.gmra.mxu0 %v5065
  %v6121 = vpop.f32.mrf.mxu0
  %v6122 = vadd.f32 %v5338, %v6121
  %v6123 = vpop.f32.mrf.mxu0
  %v6124 = vadd.f32 %v5338, %v6123
  %6125 = vdwg.mxu0
  %6126 = vmatpush.bf16.msra.mxu0 %v5866
  %6127 = vmatpush.bf16.msra.mxu0 %v5865
  %6128 = vmatpush.bf16.msra.mxu0 %v5864
  %6129 = vmatpush.bf16.msra.mxu0 %v5863
  %6130 = vmatpush.bf16.msra.mxu0 %v5862
  %6131 = vmatpush.bf16.msra.mxu0 %v5861
  %6132 = vmatpush.bf16.msra.mxu0 %v5860
  %6133 = vmatpush.bf16.msra.mxu0 %v5859
  %6134 = vmatmul.bf16.gmra.mxu0 %v5050
  %v6135 = vpop.f32.mrf.mxu0
  %v6136 = vadd.f32 %v6117, %v6135
  %v6137 = vpop.f32.mrf.mxu0
  %v6138 = vadd.f32 %v6119, %v6137
  %6139 = vmatmul.bf16.gmra.mxu0 %v5066
  %v6140 = vpop.f32.mrf.mxu0
  %v6141 = vadd.f32 %v6122, %v6140
  %v6142 = vpop.f32.mrf.mxu0
  %v6143 = vadd.f32 %v6124, %v6142
  %6144 = vdwg.mxu0
  %6145 = vmatpush.bf16.msra.mxu0 %v5874
  %6146 = vmatpush.bf16.msra.mxu0 %v5873
  %6147 = vmatpush.bf16.msra.mxu0 %v5872
  %6148 = vmatpush.bf16.msra.mxu0 %v5871
  %6149 = vmatpush.bf16.msra.mxu0 %v5870
  %6150 = vmatpush.bf16.msra.mxu0 %v5869
  %6151 = vmatpush.bf16.msra.mxu0 %v5868
  %6152 = vmatpush.bf16.msra.mxu0 %v5867
  %6153 = vmatmul.bf16.gmra.mxu0 %v5051
  %v6154 = vpop.f32.mrf.mxu0
  %v6155 = vadd.f32 %v6136, %v6154
  %v6156 = vpop.f32.mrf.mxu0
  %v6157 = vadd.f32 %v6138, %v6156
  %6158 = vmatmul.bf16.gmra.mxu0 %v5067
  %v6159 = vpop.f32.mrf.mxu0
  %v6160 = vadd.f32 %v6141, %v6159
  %v6161 = vpop.f32.mrf.mxu0
  %v6162 = vadd.f32 %v6143, %v6161
  %6163 = vdwg.mxu0
  %6164 = vmatpush.bf16.msra.mxu0 %v5882
  %6165 = vmatpush.bf16.msra.mxu0 %v5881
  %6166 = vmatpush.bf16.msra.mxu0 %v5880
  %6167 = vmatpush.bf16.msra.mxu0 %v5879
  %6168 = vmatpush.bf16.msra.mxu0 %v5878
  %6169 = vmatpush.bf16.msra.mxu0 %v5877
  %6170 = vmatpush.bf16.msra.mxu0 %v5876
  %6171 = vmatpush.bf16.msra.mxu0 %v5875
  %6172 = vmatmul.bf16.gmra.mxu0 %v5052
  %v6173 = vpop.f32.mrf.mxu0
  %v6174 = vadd.f32 %v6155, %v6173
  %v6175 = vpop.f32.mrf.mxu0
  %v6176 = vadd.f32 %v6157, %v6175
  %6177 = vmatmul.bf16.gmra.mxu0 %v5068
  %v6178 = vpop.f32.mrf.mxu0
  %v6179 = vadd.f32 %v6160, %v6178
  %v6180 = vpop.f32.mrf.mxu0
  %v6181 = vadd.f32 %v6162, %v6180
  %6182 = vdwg.mxu0
  %6183 = vmatpush.bf16.msra.mxu0 %v5890
  %6184 = vmatpush.bf16.msra.mxu0 %v5889
  %6185 = vmatpush.bf16.msra.mxu0 %v5888
  %6186 = vmatpush.bf16.msra.mxu0 %v5887
  %6187 = vmatpush.bf16.msra.mxu0 %v5886
  %6188 = vmatpush.bf16.msra.mxu0 %v5885
  %6189 = vmatpush.bf16.msra.mxu0 %v5884
  %6190 = vmatpush.bf16.msra.mxu0 %v5883
  %6191 = vmatmul.bf16.gmra.mxu0 %v5053
  %v6192 = vpop.f32.mrf.mxu0
  %v6193 = vadd.f32 %v6174, %v6192
  %v6194 = vpop.f32.mrf.mxu0
  %v6195 = vadd.f32 %v6176, %v6194
  %6196 = vmatmul.bf16.gmra.mxu0 %v5069
  %v6197 = vpop.f32.mrf.mxu0
  %v6198 = vadd.f32 %v6179, %v6197
  %v6199 = vpop.f32.mrf.mxu0
  %v6200 = vadd.f32 %v6181, %v6199
  %6201 = vdwg.mxu0
  %6202 = vmatpush.bf16.msra.mxu0 %v5898
  %6203 = vmatpush.bf16.msra.mxu0 %v5897
  %6204 = vmatpush.bf16.msra.mxu0 %v5896
  %6205 = vmatpush.bf16.msra.mxu0 %v5895
  %6206 = vmatpush.bf16.msra.mxu0 %v5894
  %6207 = vmatpush.bf16.msra.mxu0 %v5893
  %6208 = vmatpush.bf16.msra.mxu0 %v5892
  %6209 = vmatpush.bf16.msra.mxu0 %v5891
  %6210 = vmatmul.bf16.gmra.mxu0 %v5054
  %v6211 = vpop.f32.mrf.mxu0
  %v6212 = vadd.f32 %v6193, %v6211
  %v6213 = vpop.f32.mrf.mxu0
  %v6214 = vadd.f32 %v6195, %v6213
  %6215 = vmatmul.bf16.gmra.mxu0 %v5070
  %v6216 = vpop.f32.mrf.mxu0
  %v6217 = vadd.f32 %v6198, %v6216
  %v6218 = vpop.f32.mrf.mxu0
  %v6219 = vadd.f32 %v6200, %v6218
  %6220 = vdwg.mxu0
  %6221 = vmatpush.bf16.msra.mxu0 %v5906
  %6222 = vmatpush.bf16.msra.mxu0 %v5905
  %6223 = vmatpush.bf16.msra.mxu0 %v5904
  %6224 = vmatpush.bf16.msra.mxu0 %v5903
  %6225 = vmatpush.bf16.msra.mxu0 %v5902
  %6226 = vmatpush.bf16.msra.mxu0 %v5901
  %6227 = vmatpush.bf16.msra.mxu0 %v5900
  %6228 = vmatpush.bf16.msra.mxu0 %v5899
  %6229 = vmatmul.bf16.gmra.mxu0 %v5055
  %v6230 = vpop.f32.mrf.mxu0
  %v6231 = vadd.f32 %v6212, %v6230
  %v6232 = vpop.f32.mrf.mxu0
  %v6233 = vadd.f32 %v6214, %v6232
  %6234 = vmatmul.bf16.gmra.mxu0 %v5071
  %v6235 = vpop.f32.mrf.mxu0
  %v6236 = vadd.f32 %v6217, %v6235
  %v6237 = vpop.f32.mrf.mxu0
  %v6238 = vadd.f32 %v6219, %v6237
  %6239 = vdwg.mxu0
  %6240 = vmatpush.bf16.msra.mxu0 %v5914
  %6241 = vmatpush.bf16.msra.mxu0 %v5913
  %6242 = vmatpush.bf16.msra.mxu0 %v5912
  %6243 = vmatpush.bf16.msra.mxu0 %v5911
  %6244 = vmatpush.bf16.msra.mxu0 %v5910
  %6245 = vmatpush.bf16.msra.mxu0 %v5909
  %6246 = vmatpush.bf16.msra.mxu0 %v5908
  %6247 = vmatpush.bf16.msra.mxu0 %v5907
  %6248 = vmatmul.bf16.gmra.mxu0 %v5056
  %v6249 = vpop.f32.mrf.mxu0
  %v6250 = vadd.f32 %v6231, %v6249
  %v6251 = vpop.f32.mrf.mxu0
  %v6252 = vadd.f32 %v6233, %v6251
  %6253 = vmatmul.bf16.gmra.mxu0 %v5072
  %v6254 = vpop.f32.mrf.mxu0
  %v6255 = vadd.f32 %v6236, %v6254
  %v6256 = vpop.f32.mrf.mxu0
  %v6257 = vadd.f32 %v6238, %v6256
  %6258 = vdwg.mxu0
  %6259 = vmatpush.bf16.msra.mxu0 %v5922
  %6260 = vmatpush.bf16.msra.mxu0 %v5921
  %6261 = vmatpush.bf16.msra.mxu0 %v5920
  %6262 = vmatpush.bf16.msra.mxu0 %v5919
  %6263 = vmatpush.bf16.msra.mxu0 %v5918
  %6264 = vmatpush.bf16.msra.mxu0 %v5917
  %6265 = vmatpush.bf16.msra.mxu0 %v5916
  %6266 = vmatpush.bf16.msra.mxu0 %v5915
  %6267 = vmatmul.bf16.gmra.mxu0 %v5057
  %v6268 = vpop.f32.mrf.mxu0
  %v6269 = vadd.f32 %v6250, %v6268
  %v6270 = vpop.f32.mrf.mxu0
  %v6271 = vadd.f32 %v6252, %v6270
  %6272 = vmatmul.bf16.gmra.mxu0 %v5073
  %v6273 = vpop.f32.mrf.mxu0
  %v6274 = vadd.f32 %v6255, %v6273
  %v6275 = vpop.f32.mrf.mxu0
  %v6276 = vadd.f32 %v6257, %v6275
  %6277 = vdwg.mxu0
  %6278 = vmatpush.bf16.msra.mxu0 %v5930
  %6279 = vmatpush.bf16.msra.mxu0 %v5929
  %6280 = vmatpush.bf16.msra.mxu0 %v5928
  %6281 = vmatpush.bf16.msra.mxu0 %v5927
  %6282 = vmatpush.bf16.msra.mxu0 %v5926
  %6283 = vmatpush.bf16.msra.mxu0 %v5925
  %6284 = vmatpush.bf16.msra.mxu0 %v5924
  %6285 = vmatpush.bf16.msra.mxu0 %v5923
  %6286 = vmatmul.bf16.gmra.mxu0 %v5058
  %v6287 = vpop.f32.mrf.mxu0
  %v6288 = vadd.f32 %v6269, %v6287
  %v6289 = vpop.f32.mrf.mxu0
  %v6290 = vadd.f32 %v6271, %v6289
  %6291 = vmatmul.bf16.gmra.mxu0 %v5074
  %v6292 = vpop.f32.mrf.mxu0
  %v6293 = vadd.f32 %v6274, %v6292
  %v6294 = vpop.f32.mrf.mxu0
  %v6295 = vadd.f32 %v6276, %v6294
  %6296 = vdwg.mxu0
  %6297 = vmatpush.bf16.msra.mxu0 %v5938
  %6298 = vmatpush.bf16.msra.mxu0 %v5937
  %6299 = vmatpush.bf16.msra.mxu0 %v5936
  %6300 = vmatpush.bf16.msra.mxu0 %v5935
  %6301 = vmatpush.bf16.msra.mxu0 %v5934
  %6302 = vmatpush.bf16.msra.mxu0 %v5933
  %6303 = vmatpush.bf16.msra.mxu0 %v5932
  %6304 = vmatpush.bf16.msra.mxu0 %v5931
  %6305 = vmatmul.bf16.gmra.mxu0 %v5059
  %v6306 = vpop.f32.mrf.mxu0
  %v6307 = vadd.f32 %v6288, %v6306
  %v6308 = vpop.f32.mrf.mxu0
  %v6309 = vadd.f32 %v6290, %v6308
  %6310 = vmatmul.bf16.gmra.mxu0 %v5075
  %v6311 = vpop.f32.mrf.mxu0
  %v6312 = vadd.f32 %v6293, %v6311
  %v6313 = vpop.f32.mrf.mxu0
  %v6314 = vadd.f32 %v6295, %v6313
  %6315 = vdwg.mxu0
  %6316 = vmatpush.bf16.msra.mxu0 %v5946
  %6317 = vmatpush.bf16.msra.mxu0 %v5945
  %6318 = vmatpush.bf16.msra.mxu0 %v5944
  %6319 = vmatpush.bf16.msra.mxu0 %v5943
  %6320 = vmatpush.bf16.msra.mxu0 %v5942
  %6321 = vmatpush.bf16.msra.mxu0 %v5941
  %6322 = vmatpush.bf16.msra.mxu0 %v5940
  %6323 = vmatpush.bf16.msra.mxu0 %v5939
  %6324 = vmatmul.bf16.gmra.mxu0 %v5060
  %v6325 = vpop.f32.mrf.mxu0
  %v6326 = vadd.f32 %v6307, %v6325
  %v6327 = vpop.f32.mrf.mxu0
  %v6328 = vadd.f32 %v6309, %v6327
  %6329 = vmatmul.bf16.gmra.mxu0 %v5076
  %v6330 = vpop.f32.mrf.mxu0
  %v6331 = vadd.f32 %v6312, %v6330
  %v6332 = vpop.f32.mrf.mxu0
  %v6333 = vadd.f32 %v6314, %v6332
  %6334 = vdwg.mxu0
  %6335 = vmatpush.bf16.msra.mxu0 %v5954
  %6336 = vmatpush.bf16.msra.mxu0 %v5953
  %6337 = vmatpush.bf16.msra.mxu0 %v5952
  %6338 = vmatpush.bf16.msra.mxu0 %v5951
  %6339 = vmatpush.bf16.msra.mxu0 %v5950
  %6340 = vmatpush.bf16.msra.mxu0 %v5949
  %6341 = vmatpush.bf16.msra.mxu0 %v5948
  %6342 = vmatpush.bf16.msra.mxu0 %v5947
  %6343 = vmatmul.bf16.gmra.mxu0 %v5061
  %v6344 = vpop.f32.mrf.mxu0
  %v6345 = vadd.f32 %v6326, %v6344
  %v6346 = vpop.f32.mrf.mxu0
  %v6347 = vadd.f32 %v6328, %v6346
  %6348 = vmatmul.bf16.gmra.mxu0 %v5077
  %v6349 = vpop.f32.mrf.mxu0
  %v6350 = vadd.f32 %v6331, %v6349
  %v6351 = vpop.f32.mrf.mxu0
  %v6352 = vadd.f32 %v6333, %v6351
  %6353 = vdwg.mxu0
  %6354 = vmatpush.bf16.msra.mxu0 %v5962
  %6355 = vmatpush.bf16.msra.mxu0 %v5961
  %6356 = vmatpush.bf16.msra.mxu0 %v5960
  %6357 = vmatpush.bf16.msra.mxu0 %v5959
  %6358 = vmatpush.bf16.msra.mxu0 %v5958
  %6359 = vmatpush.bf16.msra.mxu0 %v5957
  %6360 = vmatpush.bf16.msra.mxu0 %v5956
  %6361 = vmatpush.bf16.msra.mxu0 %v5955
  %6362 = vmatmul.bf16.gmra.mxu0 %v5062
  %v6363 = vpop.f32.mrf.mxu0
  %v6364 = vadd.f32 %v6345, %v6363
  %v6365 = vpop.f32.mrf.mxu0
  %v6366 = vadd.f32 %v6347, %v6365
  %6367 = vmatmul.bf16.gmra.mxu0 %v5078
  %v6368 = vpop.f32.mrf.mxu0
  %v6369 = vadd.f32 %v6350, %v6368
  %v6370 = vpop.f32.mrf.mxu0
  %v6371 = vadd.f32 %v6352, %v6370
  %6372 = vdwg.mxu0
  %6373 = vmatpush.bf16.msra.mxu0 %v5970
  %6374 = vmatpush.bf16.msra.mxu0 %v5969
  %6375 = vmatpush.bf16.msra.mxu0 %v5968
  %6376 = vmatpush.bf16.msra.mxu0 %v5967
  %6377 = vmatpush.bf16.msra.mxu0 %v5966
  %6378 = vmatpush.bf16.msra.mxu0 %v5965
  %6379 = vmatpush.bf16.msra.mxu0 %v5964
  %6380 = vmatpush.bf16.msra.mxu0 %v5963
  %6381 = vmatmul.bf16.gmra.mxu0 %v5063
  %v6382 = vpop.f32.mrf.mxu0
  %v6383 = vadd.f32 %v6364, %v6382
  %v6384 = vpop.f32.mrf.mxu0
  %v6385 = vadd.f32 %v6366, %v6384
  %6386 = vmatmul.bf16.gmra.mxu0 %v5079
  %v6387 = vpop.f32.mrf.mxu0
  %v6388 = vadd.f32 %v6369, %v6387
  %v6389 = vpop.f32.mrf.mxu0
  %v6390 = vadd.f32 %v6371, %v6389
  %6391 = vdwg.mxu0
  %6392 = vmatpush.bf16.msra.mxu0 %v5978
  %6393 = vmatpush.bf16.msra.mxu0 %v5977
  %6394 = vmatpush.bf16.msra.mxu0 %v5976
  %6395 = vmatpush.bf16.msra.mxu0 %v5975
  %6396 = vmatpush.bf16.msra.mxu0 %v5974
  %6397 = vmatpush.bf16.msra.mxu0 %v5973
  %6398 = vmatpush.bf16.msra.mxu0 %v5972
  %6399 = vmatpush.bf16.msra.mxu0 %v5971
  %6400 = vmatmul.bf16.gmra.mxu0 %v5064
  %v6401 = vpop.f32.mrf.mxu0
  %v6402 = vadd.f32 %v6383, %v6401
  %v6403 = vpop.f32.mrf.mxu0
  %v6404 = vadd.f32 %v6385, %v6403
  %6405 = vmatmul.bf16.gmra.mxu0 %v5080
  %v6406 = vpop.f32.mrf.mxu0
  %v6407 = vadd.f32 %v6388, %v6406
  %v6408 = vpop.f32.mrf.mxu0
  %v6409 = vadd.f32 %v6390, %v6408
  %6410 = vdwg.mxu0
  %v6411 = vadd.f32 %v4439, %v6402
  %v6412 = vadd.f32 %v4440, %v6404
  %v6413 = vadd.f32 %v4441, %v6407
  %v6414 = vadd.f32 %v4442, %v6409
  %v6415 = vsel %vm157, %v6411, 0.0
  %6416 = vadd.xlane.f32.xlu0 %v6415
  %v6417 = vpop.xlane.xlu0 %6416
  %v6418 = vsel %vm157, %v6412, 0.0
  %6419 = vadd.xlane.f32.xlu0 %v6418
  %v6420 = vpop.xlane.xlu0 %6419
  %v6421 = vsel %vm157, %v6413, 0.0
  %6422 = vadd.xlane.f32.xlu0 %v6421
  %v6423 = vpop.xlane.xlu0 %6422
  %v6424 = vsel %vm157, %v6414, 0.0
  %6425 = vadd.xlane.f32.xlu0 %v6424
  %v6426 = vpop.xlane.xlu0 %6425
  %v6427 = vmul.f32 %v6417, %v1174
  %v6428 = vmul.f32 %v6420, %v1174
  %v6429 = vmul.f32 %v6423, %v1174
  %v6430 = vmul.f32 %v6426, %v1174
  %v6431 = vsub.f32 %v6411, %v6427
  %v6432 = vsub.f32 %v6412, %v6428
  %v6433 = vsub.f32 %v6413, %v6429
  %v6434 = vsub.f32 %v6414, %v6430
  %v6435 = vmul.f32 %v6431, %v6431
  %v6436 = vmul.f32 %v6432, %v6432
  %v6437 = vmul.f32 %v6433, %v6433
  %v6438 = vmul.f32 %v6434, %v6434
  %v6439 = vsel %vm157, %v6435, 0.0
  %6440 = vadd.xlane.f32.xlu0 %v6439
  %v6441 = vpop.xlane.xlu0 %6440
  %v6442 = vsel %vm157, %v6436, 0.0
  %6443 = vadd.xlane.f32.xlu0 %v6442
  %v6444 = vpop.xlane.xlu0 %6443
  %v6445 = vsel %vm157, %v6437, 0.0
  %6446 = vadd.xlane.f32.xlu0 %v6445
  %v6447 = vpop.xlane.xlu0 %6446
  %v6448 = vsel %vm157, %v6438, 0.0
  %6449 = vadd.xlane.f32.xlu0 %v6448
  %v6450 = vpop.xlane.xlu0 %6449
  %v6451 = vmul.f32 %v6441, %v1174
  %v6452 = vmul.f32 %v6444, %v1174
  %v6453 = vmul.f32 %v6447, %v1174
  %v6454 = vmul.f32 %v6450, %v1174
  %v6455 = vadd.f32 %v6451, 1e-05
  %v6456 = vadd.f32 %v6452, 1e-05
  %v6457 = vadd.f32 %v6453, 1e-05
  %v6458 = vadd.f32 %v6454, 1e-05
  %v6459 = vrsqrt.pop %v6455
  %v6460 = vmul.f32 %v6459, %v6455
  %v6461 = vmul.f32 %v6460, %v6459
  %v6462 = vmul.f32 0.5, %v6461
  %v6463 = vsub.f32 1.5, %v6462
  %v6464 = vmul.f32 %v6459, %v6463
  %vm6465 = vweird.f32 %v6455
  %vm6466 = vweird.f32 %v6459
  %vm6467 = vmor %vm6465, %vm6466
  %v6468 = vsel %vm6467, %v6459, %v6464
  %v6469 = vrsqrt.pop %v6456
  %v6470 = vmul.f32 %v6469, %v6456
  %v6471 = vmul.f32 %v6470, %v6469
  %v6472 = vmul.f32 0.5, %v6471
  %v6473 = vsub.f32 1.5, %v6472
  %v6474 = vmul.f32 %v6469, %v6473
  %vm6475 = vweird.f32 %v6456
  %vm6476 = vweird.f32 %v6469
  %vm6477 = vmor %vm6475, %vm6476
  %v6478 = vsel %vm6477, %v6469, %v6474
  %v6479 = vrsqrt.pop %v6457
  %v6480 = vmul.f32 %v6479, %v6457
  %v6481 = vmul.f32 %v6480, %v6479
  %v6482 = vmul.f32 0.5, %v6481
  %v6483 = vsub.f32 1.5, %v6482
  %v6484 = vmul.f32 %v6479, %v6483
  %vm6485 = vweird.f32 %v6457
  %vm6486 = vweird.f32 %v6479
  %vm6487 = vmor %vm6485, %vm6486
  %v6488 = vsel %vm6487, %v6479, %v6484
  %v6489 = vrsqrt.pop %v6458
  %v6490 = vmul.f32 %v6489, %v6458
  %v6491 = vmul.f32 %v6490, %v6489
  %v6492 = vmul.f32 0.5, %v6491
  %v6493 = vsub.f32 1.5, %v6492
  %v6494 = vmul.f32 %v6489, %v6493
  %vm6495 = vweird.f32 %v6458
  %vm6496 = vweird.f32 %v6489
  %vm6497 = vmor %vm6495, %vm6496
  %v6498 = vsel %vm6497, %v6489, %v6494
  %v6499 = vmul.f32 %v6431, %v6468
  %v6500 = vmul.f32 %v6432, %v6478
  %v6501 = vmul.f32 %v6433, %v6488
  %v6502 = vmul.f32 %v6434, %v6498
  %v6503 = vperm.slane %v3334, 5
  %v6504 = vmul.f32 %v6499, %v6503
  %v6505 = vmul.f32 %v6500, %v6503
  %v6506 = vmul.f32 %v6501, %v6503
  %v6507 = vmul.f32 %v6502, %v6503
  %v6508 = vperm.slane %v3334, 6
  %v6509 = vadd.f32 %v6504, %v6508
  %v6510 = vadd.f32 %v6505, %v6508
  %v6511 = vadd.f32 %v6506, %v6508
  %v6512 = vadd.f32 %v6507, %v6508
  %v6513 = vpack.c.bf16 %v6510, %v6509
  %v6514 = vpack.c.bf16 %v6512, %v6511
  %v6515 = vld [vmem:[%s7] sm:$0xf]
  %v6516 = vld [vmem:[%s7 + $0x4] sm:$0xf]
  %v6517 = vld [vmem:[%s7 + $0x8] sm:$0xf]
  %v6518 = vld [vmem:[%s7 + $0xc] sm:$0xf]
  %v6519 = vld [vmem:[%s8] sm:$0x1]
  %v6521 = vperm.slane %v6519, 0
  %v6527 = vunpack.c.l.b16 %v6515
  %v6528 = vunpack.c.l.b16 %v6516
  %v6529 = vunpack.c.l.b16 %v6517
  %v6530 = vunpack.c.l.b16 %v6518
  %v6531 = vpack.c.b16 %v6528, %v6527
  %v6532 = vpack.c.b16 %v6530, %v6529
  %v6536 = vsel %vm157, %v6513, 0
  %v6539 = vsel %vm157, %v6514, 0
  %6541 = vmatpush.bf16.msra.mxu0 0
  %6542 = vmatpush.bf16.msra.mxu0 0
  %6543 = vmatpush.bf16.msra.mxu0 0
  %6544 = vmatpush.bf16.msra.mxu0 0
  %6545 = vmatpush.bf16.msra.mxu0 0
  %6546 = vmatpush.bf16.msra.mxu0 0
  %6547 = vmatpush.bf16.msra.mxu0 %v6532
  %6548 = vmatpush.bf16.msra.mxu0 %v6531
  %6549 = vmatmul.bf16.gmra.mxu0 %v6536
  %v6550 = vpop.f32.mrf.mxu0
  %v6551 = vadd.f32 %v6521, %v6550
  %v6552 = vpop.f32.mrf.mxu0
  %v6553 = vadd.f32 %v6521, %v6552
  %6554 = vmatmul.bf16.gmra.mxu0 %v6539
  %v6555 = vpop.f32.mrf.mxu0
  %v6556 = vadd.f32 %v6521, %v6555
  %v6557 = vpop.f32.mrf.mxu0
  %v6558 = vadd.f32 %v6521, %v6557
  %6559 = vdwg.mxu0
  %6560 = vst [vmem:[%s9] sm:$0xff] %v6551
  %6561 = vst [vmem:[%s9 + $0x8] sm:$0xff] %v6553
  %6562 = vst [vmem:[%s9 + $0x10] sm:$0xff] %v6556
  %6563 = vst [vmem:[%s9 + $0x18] sm:$0xff] %v6558
  // Predicated region
  $region38: #{gpt_forward.1} parent=0 // pred_check
    _
  $region39: #{gpt_forward.1} parent=0 // pred_check_branch
    %6565 = sbr.rel (0) target = $region41
  $region40: #{gpt_forward.1} parent=0 // pred_region
    _
  $region41: #{gpt_forward.1} parent=0 // pred_fallthru
    _
  // Predicated region
  $region42: #{gpt_forward.1} parent=0 // pred_check
    _
  $region43: #{gpt_forward.1} parent=0 // pred_check_branch
    %6567 = sbr.rel (0) target = $region45
  $region44: #{gpt_forward.1} parent=0 // pred_region
    _
  $region45: #{gpt_forward.1} parent=0 // pred_fallthru
    _

</llo_original>
